<compile_context>
chip_gen: v5e
topology: v5e:2x2
jax: 0.10.0
libtpu: 0.0.40
codegen_flags: <defaults>
</compile_context>

<pallas_src>
import functools

import jax
import jax.numpy as jnp
from jax.experimental import pallas as pl
from jax.experimental.pallas import tpu as pltpu


def _round_up(x, m):
    return ((x + m - 1) // m) * m


def _shift_flat(x, off):
    """shifted[:, p] = x[:, p + off] with zero fill at the boundary.

    `off` is a static Python int, so this lowers to two static lane-axis
    slices + one concatenate (exactly the zero-padding semantics of the
    conv).  (pltpu.roll would also work; zero fill keeps the boundary exact.)
    """
    if off == 0:
        return x
    cin, lp = x.shape
    z = jnp.zeros((cin, abs(off)), x.dtype)
    if off > 0:
        return jnp.concatenate([x[:, off:], z], axis=1)
    return jnp.concatenate([z, x[:, :lp + off]], axis=1)


def _conv_in_prelu(x, w_ref, prm_ref, msk, offsets, inv_count):
    """Dilated (2,3) conv as ONE stacked-K MXU matmul, then masked
    InstanceNorm + affine + PReLU on the flat padded slab.

    x: (Cin, Lp) bf16, w_ref: (Cout, 6*Cin) bf16, prm_ref: (Cout, 3) f32
    [gamma, beta, prelu_alpha], msk: (1, Lp) f32 (1.0 on valid positions).
    Returns (Cout, Lp) f32; padded positions contain (finite) garbage that the
    caller masks / ignores.
    """
    # stack the 6 shifted taps along K -> one matmul (f32 accumulation).
    xs = jnp.concatenate([_shift_flat(x, off) for off in offsets], axis=0)
    acc = jnp.dot(w_ref[...], xs, preferred_element_type=jnp.float32)
    # NOTE: the conv bias is omitted -- it cancels exactly under InstanceNorm.

    g = prm_ref[:, 0:1]
    bt = prm_ref[:, 1:2]
    al = prm_ref[:, 2:3]

    am = acc * msk                                        # masked values
    mean = jnp.sum(am, axis=1, keepdims=True) * inv_count
    var = jnp.maximum(
        jnp.sum(am * am, axis=1, keepdims=True) * inv_count - mean * mean, 0.0)
    a = g * jax.lax.rsqrt(var + 1e-5)                     # fold IN + affine
    b = bt - mean * a
    y = acc * a + b
    return jnp.where(y >= 0.0, y, al * y)                 # PReLU


# ---------------------------------------------------------------------------
# fused dilated-dense layer: conv + InstanceNorm + PReLU, writing its output
# into its channel segment of the shared padded activation buffer (aliased).
# ---------------------------------------------------------------------------
def _dense_layer_kernel(buf_ref, w_ref, prm_ref, msk_ref, o_ref, *,
                        offsets, inv_count):
    x = buf_ref[0]                                        # (Cin, Lp) bf16
    m = msk_ref[...]                                      # (1, Lp) f32
    y = _conv_in_prelu(x, w_ref, prm_ref, m, offsets, inv_count)
    # keep the shared-layout invariant: padded positions must stay zero.
    o_ref[0] = (y * m).astype(o_ref.dtype)


# ---------------------------------------------------------------------------
# last dense layer fused with the mask head:
#   conv + IN + PReLU  ->  IN + PReLU + 1x1 conv + LearnableSigmoid2d
# (the last layer's activation never leaves VMEM).
# ---------------------------------------------------------------------------
def _final_layer_kernel(buf_ref, w_ref, prm_ref, hprm_ref, sl_ref, msk_ref,
                        o_ref, *, offsets, inv_count, lbeta):
    x = buf_ref[0]                                        # (Ctot, Lp) bf16
    m = msk_ref[...]
    u = _conv_in_prelu(x, w_ref, prm_ref, m, offsets, inv_count)   # (C, Lp) f32

    hg = hprm_ref[:, 0:1]
    hb = hprm_ref[:, 1:2]
    ha = hprm_ref[:, 2:3]
    wc = hprm_ref[:, 3:4]

    um = u * m
    mean = jnp.sum(um, axis=1, keepdims=True) * inv_count
    var = jnp.maximum(
        jnp.sum(um * um, axis=1, keepdims=True) * inv_count - mean * mean, 0.0)
    a = hg * jax.lax.rsqrt(var + 1e-5)
    b = hb - mean * a
    v = u * a + b
    v = jnp.where(v >= 0.0, v, ha * v)                    # PReLU
    z = jnp.sum(v * wc, axis=0, keepdims=True)            # 1x1 conv -> (1, Lp)
    # beta * sigmoid(slope * (z + conv_bias)); slope*bias prefolded in sl[1].
    o_ref[0] = lbeta * jax.nn.sigmoid(sl_ref[0:1, :] * z + sl_ref[1:2, :])


# ------------------------------ wrappers ------------------------------------
def _layer_weight_matrix(w, C):
    """Reorder conv weight (Cout, Cin, 2, 3) from the layer's channel order
    [out_i, out_{i-1}, ..., out_1, x] to the shared-buffer order
    [x, out_1, ..., out_i] and flatten the 6 taps into K (tap-major)."""
    Cout, Cin = w.shape[0], w.shape[1]
    nseg = Cin // C
    perm = jnp.concatenate(
        [jnp.arange(C) + (nseg - 1 - j) * C for j in range(nseg)])
    wb = w[:, perm, :, :]                                 # buffer channel order
    return wb.transpose(0, 2, 3, 1).reshape(Cout, 6 * Cin).astype(jnp.bfloat16)


def _seg_out_map(seg):
    def index_map(b):
        return (b, seg, 0)
    return index_map


def mask_decoder_forward(params, x, *, lsig_beta=2.0):
    B, C, H, W = x.shape
    depth = len(params['dense'])
    dmax = 2 ** (depth - 1)                               # max dilation (top pad)
    Hp, Wp = H + dmax, W + 2
    L = Hp * Wp
    Lp = _round_up(L, 128)                                # lane-dense flat axis
    Ctot = depth * C                                      # x + out_1..out_{depth-1}
    inv_count = 1.0 / float(H * W)

    # ---- shared padded flat activation buffer (built ONCE), bf16 in HBM ----
    xpad = jnp.pad(x, ((0, 0), (0, 0), (dmax, 0), (1, 1)))
    xflat = jnp.pad(xpad.reshape(B, C, L), ((0, 0), (0, 0), (0, Lp - L)))
    buf = jnp.concatenate(
        [xflat, jnp.zeros((B, Ctot - C, Lp), xflat.dtype)],
        axis=1).astype(jnp.bfloat16)

    mask2d = jnp.zeros((Hp, Wp), jnp.float32).at[dmax:, 1:W + 1].set(1.0)
    msk = jnp.pad(mask2d.reshape(1, L), ((0, 0), (0, Lp - L)))

    cparams = pltpu.CompilerParams(
        dimension_semantics=("parallel",),
        vmem_limit_bytes=32 * 1024 * 1024)

    # ---- dense layers 0..depth-2: write their segment into the buffer -----
    for i in range(depth - 1):
        lp_ = params['dense'][i]
        dil = 2 ** i
        Cin = C * (i + 1)
        offsets = tuple(-(1 - kh) * dil * Wp + (kw - 1)
                        for kh in range(2) for kw in range(3))
        wt = _layer_weight_matrix(lp_['w'], C)
        prm = jnp.stack([lp_['g'], lp_['bt'], lp_['a']],
                        axis=1).astype(jnp.float32)
        buf = pl.pallas_call(
            functools.partial(_dense_layer_kernel, offsets=offsets,
                              inv_count=inv_count),
            out_shape=jax.ShapeDtypeStruct((B, Ctot, Lp), jnp.bfloat16),
            grid=(B,),
            in_specs=[pl.BlockSpec((1, Cin, Lp), lambda b: (b, 0, 0)),
                      pl.BlockSpec((C, 6 * Cin), lambda b: (0, 0)),
                      pl.BlockSpec((C, 3), lambda b: (0, 0)),
                      pl.BlockSpec((1, Lp), lambda b: (0, 0))],
            out_specs=pl.BlockSpec((1, C, Lp), _seg_out_map(i + 1)),
            input_output_aliases={0: 0},                  # in-place segment write
            compiler_params=cparams,
        )(buf, wt, prm, msk)

    # ---- last dense layer fused with the mask head -------------------------
    i = depth - 1
    lp_ = params['dense'][i]
    dil = 2 ** i
    Cin = C * (i + 1)                                     # == Ctot
    offsets = tuple(-(1 - kh) * dil * Wp + (kw - 1)
                    for kh in range(2) for kw in range(3))
    wt = _layer_weight_matrix(lp_['w'], C)
    prm = jnp.stack([lp_['g'], lp_['bt'], lp_['a']], axis=1).astype(jnp.float32)

    hp = params['head']
    hprm = jnp.stack([hp['g'], hp['bt'], hp['a'], hp['wc'].reshape(-1)],
                     axis=1).astype(jnp.float32)
    # per-flat-position sigmoid slope (per frequency row); fold slope*bias too.
    srow = jnp.zeros((Hp,), jnp.float32).at[dmax:].set(
        params['slope'].reshape(H))
    sflat = jnp.pad(jnp.broadcast_to(srow[:, None], (Hp, Wp)).reshape(1, L),
                    ((0, 0), (0, Lp - L)))
    sl = jnp.concatenate([sflat, sflat * hp['bc'][0]], axis=0)      # (2, Lp)

    out = pl.pallas_call(
        functools.partial(_final_layer_kernel, offsets=offsets,
                          inv_count=inv_count, lbeta=float(lsig_beta)),
        out_shape=jax.ShapeDtypeStruct((B, 1, Lp), jnp.float32),
        grid=(B,),
        in_specs=[pl.BlockSpec((1, Cin, Lp), lambda b: (b, 0, 0)),
                  pl.BlockSpec((C, 6 * Cin), lambda b: (0, 0)),
                  pl.BlockSpec((C, 3), lambda b: (0, 0)),
                  pl.BlockSpec((C, 4), lambda b: (0, 0)),
                  pl.BlockSpec((2, Lp), lambda b: (0, 0)),
                  pl.BlockSpec((1, Lp), lambda b: (0, 0))],
        out_specs=pl.BlockSpec((1, 1, Lp), lambda b: (b, 0, 0)),
        compiler_params=cparams,
    )(buf, wt, prm, hprm, sl, msk)

    # un-pad the tiny head output: (B,1,Lp) -> (B,H,W)
    return out[:, 0, :L].reshape(B, Hp, Wp)[:, dmax:, 1:W + 1]


# ------------------------------ parameters ----------------------------------
def init_mask_decoder(key, num_features, dense_channels, out_channels=1,
                      dense_depth=4):
    C = dense_channels
    params = {'dense': []}
    for i in range(dense_depth):
        cin = C * (i + 1)
        key, kw, kb, kg, kbt = jax.random.split(key, 5)
        fan_in = cin * 2 * 3
        params['dense'].append({
            'w': jax.random.normal(kw, (C, cin, 2, 3), jnp.float32) / jnp.sqrt(fan_in),
            'b': 0.02 * jax.random.normal(kb, (C,), jnp.float32),
            'g': 1.0 + 0.05 * jax.random.normal(kg, (C,), jnp.float32),
            'bt': 0.05 * jax.random.normal(kbt, (C,), jnp.float32),
            'a': jnp.full((C,), 0.25, jnp.float32),
        })
    key, kw, kb, kg, kbt, ks = jax.random.split(key, 6)
    params['head'] = {
        'g': 1.0 + 0.05 * jax.random.normal(kg, (C,), jnp.float32),
        'bt': 0.05 * jax.random.normal(kbt, (C,), jnp.float32),
        'a': jnp.full((C,), 0.25, jnp.float32),
        'wc': jax.random.normal(kw, (out_channels, C, 1, 1), jnp.float32) / jnp.sqrt(C),
        'bc': 0.02 * jax.random.normal(kb, (out_channels,), jnp.float32),
    }
    params['slope'] = 1.0 + 0.05 * jax.random.normal(
        ks, (num_features, 1), jnp.float32)
    return params


# ------------------------- pure-JAX f32 reference ---------------------------
def _ref_in_prelu(x, gamma, beta, alpha):
    mean = jnp.mean(x, axis=(2, 3), keepdims=True)
    var = jnp.mean(jnp.square(x - mean), axis=(2, 3), keepdims=True)
    y = (x - mean) * jax.lax.rsqrt(var + 1e-5)
    y = y * gamma[None, :, None, None] + beta[None, :, None, None]
    return jnp.where(y >= 0.0, y, alpha[None, :, None, None] * y)


def ref_mask_decoder(params, x, lsig_beta=2.0):
    skip = x
    out = x
    for i, lp_ in enumerate(params['dense']):
        dil = 2 ** i
        xp = jnp.pad(skip, ((0, 0), (0, 0), (dil, 0), (1, 1)))
        B, _, Hp, Wp = xp.shape
        H, W = Hp - dil, Wp - 2
        Cout = lp_['w'].shape[0]
        conv = jnp.zeros((B, Cout, H, W), jnp.float32)
        for kh in range(2):
            for kw in range(3):
                sl = xp[:, :, kh * dil:kh * dil + H, kw:kw + W]
                conv = conv + jnp.einsum('bchw,oc->bohw', sl, lp_['w'][:, :, kh, kw])
        conv = conv + lp_['b'][None, :, None, None]
        out = _ref_in_prelu(conv, lp_['g'], lp_['bt'], lp_['a'])
        skip = jnp.concatenate([out, skip], axis=1)
    hp = params['head']
    y = _ref_in_prelu(out, hp['g'], hp['bt'], hp['a'])
    z = jnp.einsum('bchw,c->bhw', y, hp['wc'].reshape(-1)) + hp['bc'][0]
    return lsig_beta * jax.nn.sigmoid(params['slope'][None, :, :] * z)


# --------------------------------- main --------------------------------------
if __name__ == "__main__":
    key = jax.random.PRNGKey(0)
    kp, kx = jax.random.split(key)

    B, C, NF, T = 2, 16, 16, 16         # batch, dense_channels, num_features, frames
    DEPTH = 4                           # DilatedDenseNet depth (dilations 1,2,4,8)
    params = init_mask_decoder(kp, num_features=NF, dense_channels=C,
                               dense_depth=DEPTH)
    x = jax.random.normal(kx, (B, C, NF, T), jnp.float32)

    fwd = jax.jit(functools.partial(mask_decoder_forward, lsig_beta=2.0))
    out = jax.block_until_ready(fwd(params, x))

    assert out.shape == (B, NF, T), out.shape
    assert bool(jnp.all(jnp.isfinite(out)))

    ref = jax.jit(functools.partial(ref_mask_decoder, lsig_beta=2.0))(params, x)
    err = float(jnp.max(jnp.abs(out - ref)))
    assert err < 1e-1, f"max abs err vs f32 reference: {err}"
    print("KERNEL_OK")
</pallas_src>

<mosaic_0001>
module attributes {stable_mosaic.version = 11 : i64} {
  func.func @_dense_layer_kernel(%arg0: i32, %arg1: memref<1x16x512xbf16, #tpu.memory_space<vmem>>, %arg2: memref<16x96xbf16, #tpu.memory_space<vmem>>, %arg3: memref<16x3xf32, #tpu.memory_space<vmem>>, %arg4: memref<1x512xf32, #tpu.memory_space<vmem>>, %arg5: memref<1x16x512xbf16, #tpu.memory_space<vmem>>) attributes {dimension_semantics = [#tpu.dimension_semantics<parallel>], iteration_bounds = array<i64: 2>, scalar_prefetch = 0 : i64, scratch_operands = 0 : i64, tpu.core_type = #tpu.core_type<tc>, window_params = [{transform_indices = @transform_0, window_bounds = array<i64: 1, 16, 512>}, {pipeline_mode = #tpu.pipeline_mode<synchronous>, transform_indices = @transform_1, window_bounds = array<i64: 16, 96>}, {pipeline_mode = #tpu.pipeline_mode<synchronous>, transform_indices = @transform_2, window_bounds = array<i64: 16, 3>}, {pipeline_mode = #tpu.pipeline_mode<synchronous>, transform_indices = @transform_3, window_bounds = array<i64: 1, 512>}, {transform_indices = @transform_4, window_bounds = array<i64: 1, 16, 512>}]} {
    %c0 = arith.constant 0 : index
    %c0_0 = arith.constant 0 : index
    %c0_1 = arith.constant 0 : index
    %0 = vector.load %arg1[%c0, %c0_0, %c0_1] : memref<1x16x512xbf16, #tpu.memory_space<vmem>>, vector<1x16x512xbf16>
    %1 = vector.shape_cast %0 : vector<1x16x512xbf16> to vector<16x512xbf16>
    %c0_2 = arith.constant 0 : index
    %c0_3 = arith.constant 0 : index
    %2 = vector.load %arg4[%c0_2, %c0_3] : memref<1x512xf32, #tpu.memory_space<vmem>>, vector<1x512xf32>
    %cst = arith.constant 0.000000e+00 : bf16
    %3 = vector.broadcast %cst : bf16 to vector<16x19xbf16>
    %4 = vector.extract_strided_slice %1 {offsets = [0, 0], sizes = [16, 493], strides = [1, 1]} : vector<16x512xbf16> to vector<16x493xbf16>
    %5 = tpu.concatenate %3, %4 in 1 : vector<16x19xbf16>, vector<16x493xbf16> -> vector<16x512xbf16>
    %cst_4 = arith.constant 0.000000e+00 : bf16
    %6 = vector.broadcast %cst_4 : bf16 to vector<16x18xbf16>
    %7 = vector.extract_strided_slice %1 {offsets = [0, 0], sizes = [16, 494], strides = [1, 1]} : vector<16x512xbf16> to vector<16x494xbf16>
    %8 = tpu.concatenate %6, %7 in 1 : vector<16x18xbf16>, vector<16x494xbf16> -> vector<16x512xbf16>
    %cst_5 = arith.constant 0.000000e+00 : bf16
    %9 = vector.broadcast %cst_5 : bf16 to vector<16x17xbf16>
    %10 = vector.extract_strided_slice %1 {offsets = [0, 0], sizes = [16, 495], strides = [1, 1]} : vector<16x512xbf16> to vector<16x495xbf16>
    %11 = tpu.concatenate %9, %10 in 1 : vector<16x17xbf16>, vector<16x495xbf16> -> vector<16x512xbf16>
    %cst_6 = arith.constant 0.000000e+00 : bf16
    %12 = vector.broadcast %cst_6 : bf16 to vector<16x1xbf16>
    %13 = vector.extract_strided_slice %1 {offsets = [0, 0], sizes = [16, 511], strides = [1, 1]} : vector<16x512xbf16> to vector<16x511xbf16>
    %14 = tpu.concatenate %12, %13 in 1 : vector<16x1xbf16>, vector<16x511xbf16> -> vector<16x512xbf16>
    %cst_7 = arith.constant 0.000000e+00 : bf16
    %15 = vector.broadcast %cst_7 : bf16 to vector<16x1xbf16>
    %16 = vector.extract_strided_slice %1 {offsets = [0, 1], sizes = [16, 511], strides = [1, 1]} : vector<16x512xbf16> to vector<16x511xbf16>
    %17 = tpu.concatenate %16, %15 in 1 : vector<16x511xbf16>, vector<16x1xbf16> -> vector<16x512xbf16>
    %18 = tpu.concatenate %5, %8, %11, %14, %1, %17 in 0 : vector<16x512xbf16>, vector<16x512xbf16>, vector<16x512xbf16>, vector<16x512xbf16>, vector<16x512xbf16>, vector<16x512xbf16> -> vector<96x512xbf16>
    %c0_8 = arith.constant 0 : index
    %c0_9 = arith.constant 0 : index
    %19 = vector.load %arg2[%c0_8, %c0_9] : memref<16x96xbf16, #tpu.memory_space<vmem>>, vector<16x96xbf16>
    %cst_10 = arith.constant dense<0.000000e+00> : vector<16x512xf32>
    %20 = tpu.matmul %19, %18, %cst_10 {dimension_numbers = #tpu.dot_dimension_numbers<[1], [0], [0], [1], [0, 0, 1, 1], [], []>} : vector<16x96xbf16>, vector<96x512xbf16>, vector<16x512xf32> -> vector<16x512xf32>
    %c0_11 = arith.constant 0 : index
    %c0_12 = arith.constant 0 : index
    %21 = vector.load %arg3[%c0_11, %c0_12] : memref<16x3xf32, #tpu.memory_space<vmem>>, vector<16x1xf32>
    %c0_13 = arith.constant 0 : index
    %c1 = arith.constant 1 : index
    %22 = vector.load %arg3[%c0_13, %c1] : memref<16x3xf32, #tpu.memory_space<vmem>>, vector<16x1xf32>
    %c0_14 = arith.constant 0 : index
    %c2 = arith.constant 2 : index
    %23 = vector.load %arg3[%c0_14, %c2] : memref<16x3xf32, #tpu.memory_space<vmem>>, vector<16x1xf32>
    %24 = vector.broadcast %2 : vector<1x512xf32> to vector<16x512xf32>
    %25 = arith.mulf %20, %24 : vector<16x512xf32>
    %cst_15 = arith.constant dense<0.000000e+00> : vector<16xf32>
    %26 = vector.multi_reduction <add>, %25, %cst_15 [1] : vector<16x512xf32> to vector<16xf32>
    %27 = vector.shape_cast %26 : vector<16xf32> to vector<16x1xf32>
    %cst_16 = arith.constant 3.906250e-03 : f32
    %28 = vector.broadcast %cst_16 : f32 to vector<16x1xf32>
    %29 = arith.mulf %27, %28 : vector<16x1xf32>
    %30 = arith.mulf %25, %25 : vector<16x512xf32>
    %cst_17 = arith.constant dense<0.000000e+00> : vector<16xf32>
    %31 = vector.multi_reduction <add>, %30, %cst_17 [1] : vector<16x512xf32> to vector<16xf32>
    %32 = vector.shape_cast %31 : vector<16xf32> to vector<16x1xf32>
    %cst_18 = arith.constant 3.906250e-03 : f32
    %33 = vector.broadcast %cst_18 : f32 to vector<16x1xf32>
    %34 = arith.mulf %32, %33 : vector<16x1xf32>
    %35 = arith.mulf %29, %29 : vector<16x1xf32>
    %36 = arith.subf %34, %35 : vector<16x1xf32>
    %cst_19 = arith.constant 0.000000e+00 : f32
    %37 = vector.broadcast %cst_19 : f32 to vector<16x1xf32>
    %38 = arith.maximumf %36, %37 : vector<16x1xf32>
    %cst_20 = arith.constant 9.99999974E-6 : f32
    %39 = vector.broadcast %cst_20 : f32 to vector<16x1xf32>
    %40 = arith.addf %38, %39 : vector<16x1xf32>
    %41 = math.rsqrt %40 : vector<16x1xf32>
    %42 = arith.mulf %21, %41 : vector<16x1xf32>
    %43 = arith.mulf %29, %42 : vector<16x1xf32>
    %44 = arith.subf %22, %43 : vector<16x1xf32>
    %45 = vector.broadcast %42 : vector<16x1xf32> to vector<16x512xf32>
    %46 = arith.mulf %20, %45 : vector<16x512xf32>
    %47 = vector.broadcast %44 : vector<16x1xf32> to vector<16x512xf32>
    %48 = arith.addf %46, %47 : vector<16x512xf32>
    %cst_21 = arith.constant 0.000000e+00 : f32
    %49 = vector.broadcast %cst_21 : f32 to vector<16x512xf32>
    %50 = arith.cmpf oge, %48, %49 : vector<16x512xf32>
    %51 = vector.broadcast %23 : vector<16x1xf32> to vector<16x512xf32>
    %52 = arith.mulf %51, %48 : vector<16x512xf32>
    %53 = arith.select %50, %48, %52 : vector<16x512xi1>, vector<16x512xf32>
    %54 = vector.broadcast %2 : vector<1x512xf32> to vector<16x512xf32>
    %55 = arith.mulf %53, %54 : vector<16x512xf32>
    %56 = arith.truncf %55 : vector<16x512xf32> to vector<16x512xbf16>
    %c0_22 = arith.constant 0 : index
    %c0_23 = arith.constant 0 : index
    %c0_24 = arith.constant 0 : index
    %57 = vector.load %arg5[%c0_22, %c0_23, %c0_24] : memref<1x16x512xbf16, #tpu.memory_space<vmem>>, vector<1x16x512xbf16>
    %58 = vector.shape_cast %57 : vector<1x16x512xbf16> to vector<16x512xbf16>
    %59 = vector.shape_cast %56 : vector<16x512xbf16> to vector<1x16x512xbf16>
    tpu.vector_store %arg5[%c0_22, %c0_23, %c0_24], %59 {strides = array<i32>} : memref<1x16x512xbf16, #tpu.memory_space<vmem>>, vector<1x16x512xbf16>,
    return
  }
  func.func @transform_0(%arg0: i32) -> (i32, i32, i32) {
    %c0_i32 = arith.constant 0 : i32
    %c0_i32_0 = arith.constant 0 : i32
    %c0_i32_1 = arith.constant 0 : i32
    return %arg0, %c0_i32, %c0_i32_0 : i32, i32, i32
  }
  func.func @transform_1(%arg0: i32) -> (i32, i32) {
    %c0_i32 = arith.constant 0 : i32
    %c0_i32_0 = arith.constant 0 : i32
    %c0_i32_1 = arith.constant 0 : i32
    return %c0_i32, %c0_i32_0 : i32, i32
  }
  func.func @transform_2(%arg0: i32) -> (i32, i32) {
    %c0_i32 = arith.constant 0 : i32
    %c0_i32_0 = arith.constant 0 : i32
    %c0_i32_1 = arith.constant 0 : i32
    return %c0_i32, %c0_i32_0 : i32, i32
  }
  func.func @transform_3(%arg0: i32) -> (i32, i32) {
    %c0_i32 = arith.constant 0 : i32
    %c0_i32_0 = arith.constant 0 : i32
    %c0_i32_1 = arith.constant 0 : i32
    return %c0_i32, %c0_i32_0 : i32, i32
  }
  func.func @transform_4(%arg0: i32) -> (i32, i32, i32) {
    %c1_i32 = arith.constant 1 : i32
    %c0_i32 = arith.constant 0 : i32
    %c0_i32_0 = arith.constant 0 : i32
    return %arg0, %c1_i32, %c0_i32 : i32, i32, i32
  }
}

module attributes {stable_mosaic.version = 11 : i64} {
  func.func @_dense_layer_kernel(%arg0: i32, %arg1: memref<1x32x512xbf16, #tpu.memory_space<vmem>>, %arg2: memref<16x192xbf16, #tpu.memory_space<vmem>>, %arg3: memref<16x3xf32, #tpu.memory_space<vmem>>, %arg4: memref<1x512xf32, #tpu.memory_space<vmem>>, %arg5: memref<1x16x512xbf16, #tpu.memory_space<vmem>>) attributes {dimension_semantics = [#tpu.dimension_semantics<parallel>], iteration_bounds = array<i64: 2>, scalar_prefetch = 0 : i64, scratch_operands = 0 : i64, tpu.core_type = #tpu.core_type<tc>, window_params = [{transform_indices = @transform_0, window_bounds = array<i64: 1, 32, 512>}, {pipeline_mode = #tpu.pipeline_mode<synchronous>, transform_indices = @transform_1, window_bounds = array<i64: 16, 192>}, {pipeline_mode = #tpu.pipeline_mode<synchronous>, transform_indices = @transform_2, window_bounds = array<i64: 16, 3>}, {pipeline_mode = #tpu.pipeline_mode<synchronous>, transform_indices = @transform_3, window_bounds = array<i64: 1, 512>}, {transform_indices = @transform_4, window_bounds = array<i64: 1, 16, 512>}]} {
    %c0 = arith.constant 0 : index
    %c0_0 = arith.constant 0 : index
    %c0_1 = arith.constant 0 : index
    %0 = vector.load %arg1[%c0, %c0_0, %c0_1] : memref<1x32x512xbf16, #tpu.memory_space<vmem>>, vector<1x32x512xbf16>
    %1 = vector.shape_cast %0 : vector<1x32x512xbf16> to vector<32x512xbf16>
    %c0_2 = arith.constant 0 : index
    %c0_3 = arith.constant 0 : index
    %2 = vector.load %arg4[%c0_2, %c0_3] : memref<1x512xf32, #tpu.memory_space<vmem>>, vector<1x512xf32>
    %cst = arith.constant 0.000000e+00 : bf16
    %3 = vector.broadcast %cst : bf16 to vector<32x37xbf16>
    %4 = vector.extract_strided_slice %1 {offsets = [0, 0], sizes = [32, 475], strides = [1, 1]} : vector<32x512xbf16> to vector<32x475xbf16>
    %5 = tpu.concatenate %3, %4 in 1 : vector<32x37xbf16>, vector<32x475xbf16> -> vector<32x512xbf16>
    %cst_4 = arith.constant 0.000000e+00 : bf16
    %6 = vector.broadcast %cst_4 : bf16 to vector<32x36xbf16>
    %7 = vector.extract_strided_slice %1 {offsets = [0, 0], sizes = [32, 476], strides = [1, 1]} : vector<32x512xbf16> to vector<32x476xbf16>
    %8 = tpu.concatenate %6, %7 in 1 : vector<32x36xbf16>, vector<32x476xbf16> -> vector<32x512xbf16>
    %cst_5 = arith.constant 0.000000e+00 : bf16
    %9 = vector.broadcast %cst_5 : bf16 to vector<32x35xbf16>
    %10 = vector.extract_strided_slice %1 {offsets = [0, 0], sizes = [32, 477], strides = [1, 1]} : vector<32x512xbf16> to vector<32x477xbf16>
    %11 = tpu.concatenate %9, %10 in 1 : vector<32x35xbf16>, vector<32x477xbf16> -> vector<32x512xbf16>
    %cst_6 = arith.constant 0.000000e+00 : bf16
    %12 = vector.broadcast %cst_6 : bf16 to vector<32x1xbf16>
    %13 = vector.extract_strided_slice %1 {offsets = [0, 0], sizes = [32, 511], strides = [1, 1]} : vector<32x512xbf16> to vector<32x511xbf16>
    %14 = tpu.concatenate %12, %13 in 1 : vector<32x1xbf16>, vector<32x511xbf16> -> vector<32x512xbf16>
    %cst_7 = arith.constant 0.000000e+00 : bf16
    %15 = vector.broadcast %cst_7 : bf16 to vector<32x1xbf16>
    %16 = vector.extract_strided_slice %1 {offsets = [0, 1], sizes = [32, 511], strides = [1, 1]} : vector<32x512xbf16> to vector<32x511xbf16>
    %17 = tpu.concatenate %16, %15 in 1 : vector<32x511xbf16>, vector<32x1xbf16> -> vector<32x512xbf16>
    %18 = tpu.concatenate %5, %8, %11, %14, %1, %17 in 0 : vector<32x512xbf16>, vector<32x512xbf16>, vector<32x512xbf16>, vector<32x512xbf16>, vector<32x512xbf16>, vector<32x512xbf16> -> vector<192x512xbf16>
    %c0_8 = arith.constant 0 : index
    %c0_9 = arith.constant 0 : index
    %19 = vector.load %arg2[%c0_8, %c0_9] : memref<16x192xbf16, #tpu.memory_space<vmem>>, vector<16x192xbf16>
    %cst_10 = arith.constant dense<0.000000e+00> : vector<16x512xf32>
    %20 = tpu.matmul %19, %18, %cst_10 {dimension_numbers = #tpu.dot_dimension_numbers<[1], [0], [0], [1], [0, 0, 1, 1], [], []>} : vector<16x192xbf16>, vector<192x512xbf16>, vector<16x512xf32> -> vector<16x512xf32>
    %c0_11 = arith.constant 0 : index
    %c0_12 = arith.constant 0 : index
    %21 = vector.load %arg3[%c0_11, %c0_12] : memref<16x3xf32, #tpu.memory_space<vmem>>, vector<16x1xf32>
    %c0_13 = arith.constant 0 : index
    %c1 = arith.constant 1 : index
    %22 = vector.load %arg3[%c0_13, %c1] : memref<16x3xf32, #tpu.memory_space<vmem>>, vector<16x1xf32>
    %c0_14 = arith.constant 0 : index
    %c2 = arith.constant 2 : index
    %23 = vector.load %arg3[%c0_14, %c2] : memref<16x3xf32, #tpu.memory_space<vmem>>, vector<16x1xf32>
    %24 = vector.broadcast %2 : vector<1x512xf32> to vector<16x512xf32>
    %25 = arith.mulf %20, %24 : vector<16x512xf32>
    %cst_15 = arith.constant dense<0.000000e+00> : vector<16xf32>
    %26 = vector.multi_reduction <add>, %25, %cst_15 [1] : vector<16x512xf32> to vector<16xf32>
    %27 = vector.shape_cast %26 : vector<16xf32> to vector<16x1xf32>
    %cst_16 = arith.constant 3.906250e-03 : f32
    %28 = vector.broadcast %cst_16 : f32 to vector<16x1xf32>
    %29 = arith.mulf %27, %28 : vector<16x1xf32>
    %30 = arith.mulf %25, %25 : vector<16x512xf32>
    %cst_17 = arith.constant dense<0.000000e+00> : vector<16xf32>
    %31 = vector.multi_reduction <add>, %30, %cst_17 [1] : vector<16x512xf32> to vector<16xf32>
    %32 = vector.shape_cast %31 : vector<16xf32> to vector<16x1xf32>
    %cst_18 = arith.constant 3.906250e-03 : f32
    %33 = vector.broadcast %cst_18 : f32 to vector<16x1xf32>
    %34 = arith.mulf %32, %33 : vector<16x1xf32>
    %35 = arith.mulf %29, %29 : vector<16x1xf32>
    %36 = arith.subf %34, %35 : vector<16x1xf32>
    %cst_19 = arith.constant 0.000000e+00 : f32
    %37 = vector.broadcast %cst_19 : f32 to vector<16x1xf32>
    %38 = arith.maximumf %36, %37 : vector<16x1xf32>
    %cst_20 = arith.constant 9.99999974E-6 : f32
    %39 = vector.broadcast %cst_20 : f32 to vector<16x1xf32>
    %40 = arith.addf %38, %39 : vector<16x1xf32>
    %41 = math.rsqrt %40 : vector<16x1xf32>
    %42 = arith.mulf %21, %41 : vector<16x1xf32>
    %43 = arith.mulf %29, %42 : vector<16x1xf32>
    %44 = arith.subf %22, %43 : vector<16x1xf32>
    %45 = vector.broadcast %42 : vector<16x1xf32> to vector<16x512xf32>
    %46 = arith.mulf %20, %45 : vector<16x512xf32>
    %47 = vector.broadcast %44 : vector<16x1xf32> to vector<16x512xf32>
    %48 = arith.addf %46, %47 : vector<16x512xf32>
    %cst_21 = arith.constant 0.000000e+00 : f32
    %49 = vector.broadcast %cst_21 : f32 to vector<16x512xf32>
    %50 = arith.cmpf oge, %48, %49 : vector<16x512xf32>
    %51 = vector.broadcast %23 : vector<16x1xf32> to vector<16x512xf32>
    %52 = arith.mulf %51, %48 : vector<16x512xf32>
    %53 = arith.select %50, %48, %52 : vector<16x512xi1>, vector<16x512xf32>
    %54 = vector.broadcast %2 : vector<1x512xf32> to vector<16x512xf32>
    %55 = arith.mulf %53, %54 : vector<16x512xf32>
    %56 = arith.truncf %55 : vector<16x512xf32> to vector<16x512xbf16>
    %c0_22 = arith.constant 0 : index
    %c0_23 = arith.constant 0 : index
    %c0_24 = arith.constant 0 : index
    %57 = vector.load %arg5[%c0_22, %c0_23, %c0_24] : memref<1x16x512xbf16, #tpu.memory_space<vmem>>, vector<1x16x512xbf16>
    %58 = vector.shape_cast %57 : vector<1x16x512xbf16> to vector<16x512xbf16>
    %59 = vector.shape_cast %56 : vector<16x512xbf16> to vector<1x16x512xbf16>
    tpu.vector_store %arg5[%c0_22, %c0_23, %c0_24], %59 {strides = array<i32>} : memref<1x16x512xbf16, #tpu.memory_space<vmem>>, vector<1x16x512xbf16>,
    return
  }
  func.func @transform_0(%arg0: i32) -> (i32, i32, i32) {
    %c0_i32 = arith.constant 0 : i32
    %c0_i32_0 = arith.constant 0 : i32
    %c0_i32_1 = arith.constant 0 : i32
    return %arg0, %c0_i32, %c0_i32_0 : i32, i32, i32
  }
  func.func @transform_1(%arg0: i32) -> (i32, i32) {
    %c0_i32 = arith.constant 0 : i32
    %c0_i32_0 = arith.constant 0 : i32
    %c0_i32_1 = arith.constant 0 : i32
    return %c0_i32, %c0_i32_0 : i32, i32
  }
  func.func @transform_2(%arg0: i32) -> (i32, i32) {
    %c0_i32 = arith.constant 0 : i32
    %c0_i32_0 = arith.constant 0 : i32
    %c0_i32_1 = arith.constant 0 : i32
    return %c0_i32, %c0_i32_0 : i32, i32
  }
  func.func @transform_3(%arg0: i32) -> (i32, i32) {
    %c0_i32 = arith.constant 0 : i32
    %c0_i32_0 = arith.constant 0 : i32
    %c0_i32_1 = arith.constant 0 : i32
    return %c0_i32, %c0_i32_0 : i32, i32
  }
  func.func @transform_4(%arg0: i32) -> (i32, i32, i32) {
    %c2_i32 = arith.constant 2 : i32
    %c0_i32 = arith.constant 0 : i32
    %c0_i32_0 = arith.constant 0 : i32
    return %arg0, %c2_i32, %c0_i32 : i32, i32, i32
  }
}

module attributes {stable_mosaic.version = 11 : i64} {
  func.func @_dense_layer_kernel(%arg0: i32, %arg1: memref<1x48x512xbf16, #tpu.memory_space<vmem>>, %arg2: memref<16x288xbf16, #tpu.memory_space<vmem>>, %arg3: memref<16x3xf32, #tpu.memory_space<vmem>>, %arg4: memref<1x512xf32, #tpu.memory_space<vmem>>, %arg5: memref<1x16x512xbf16, #tpu.memory_space<vmem>>) attributes {dimension_semantics = [#tpu.dimension_semantics<parallel>], iteration_bounds = array<i64: 2>, scalar_prefetch = 0 : i64, scratch_operands = 0 : i64, tpu.core_type = #tpu.core_type<tc>, window_params = [{transform_indices = @transform_0, window_bounds = array<i64: 1, 48, 512>}, {pipeline_mode = #tpu.pipeline_mode<synchronous>, transform_indices = @transform_1, window_bounds = array<i64: 16, 288>}, {pipeline_mode = #tpu.pipeline_mode<synchronous>, transform_indices = @transform_2, window_bounds = array<i64: 16, 3>}, {pipeline_mode = #tpu.pipeline_mode<synchronous>, transform_indices = @transform_3, window_bounds = array<i64: 1, 512>}, {transform_indices = @transform_4, window_bounds = array<i64: 1, 16, 512>}]} {
    %c0 = arith.constant 0 : index
    %c0_0 = arith.constant 0 : index
    %c0_1 = arith.constant 0 : index
    %0 = vector.load %arg1[%c0, %c0_0, %c0_1] : memref<1x48x512xbf16, #tpu.memory_space<vmem>>, vector<1x48x512xbf16>
    %1 = vector.shape_cast %0 : vector<1x48x512xbf16> to vector<48x512xbf16>
    %c0_2 = arith.constant 0 : index
    %c0_3 = arith.constant 0 : index
    %2 = vector.load %arg4[%c0_2, %c0_3] : memref<1x512xf32, #tpu.memory_space<vmem>>, vector<1x512xf32>
    %cst = arith.constant 0.000000e+00 : bf16
    %3 = vector.broadcast %cst : bf16 to vector<48x73xbf16>
    %4 = vector.extract_strided_slice %1 {offsets = [0, 0], sizes = [48, 439], strides = [1, 1]} : vector<48x512xbf16> to vector<48x439xbf16>
    %5 = tpu.concatenate %3, %4 in 1 : vector<48x73xbf16>, vector<48x439xbf16> -> vector<48x512xbf16>
    %cst_4 = arith.constant 0.000000e+00 : bf16
    %6 = vector.broadcast %cst_4 : bf16 to vector<48x72xbf16>
    %7 = vector.extract_strided_slice %1 {offsets = [0, 0], sizes = [48, 440], strides = [1, 1]} : vector<48x512xbf16> to vector<48x440xbf16>
    %8 = tpu.concatenate %6, %7 in 1 : vector<48x72xbf16>, vector<48x440xbf16> -> vector<48x512xbf16>
    %cst_5 = arith.constant 0.000000e+00 : bf16
    %9 = vector.broadcast %cst_5 : bf16 to vector<48x71xbf16>
    %10 = vector.extract_strided_slice %1 {offsets = [0, 0], sizes = [48, 441], strides = [1, 1]} : vector<48x512xbf16> to vector<48x441xbf16>
    %11 = tpu.concatenate %9, %10 in 1 : vector<48x71xbf16>, vector<48x441xbf16> -> vector<48x512xbf16>
    %cst_6 = arith.constant 0.000000e+00 : bf16
    %12 = vector.broadcast %cst_6 : bf16 to vector<48x1xbf16>
    %13 = vector.extract_strided_slice %1 {offsets = [0, 0], sizes = [48, 511], strides = [1, 1]} : vector<48x512xbf16> to vector<48x511xbf16>
    %14 = tpu.concatenate %12, %13 in 1 : vector<48x1xbf16>, vector<48x511xbf16> -> vector<48x512xbf16>
    %cst_7 = arith.constant 0.000000e+00 : bf16
    %15 = vector.broadcast %cst_7 : bf16 to vector<48x1xbf16>
    %16 = vector.extract_strided_slice %1 {offsets = [0, 1], sizes = [48, 511], strides = [1, 1]} : vector<48x512xbf16> to vector<48x511xbf16>
    %17 = tpu.concatenate %16, %15 in 1 : vector<48x511xbf16>, vector<48x1xbf16> -> vector<48x512xbf16>
    %18 = tpu.concatenate %5, %8, %11, %14, %1, %17 in 0 : vector<48x512xbf16>, vector<48x512xbf16>, vector<48x512xbf16>, vector<48x512xbf16>, vector<48x512xbf16>, vector<48x512xbf16> -> vector<288x512xbf16>
    %c0_8 = arith.constant 0 : index
    %c0_9 = arith.constant 0 : index
    %19 = vector.load %arg2[%c0_8, %c0_9] : memref<16x288xbf16, #tpu.memory_space<vmem>>, vector<16x288xbf16>
    %cst_10 = arith.constant dense<0.000000e+00> : vector<16x512xf32>
    %20 = tpu.matmul %19, %18, %cst_10 {dimension_numbers = #tpu.dot_dimension_numbers<[1], [0], [0], [1], [0, 0, 1, 1], [], []>} : vector<16x288xbf16>, vector<288x512xbf16>, vector<16x512xf32> -> vector<16x512xf32>
    %c0_11 = arith.constant 0 : index
    %c0_12 = arith.constant 0 : index
    %21 = vector.load %arg3[%c0_11, %c0_12] : memref<16x3xf32, #tpu.memory_space<vmem>>, vector<16x1xf32>
    %c0_13 = arith.constant 0 : index
    %c1 = arith.constant 1 : index
    %22 = vector.load %arg3[%c0_13, %c1] : memref<16x3xf32, #tpu.memory_space<vmem>>, vector<16x1xf32>
    %c0_14 = arith.constant 0 : index
    %c2 = arith.constant 2 : index
    %23 = vector.load %arg3[%c0_14, %c2] : memref<16x3xf32, #tpu.memory_space<vmem>>, vector<16x1xf32>
    %24 = vector.broadcast %2 : vector<1x512xf32> to vector<16x512xf32>
    %25 = arith.mulf %20, %24 : vector<16x512xf32>
    %cst_15 = arith.constant dense<0.000000e+00> : vector<16xf32>
    %26 = vector.multi_reduction <add>, %25, %cst_15 [1] : vector<16x512xf32> to vector<16xf32>
    %27 = vector.shape_cast %26 : vector<16xf32> to vector<16x1xf32>
    %cst_16 = arith.constant 3.906250e-03 : f32
    %28 = vector.broadcast %cst_16 : f32 to vector<16x1xf32>
    %29 = arith.mulf %27, %28 : vector<16x1xf32>
    %30 = arith.mulf %25, %25 : vector<16x512xf32>
    %cst_17 = arith.constant dense<0.000000e+00> : vector<16xf32>
    %31 = vector.multi_reduction <add>, %30, %cst_17 [1] : vector<16x512xf32> to vector<16xf32>
    %32 = vector.shape_cast %31 : vector<16xf32> to vector<16x1xf32>
    %cst_18 = arith.constant 3.906250e-03 : f32
    %33 = vector.broadcast %cst_18 : f32 to vector<16x1xf32>
    %34 = arith.mulf %32, %33 : vector<16x1xf32>
    %35 = arith.mulf %29, %29 : vector<16x1xf32>
    %36 = arith.subf %34, %35 : vector<16x1xf32>
    %cst_19 = arith.constant 0.000000e+00 : f32
    %37 = vector.broadcast %cst_19 : f32 to vector<16x1xf32>
    %38 = arith.maximumf %36, %37 : vector<16x1xf32>
    %cst_20 = arith.constant 9.99999974E-6 : f32
    %39 = vector.broadcast %cst_20 : f32 to vector<16x1xf32>
    %40 = arith.addf %38, %39 : vector<16x1xf32>
    %41 = math.rsqrt %40 : vector<16x1xf32>
    %42 = arith.mulf %21, %41 : vector<16x1xf32>
    %43 = arith.mulf %29, %42 : vector<16x1xf32>
    %44 = arith.subf %22, %43 : vector<16x1xf32>
    %45 = vector.broadcast %42 : vector<16x1xf32> to vector<16x512xf32>
    %46 = arith.mulf %20, %45 : vector<16x512xf32>
    %47 = vector.broadcast %44 : vector<16x1xf32> to vector<16x512xf32>
    %48 = arith.addf %46, %47 : vector<16x512xf32>
    %cst_21 = arith.constant 0.000000e+00 : f32
    %49 = vector.broadcast %cst_21 : f32 to vector<16x512xf32>
    %50 = arith.cmpf oge, %48, %49 : vector<16x512xf32>
    %51 = vector.broadcast %23 : vector<16x1xf32> to vector<16x512xf32>
    %52 = arith.mulf %51, %48 : vector<16x512xf32>
    %53 = arith.select %50, %48, %52 : vector<16x512xi1>, vector<16x512xf32>
    %54 = vector.broadcast %2 : vector<1x512xf32> to vector<16x512xf32>
    %55 = arith.mulf %53, %54 : vector<16x512xf32>
    %56 = arith.truncf %55 : vector<16x512xf32> to vector<16x512xbf16>
    %c0_22 = arith.constant 0 : index
    %c0_23 = arith.constant 0 : index
    %c0_24 = arith.constant 0 : index
    %57 = vector.load %arg5[%c0_22, %c0_23, %c0_24] : memref<1x16x512xbf16, #tpu.memory_space<vmem>>, vector<1x16x512xbf16>
    %58 = vector.shape_cast %57 : vector<1x16x512xbf16> to vector<16x512xbf16>
    %59 = vector.shape_cast %56 : vector<16x512xbf16> to vector<1x16x512xbf16>
    tpu.vector_store %arg5[%c0_22, %c0_23, %c0_24], %59 {strides = array<i32>} : memref<1x16x512xbf16, #tpu.memory_space<vmem>>, vector<1x16x512xbf16>,
    return
  }
  func.func @transform_0(%arg0: i32) -> (i32, i32, i32) {
    %c0_i32 = arith.constant 0 : i32
    %c0_i32_0 = arith.constant 0 : i32
    %c0_i32_1 = arith.constant 0 : i32
    return %arg0, %c0_i32, %c0_i32_0 : i32, i32, i32
  }
  func.func @transform_1(%arg0: i32) -> (i32, i32) {
    %c0_i32 = arith.constant 0 : i32
    %c0_i32_0 = arith.constant 0 : i32
    %c0_i32_1 = arith.constant 0 : i32
    return %c0_i32, %c0_i32_0 : i32, i32
  }
  func.func @transform_2(%arg0: i32) -> (i32, i32) {
    %c0_i32 = arith.constant 0 : i32
    %c0_i32_0 = arith.constant 0 : i32
    %c0_i32_1 = arith.constant 0 : i32
    return %c0_i32, %c0_i32_0 : i32, i32
  }
  func.func @transform_3(%arg0: i32) -> (i32, i32) {
    %c0_i32 = arith.constant 0 : i32
    %c0_i32_0 = arith.constant 0 : i32
    %c0_i32_1 = arith.constant 0 : i32
    return %c0_i32, %c0_i32_0 : i32, i32
  }
  func.func @transform_4(%arg0: i32) -> (i32, i32, i32) {
    %c3_i32 = arith.constant 3 : i32
    %c0_i32 = arith.constant 0 : i32
    %c0_i32_0 = arith.constant 0 : i32
    return %arg0, %c3_i32, %c0_i32 : i32, i32, i32
  }
}

module attributes {stable_mosaic.version = 11 : i64} {
  func.func @_final_layer_kernel(%arg0: i32, %arg1: memref<1x64x512xbf16, #tpu.memory_space<vmem>>, %arg2: memref<16x384xbf16, #tpu.memory_space<vmem>>, %arg3: memref<16x3xf32, #tpu.memory_space<vmem>>, %arg4: memref<16x4xf32, #tpu.memory_space<vmem>>, %arg5: memref<2x512xf32, #tpu.memory_space<vmem>>, %arg6: memref<1x512xf32, #tpu.memory_space<vmem>>, %arg7: memref<1x1x512xf32, #tpu.memory_space<vmem>>) attributes {dimension_semantics = [#tpu.dimension_semantics<parallel>], iteration_bounds = array<i64: 2>, scalar_prefetch = 0 : i64, scratch_operands = 0 : i64, tpu.core_type = #tpu.core_type<tc>, window_params = [{transform_indices = @transform_0, window_bounds = array<i64: 1, 64, 512>}, {pipeline_mode = #tpu.pipeline_mode<synchronous>, transform_indices = @transform_1, window_bounds = array<i64: 16, 384>}, {pipeline_mode = #tpu.pipeline_mode<synchronous>, transform_indices = @transform_2, window_bounds = array<i64: 16, 3>}, {pipeline_mode = #tpu.pipeline_mode<synchronous>, transform_indices = @transform_3, window_bounds = array<i64: 16, 4>}, {pipeline_mode = #tpu.pipeline_mode<synchronous>, transform_indices = @transform_4, window_bounds = array<i64: 2, 512>}, {pipeline_mode = #tpu.pipeline_mode<synchronous>, transform_indices = @transform_5, window_bounds = array<i64: 1, 512>}, {transform_indices = @transform_6, window_bounds = array<i64: 1, 1, 512>}]} {
    %c0 = arith.constant 0 : index
    %c0_0 = arith.constant 0 : index
    %c0_1 = arith.constant 0 : index
    %0 = vector.load %arg1[%c0, %c0_0, %c0_1] : memref<1x64x512xbf16, #tpu.memory_space<vmem>>, vector<1x64x512xbf16>
    %1 = vector.shape_cast %0 : vector<1x64x512xbf16> to vector<64x512xbf16>
    %c0_2 = arith.constant 0 : index
    %c0_3 = arith.constant 0 : index
    %2 = vector.load %arg6[%c0_2, %c0_3] : memref<1x512xf32, #tpu.memory_space<vmem>>, vector<1x512xf32>
    %cst = arith.constant 0.000000e+00 : bf16
    %3 = vector.broadcast %cst : bf16 to vector<64x145xbf16>
    %4 = vector.extract_strided_slice %1 {offsets = [0, 0], sizes = [64, 367], strides = [1, 1]} : vector<64x512xbf16> to vector<64x367xbf16>
    %5 = tpu.concatenate %3, %4 in 1 : vector<64x145xbf16>, vector<64x367xbf16> -> vector<64x512xbf16>
    %cst_4 = arith.constant 0.000000e+00 : bf16
    %6 = vector.broadcast %cst_4 : bf16 to vector<64x144xbf16>
    %7 = vector.extract_strided_slice %1 {offsets = [0, 0], sizes = [64, 368], strides = [1, 1]} : vector<64x512xbf16> to vector<64x368xbf16>
    %8 = tpu.concatenate %6, %7 in 1 : vector<64x144xbf16>, vector<64x368xbf16> -> vector<64x512xbf16>
    %cst_5 = arith.constant 0.000000e+00 : bf16
    %9 = vector.broadcast %cst_5 : bf16 to vector<64x143xbf16>
    %10 = vector.extract_strided_slice %1 {offsets = [0, 0], sizes = [64, 369], strides = [1, 1]} : vector<64x512xbf16> to vector<64x369xbf16>
    %11 = tpu.concatenate %9, %10 in 1 : vector<64x143xbf16>, vector<64x369xbf16> -> vector<64x512xbf16>
    %cst_6 = arith.constant 0.000000e+00 : bf16
    %12 = vector.broadcast %cst_6 : bf16 to vector<64x1xbf16>
    %13 = vector.extract_strided_slice %1 {offsets = [0, 0], sizes = [64, 511], strides = [1, 1]} : vector<64x512xbf16> to vector<64x511xbf16>
    %14 = tpu.concatenate %12, %13 in 1 : vector<64x1xbf16>, vector<64x511xbf16> -> vector<64x512xbf16>
    %cst_7 = arith.constant 0.000000e+00 : bf16
    %15 = vector.broadcast %cst_7 : bf16 to vector<64x1xbf16>
    %16 = vector.extract_strided_slice %1 {offsets = [0, 1], sizes = [64, 511], strides = [1, 1]} : vector<64x512xbf16> to vector<64x511xbf16>
    %17 = tpu.concatenate %16, %15 in 1 : vector<64x511xbf16>, vector<64x1xbf16> -> vector<64x512xbf16>
    %18 = tpu.concatenate %5, %8, %11, %14, %1, %17 in 0 : vector<64x512xbf16>, vector<64x512xbf16>, vector<64x512xbf16>, vector<64x512xbf16>, vector<64x512xbf16>, vector<64x512xbf16> -> vector<384x512xbf16>
    %c0_8 = arith.constant 0 : index
    %c0_9 = arith.constant 0 : index
    %19 = vector.load %arg2[%c0_8, %c0_9] : memref<16x384xbf16, #tpu.memory_space<vmem>>, vector<16x384xbf16>
    %cst_10 = arith.constant dense<0.000000e+00> : vector<16x512xf32>
    %20 = tpu.matmul %19, %18, %cst_10 {dimension_numbers = #tpu.dot_dimension_numbers<[1], [0], [0], [1], [0, 0, 1, 1], [], []>} : vector<16x384xbf16>, vector<384x512xbf16>, vector<16x512xf32> -> vector<16x512xf32>
    %c0_11 = arith.constant 0 : index
    %c0_12 = arith.constant 0 : index
    %21 = vector.load %arg3[%c0_11, %c0_12] : memref<16x3xf32, #tpu.memory_space<vmem>>, vector<16x1xf32>
    %c0_13 = arith.constant 0 : index
    %c1 = arith.constant 1 : index
    %22 = vector.load %arg3[%c0_13, %c1] : memref<16x3xf32, #tpu.memory_space<vmem>>, vector<16x1xf32>
    %c0_14 = arith.constant 0 : index
    %c2 = arith.constant 2 : index
    %23 = vector.load %arg3[%c0_14, %c2] : memref<16x3xf32, #tpu.memory_space<vmem>>, vector<16x1xf32>
    %24 = vector.broadcast %2 : vector<1x512xf32> to vector<16x512xf32>
    %25 = arith.mulf %20, %24 : vector<16x512xf32>
    %cst_15 = arith.constant dense<0.000000e+00> : vector<16xf32>
    %26 = vector.multi_reduction <add>, %25, %cst_15 [1] : vector<16x512xf32> to vector<16xf32>
    %27 = vector.shape_cast %26 : vector<16xf32> to vector<16x1xf32>
    %cst_16 = arith.constant 3.906250e-03 : f32
    %28 = vector.broadcast %cst_16 : f32 to vector<16x1xf32>
    %29 = arith.mulf %27, %28 : vector<16x1xf32>
    %30 = arith.mulf %25, %25 : vector<16x512xf32>
    %cst_17 = arith.constant dense<0.000000e+00> : vector<16xf32>
    %31 = vector.multi_reduction <add>, %30, %cst_17 [1] : vector<16x512xf32> to vector<16xf32>
    %32 = vector.shape_cast %31 : vector<16xf32> to vector<16x1xf32>
    %cst_18 = arith.constant 3.906250e-03 : f32
    %33 = vector.broadcast %cst_18 : f32 to vector<16x1xf32>
    %34 = arith.mulf %32, %33 : vector<16x1xf32>
    %35 = arith.mulf %29, %29 : vector<16x1xf32>
    %36 = arith.subf %34, %35 : vector<16x1xf32>
    %cst_19 = arith.constant 0.000000e+00 : f32
    %37 = vector.broadcast %cst_19 : f32 to vector<16x1xf32>
    %38 = arith.maximumf %36, %37 : vector<16x1xf32>
    %cst_20 = arith.constant 9.99999974E-6 : f32
    %39 = vector.broadcast %cst_20 : f32 to vector<16x1xf32>
    %40 = arith.addf %38, %39 : vector<16x1xf32>
    %41 = math.rsqrt %40 : vector<16x1xf32>
    %42 = arith.mulf %21, %41 : vector<16x1xf32>
    %43 = arith.mulf %29, %42 : vector<16x1xf32>
    %44 = arith.subf %22, %43 : vector<16x1xf32>
    %45 = vector.broadcast %42 : vector<16x1xf32> to vector<16x512xf32>
    %46 = arith.mulf %20, %45 : vector<16x512xf32>
    %47 = vector.broadcast %44 : vector<16x1xf32> to vector<16x512xf32>
    %48 = arith.addf %46, %47 : vector<16x512xf32>
    %cst_21 = arith.constant 0.000000e+00 : f32
    %49 = vector.broadcast %cst_21 : f32 to vector<16x512xf32>
    %50 = arith.cmpf oge, %48, %49 : vector<16x512xf32>
    %51 = vector.broadcast %23 : vector<16x1xf32> to vector<16x512xf32>
    %52 = arith.mulf %51, %48 : vector<16x512xf32>
    %53 = arith.select %50, %48, %52 : vector<16x512xi1>, vector<16x512xf32>
    %c0_22 = arith.constant 0 : index
    %c0_23 = arith.constant 0 : index
    %54 = vector.load %arg4[%c0_22, %c0_23] : memref<16x4xf32, #tpu.memory_space<vmem>>, vector<16x1xf32>
    %c0_24 = arith.constant 0 : index
    %c1_25 = arith.constant 1 : index
    %55 = vector.load %arg4[%c0_24, %c1_25] : memref<16x4xf32, #tpu.memory_space<vmem>>, vector<16x1xf32>
    %c0_26 = arith.constant 0 : index
    %c2_27 = arith.constant 2 : index
    %56 = vector.load %arg4[%c0_26, %c2_27] : memref<16x4xf32, #tpu.memory_space<vmem>>, vector<16x1xf32>
    %c0_28 = arith.constant 0 : index
    %c3 = arith.constant 3 : index
    %57 = vector.load %arg4[%c0_28, %c3] : memref<16x4xf32, #tpu.memory_space<vmem>>, vector<16x1xf32>
    %58 = vector.broadcast %2 : vector<1x512xf32> to vector<16x512xf32>
    %59 = arith.mulf %53, %58 : vector<16x512xf32>
    %cst_29 = arith.constant dense<0.000000e+00> : vector<16xf32>
    %60 = vector.multi_reduction <add>, %59, %cst_29 [1] : vector<16x512xf32> to vector<16xf32>
    %61 = vector.shape_cast %60 : vector<16xf32> to vector<16x1xf32>
    %cst_30 = arith.constant 3.906250e-03 : f32
    %62 = vector.broadcast %cst_30 : f32 to vector<16x1xf32>
    %63 = arith.mulf %61, %62 : vector<16x1xf32>
    %64 = arith.mulf %59, %59 : vector<16x512xf32>
    %cst_31 = arith.constant dense<0.000000e+00> : vector<16xf32>
    %65 = vector.multi_reduction <add>, %64, %cst_31 [1] : vector<16x512xf32> to vector<16xf32>
    %66 = vector.shape_cast %65 : vector<16xf32> to vector<16x1xf32>
    %cst_32 = arith.constant 3.906250e-03 : f32
    %67 = vector.broadcast %cst_32 : f32 to vector<16x1xf32>
    %68 = arith.mulf %66, %67 : vector<16x1xf32>
    %69 = arith.mulf %63, %63 : vector<16x1xf32>
    %70 = arith.subf %68, %69 : vector<16x1xf32>
    %cst_33 = arith.constant 0.000000e+00 : f32
    %71 = vector.broadcast %cst_33 : f32 to vector<16x1xf32>
    %72 = arith.maximumf %70, %71 : vector<16x1xf32>
    %cst_34 = arith.constant 9.99999974E-6 : f32
    %73 = vector.broadcast %cst_34 : f32 to vector<16x1xf32>
    %74 = arith.addf %72, %73 : vector<16x1xf32>
    %75 = math.rsqrt %74 : vector<16x1xf32>
    %76 = arith.mulf %54, %75 : vector<16x1xf32>
    %77 = arith.mulf %63, %76 : vector<16x1xf32>
    %78 = arith.subf %55, %77 : vector<16x1xf32>
    %79 = vector.broadcast %76 : vector<16x1xf32> to vector<16x512xf32>
    %80 = arith.mulf %53, %79 : vector<16x512xf32>
    %81 = vector.broadcast %78 : vector<16x1xf32> to vector<16x512xf32>
    %82 = arith.addf %80, %81 : vector<16x512xf32>
    %cst_35 = arith.constant 0.000000e+00 : f32
    %83 = vector.broadcast %cst_35 : f32 to vector<16x512xf32>
    %84 = arith.cmpf oge, %82, %83 : vector<16x512xf32>
    %85 = vector.broadcast %56 : vector<16x1xf32> to vector<16x512xf32>
    %86 = arith.mulf %85, %82 : vector<16x512xf32>
    %87 = arith.select %84, %82, %86 : vector<16x512xi1>, vector<16x512xf32>
    %88 = vector.broadcast %57 : vector<16x1xf32> to vector<16x512xf32>
    %89 = arith.mulf %87, %88 : vector<16x512xf32>
    %cst_36 = arith.constant dense<0.000000e+00> : vector<512xf32>
    %90 = vector.multi_reduction <add>, %89, %cst_36 [0] : vector<16x512xf32> to vector<512xf32>
    %91 = vector.shape_cast %90 : vector<512xf32> to vector<1x512xf32>
    %c0_37 = arith.constant 0 : index
    %c0_38 = arith.constant 0 : index
    %92 = vector.load %arg5[%c0_37, %c0_38] : memref<2x512xf32, #tpu.memory_space<vmem>>, vector<1x512xf32>
    %93 = arith.mulf %92, %91 : vector<1x512xf32>
    %c1_39 = arith.constant 1 : index
    %c0_40 = arith.constant 0 : index
    %94 = vector.load %arg5[%c1_39, %c0_40] : memref<2x512xf32, #tpu.memory_space<vmem>>, vector<1x512xf32>
    %95 = arith.addf %93, %94 : vector<1x512xf32>
    %96 = arith.negf %95 : vector<1x512xf32>
    %97 = math.exp %96 : vector<1x512xf32>
    %cst_41 = arith.constant 1.000000e+00 : f32
    %98 = vector.broadcast %cst_41 : f32 to vector<1x512xf32>
    %99 = arith.addf %98, %97 : vector<1x512xf32>
    %100 = arith.divf %98, %99 : vector<1x512xf32>
    %cst_42 = arith.constant 2.000000e+00 : f32
    %101 = vector.broadcast %cst_42 : f32 to vector<1x512xf32>
    %102 = arith.mulf %101, %100 : vector<1x512xf32>
    %c0_43 = arith.constant 0 : index
    %c0_44 = arith.constant 0 : index
    %c0_45 = arith.constant 0 : index
    %103 = vector.load %arg7[%c0_43, %c0_44, %c0_45] : memref<1x1x512xf32, #tpu.memory_space<vmem>>, vector<1x1x512xf32>
    %104 = vector.shape_cast %103 : vector<1x1x512xf32> to vector<1x512xf32>
    %105 = vector.shape_cast %102 : vector<1x512xf32> to vector<1x1x512xf32>
    tpu.vector_store %arg7[%c0_43, %c0_44, %c0_45], %105 {strides = array<i32>} : memref<1x1x512xf32, #tpu.memory_space<vmem>>, vector<1x1x512xf32>,
    return
  }
  func.func @transform_0(%arg0: i32) -> (i32, i32, i32) {
    %c0_i32 = arith.constant 0 : i32
    %c0_i32_0 = arith.constant 0 : i32
    %c0_i32_1 = arith.constant 0 : i32
    return %arg0, %c0_i32, %c0_i32_0 : i32, i32, i32
  }
  func.func @transform_1(%arg0: i32) -> (i32, i32) {
    %c0_i32 = arith.constant 0 : i32
    %c0_i32_0 = arith.constant 0 : i32
    %c0_i32_1 = arith.constant 0 : i32
    return %c0_i32, %c0_i32_0 : i32, i32
  }
  func.func @transform_2(%arg0: i32) -> (i32, i32) {
    %c0_i32 = arith.constant 0 : i32
    %c0_i32_0 = arith.constant 0 : i32
    %c0_i32_1 = arith.constant 0 : i32
    return %c0_i32, %c0_i32_0 : i32, i32
  }
  func.func @transform_3(%arg0: i32) -> (i32, i32) {
    %c0_i32 = arith.constant 0 : i32
    %c0_i32_0 = arith.constant 0 : i32
    %c0_i32_1 = arith.constant 0 : i32
    return %c0_i32, %c0_i32_0 : i32, i32
  }
  func.func @transform_4(%arg0: i32) -> (i32, i32) {
    %c0_i32 = arith.constant 0 : i32
    %c0_i32_0 = arith.constant 0 : i32
    %c0_i32_1 = arith.constant 0 : i32
    return %c0_i32, %c0_i32_0 : i32, i32
  }
  func.func @transform_5(%arg0: i32) -> (i32, i32) {
    %c0_i32 = arith.constant 0 : i32
    %c0_i32_0 = arith.constant 0 : i32
    %c0_i32_1 = arith.constant 0 : i32
    return %c0_i32, %c0_i32_0 : i32, i32
  }
  func.func @transform_6(%arg0: i32) -> (i32, i32, i32) {
    %c0_i32 = arith.constant 0 : i32
    %c0_i32_0 = arith.constant 0 : i32
    %c0_i32_1 = arith.constant 0 : i32
    return %arg0, %c0_i32, %c0_i32_0 : i32, i32, i32
  }
}

</mosaic_0001>

<llo_original>
// kernel: mask_decoder_forward.4
$region0: #{mask_decoder_forward.4}
  #allocation0 [shape = 'u32[]', space=smem, size = 0x4, offset = 0x4, fixed_abs, tag = 'smem constant byte address 0x4 - core index']
  #allocation1 [shape = 'u32[72,128]{1,0:T(1,128)}', space=vmem, size = 0x9000, scoped, tag = 'internal scratch']
  %s0 = inlined_call_operand.vmem [shape: bf16[2,64,512], index: 0, kind: input, shape index: {}, may-alias: {0,4}]
  %s1 = inlined_call_operand.vmem [shape: bf16[16,96], index: 1, kind: input, shape index: {}]
  %s2 = inlined_call_operand.vmem [shape: f32[16,3], index: 2, kind: input, shape index: {}]
  %s3 = inlined_call_operand.vmem [shape: f32[1,512], index: 3, kind: input, shape index: {}]
  %s4 = inlined_call_operand.vmem [shape: bf16[2,64,512], index: 4, kind: output, shape index: {}, may-alias: {0,4}]
  %s5 = sld [smem:[#allocation0]]
  $region49: #{mask_decoder_forward.4} parent=0
    _
  %s7 = ssub.s32 1, %s5
  %s8 = scalar_select 0, %s7, %s5
  loop: start=0, step=1, limit=4
  $region2: #{mask_decoder_forward.4} parent=0 // loop_pre_header
    _
  $region3: #{mask_decoder_forward.4} parent=0 // loop_header
    %s10 = sphi 0, %s14
    %p11 = scmp.ge.s32.totalorder %s10, 4
    %s20 = sphi 0, %s22
    %s23 = sphi 0, %s20
    %s24 = sphi 0, %s23
    %s40 = sphi 0, %s24
    %s44 = sphi 0, %s44
    %s46 = sphi 0, %s44
    %s47 = sphi 0, %s46
    %s61 = sphi 0, %s47
    %s65 = sphi 0, %s65
    %s67 = sphi 0, %s65
    %s68 = sphi 0, %s67
    %s82 = sphi 0, %s68
    %s86 = sphi 0, %s86
    %s88 = sphi 0, %s86
    %s89 = sphi 0, %s88
    %s103 = sphi 0, %s89
    %s109 = sphi 0, %s111
    %s112 = sphi 0, %s109
    %s113 = sphi 0, %s112
    %s129 = sphi 0, %s113
  $region4: #{mask_decoder_forward.4} parent=0 // loop_header_branch
    %13 = sbr.rel (%p11) target = $region8
  $region5: #{mask_decoder_forward.4} parent=0 // loop_body
    %s15 = ssub.s32 %s10, 1
    %s16 = ssub.s32 %s10, 2
    %s17 = sadd.s32 %s10, 1
    %s18 = ssub.s32 %s10, %s17
    %p19 = scmp.eq.s32.totalorder %s18, 0
    %s21 = sadd.s32 %s20, 1
    %s22 = scalar_select %p19, %s20, %s21
    %p25 = pneg %p19
    %p26 = scmp.eq.s32.totalorder %s10, 1
    %p27 = por %p25, %p26
    %p28 = scmp.ne.s32.totalorder %s20, %s23
    %p29 = scmp.eq.s32.totalorder %s10, 0
    %p30 = por %p28, %p29
    %p31 = scmp.ne.s32.totalorder %s20, %s23
    %p32 = scmp.eq.s32.totalorder %s15, 1
    %p33 = por %p31, %p32
    %p34 = scmp.ne.s32.totalorder %s23, %s24
    %p35 = scmp.eq.s32.totalorder %s15, 0
    %p36 = por %p34, %p35
    %p37 = scmp.ne.s32.totalorder %s23, %s24
    %p38 = scmp.eq.s32.totalorder %s16, 1
    %p39 = por %p37, %p38
    %p41 = scmp.ne.s32.totalorder %s24, %s40
    %p42 = scmp.eq.s32.totalorder %s16, 0
    %p43 = por %p41, %p42
    %s45 = sadd.s32 %s44, 1
    %p48 = scmp.eq.s32.totalorder %s10, 1
    %p49 = scmp.ne.s32.totalorder %s44, %s46
    %p50 = scmp.eq.s32.totalorder %s10, 0
    %p51 = por %p49, %p50
    %p52 = scmp.ne.s32.totalorder %s44, %s46
    %p53 = scmp.eq.s32.totalorder %s15, 1
    %p54 = por %p52, %p53
    %p55 = scmp.ne.s32.totalorder %s46, %s47
    %p56 = scmp.eq.s32.totalorder %s15, 0
    %p57 = por %p55, %p56
    %p58 = scmp.ne.s32.totalorder %s46, %s47
    %p59 = scmp.eq.s32.totalorder %s16, 1
    %p60 = por %p58, %p59
    %p62 = scmp.ne.s32.totalorder %s47, %s61
    %p63 = scmp.eq.s32.totalorder %s16, 0
    %p64 = por %p62, %p63
    %s66 = sadd.s32 %s65, 1
    %p69 = scmp.eq.s32.totalorder %s10, 1
    %p70 = scmp.ne.s32.totalorder %s65, %s67
    %p71 = scmp.eq.s32.totalorder %s10, 0
    %p72 = por %p70, %p71
    %p73 = scmp.ne.s32.totalorder %s65, %s67
    %p74 = scmp.eq.s32.totalorder %s15, 1
    %p75 = por %p73, %p74
    %p76 = scmp.ne.s32.totalorder %s67, %s68
    %p77 = scmp.eq.s32.totalorder %s15, 0
    %p78 = por %p76, %p77
    %p79 = scmp.ne.s32.totalorder %s67, %s68
    %p80 = scmp.eq.s32.totalorder %s16, 1
    %p81 = por %p79, %p80
    %p83 = scmp.ne.s32.totalorder %s68, %s82
    %p84 = scmp.eq.s32.totalorder %s16, 0
    %p85 = por %p83, %p84
    %s87 = sadd.s32 %s86, 1
    %p90 = scmp.eq.s32.totalorder %s10, 1
    %p91 = scmp.ne.s32.totalorder %s86, %s88
    %p92 = scmp.eq.s32.totalorder %s10, 0
    %p93 = por %p91, %p92
    %p94 = scmp.ne.s32.totalorder %s86, %s88
    %p95 = scmp.eq.s32.totalorder %s15, 1
    %p96 = por %p94, %p95
    %p97 = scmp.ne.s32.totalorder %s88, %s89
    %p98 = scmp.eq.s32.totalorder %s15, 0
    %p99 = por %p97, %p98
    %p100 = scmp.ne.s32.totalorder %s88, %s89
    %p101 = scmp.eq.s32.totalorder %s16, 1
    %p102 = por %p100, %p101
    %p104 = scmp.ne.s32.totalorder %s89, %s103
    %p105 = scmp.eq.s32.totalorder %s16, 0
    %p106 = por %p104, %p105
    %s107 = ssub.s32 %s10, %s17
    %p108 = scmp.eq.s32.totalorder %s107, 0
    %s110 = sadd.s32 %s109, 1
    %s111 = scalar_select %p108, %s109, %s110
    %p114 = pneg %p108
    %p115 = scmp.eq.s32.totalorder %s10, 1
    %p116 = por %p114, %p115
    %p117 = scmp.ne.s32.totalorder %s109, %s112
    %p118 = scmp.eq.s32.totalorder %s10, 0
    %p119 = por %p117, %p118
    %p120 = scmp.ne.s32.totalorder %s109, %s112
    %p121 = scmp.eq.s32.totalorder %s15, 1
    %p122 = por %p120, %p121
    %p123 = scmp.ne.s32.totalorder %s112, %s113
    %p124 = scmp.eq.s32.totalorder %s15, 0
    %p125 = por %p123, %p124
    %p126 = scmp.ne.s32.totalorder %s112, %s113
    %p127 = scmp.eq.s32.totalorder %s16, 1
    %p128 = por %p126, %p127
    %p130 = scmp.ne.s32.totalorder %s113, %s129
    %p131 = scmp.eq.s32.totalorder %s16, 0
    %p132 = por %p130, %p131
    %p133 = scmp.le.s32.totalorder 1, %s10
    %p134 = scmp.lt.s32.totalorder %s10, 3
    %p135 = pnand %p133, %p134
    %p136 = pneg %p135
    // Predicated region
    $region9: #{mask_decoder_forward.4} parent=5 // pred_check
      _
    $region10: #{mask_decoder_forward.4} parent=5 // pred_check_branch
      %138 = sbr.rel (%p135) target = $region12
    $region11: #{mask_decoder_forward.4} parent=5 // pred_region
      %s139 = ssub.s32 %s10, 1
      // Predicated region
      $region13: #{mask_decoder_forward.4} parent=11 // pred_check
        %p140 = pneg %p57
      $region14: #{mask_decoder_forward.4} parent=11 // pred_check_branch
        %142 = sbr.rel (%p140) target = $region16
      $region15: #{mask_decoder_forward.4} parent=11 // pred_region
        _
      $region16: #{mask_decoder_forward.4} parent=11 // pred_fallthru
        _
      // Predicated region
      $region17: #{mask_decoder_forward.4} parent=11 // pred_check
        %p143 = pneg %p78
      $region18: #{mask_decoder_forward.4} parent=11 // pred_check_branch
        %145 = sbr.rel (%p143) target = $region20
      $region19: #{mask_decoder_forward.4} parent=11 // pred_region
        _
      $region20: #{mask_decoder_forward.4} parent=11 // pred_fallthru
        _
      // Predicated region
      $region21: #{mask_decoder_forward.4} parent=11 // pred_check
        %p146 = pneg %p99
      $region22: #{mask_decoder_forward.4} parent=11 // pred_check_branch
        %148 = sbr.rel (%p146) target = $region24
      $region23: #{mask_decoder_forward.4} parent=11 // pred_region
        _
      $region24: #{mask_decoder_forward.4} parent=11 // pred_fallthru
        _
    $region12: #{mask_decoder_forward.4} parent=5 // pred_fallthru
      _
    %p149 = scmp.lt.s32.totalorder %s10, 2
    // Predicated region
    $region25: #{mask_decoder_forward.4} parent=5 // pred_check
      %p150 = pneg %p149
    $region26: #{mask_decoder_forward.4} parent=5 // pred_check_branch
      %152 = sbr.rel (%p150) target = $region28
    $region27: #{mask_decoder_forward.4} parent=5 // pred_region
      // Predicated region
      $region29: #{mask_decoder_forward.4} parent=27 // pred_check
        %p153 = pneg %p30
      $region30: #{mask_decoder_forward.4} parent=27 // pred_check_branch
        %155 = sbr.rel (%p153) target = $region32
      $region31: #{mask_decoder_forward.4} parent=27 // pred_region
        %p156 = scmp.lt.s32.totalorder %s10, 1
        %s157 = scalar_select %p156, %s10, 1
        %s158 = smul.addr %s157, 32
        %s159 = smul.addr %s158, 4
        %s160 = scalar_lea.vmem %s0, %s159
      $region32: #{mask_decoder_forward.4} parent=27 // pred_fallthru
        _
    $region28: #{mask_decoder_forward.4} parent=5 // pred_fallthru
      _
    %p161 = scmp.le.s32.totalorder 1, %s10
    %p162 = scmp.lt.s32.totalorder %s10, 3
    %p163 = pnand %p161, %p162
    %p164 = pneg %p163
    // Predicated region
    $region33: #{mask_decoder_forward.4} parent=5 // pred_check
      _
    $region34: #{mask_decoder_forward.4} parent=5 // pred_check_branch
      %166 = sbr.rel (%p163) target = $region36
    $region35: #{mask_decoder_forward.4} parent=5 // pred_region
      %s167 = ssub.s32 %s10, 1
      %p168 = scmp.lt.s32.totalorder %s15, 1
      %s169 = scalar_select %p168, %s15, 1
      %s170 = smul.addr %s169, 32
      %s171 = smul.addr %s170, 4
      %s172 = scalar_lea.vmem %s0, %s171
      %p173 = pneg %p36
      %p174 = pneg %p33
      %p175 = pneg %p57
      %p176 = pneg %p54
      %p177 = pneg %p78
      %p178 = pneg %p75
      %p179 = pneg %p99
      %p180 = pneg %p96
      %p181 = pneg %p125
      %p182 = pneg %p122
      %p183 = scmp.lt.s32.totalorder %s15, 1
      %s184 = scalar_select %p183, %s15, 1
      %s185 = smul.addr %s184, 32
      %s186 = sadd.s32 8, %s185
      %s187 = smul.addr %s186, 4
      %s188 = scalar_lea.vmem %s4, %s187
      %p189 = scmp.lt.s32.totalorder %s15, 1
      %s190 = scalar_select %p189, %s15, 1
      %s191 = smul.addr %s190, 32
      %s192 = smul.addr %s191, 4
      %s193 = scalar_lea.vmem %s0, %s192
      %p194 = scmp.lt.s32.totalorder %s15, 1
      %s195 = scalar_select %p194, %s15, 1
      %s196 = smul.addr %s195, 32
      %s197 = sadd.s32 8, %s196
      %s198 = smul.addr %s197, 4
      %s199 = scalar_lea.vmem %s4, %s198
      %v201 = vld [vmem:[%s193] sm:$0xff]
      %v202 = vld [vmem:[%s193 + $0x8] sm:$0xff]
      %v203 = vld [vmem:[%s193 + $0x10] sm:$0xff]
      %v204 = vld [vmem:[%s193 + $0x18] sm:$0xff]
      %v205 = vld [vmem:[%s3] sm:$0xf]
      %v210 = vunpack.c.l.b16 %v201
      %v211 = vunpack.c.h.b16 %v201
      %v212 = vunpack.c.l.b16 %v202
      %v213 = vunpack.c.h.b16 %v202
      %v214 = vunpack.c.l.b16 %v203
      %v215 = vunpack.c.h.b16 %v203
      %v216 = vunpack.c.l.b16 %v204
      %v217 = vunpack.c.h.b16 %v204
      %v218 = vpack.c.b16 %v214, %v210
      %v219 = vpack.c.b16 %v215, %v211
      %v220 = vpack.c.b16 %v216, %v212
      %v221 = vpack.c.b16 %v217, %v213
      %222 = vrot.lane.b32.xlu0 %v218, 19
      %v223 = vpop.permute.xlu0 %222
      %224 = vrot.lane.b32.xlu0 %v219, 19
      %v225 = vpop.permute.xlu0 %224
      %226 = vrot.lane.b32.xlu0 %v220, 19
      %v227 = vpop.permute.xlu0 %226
      %228 = vrot.lane.b32.xlu0 %v221, 19
      %v229 = vpop.permute.xlu0 %228
      %vm230 = vcmask 154624
      %v231 = vsel %vm230, %v223, %v225
      %v232 = vsel %vm230, %v225, %v227
      %v233 = vsel %vm230, %v227, %v229
      %vm237 = vcmask 154624
      %v240 = vsel %vm237, 0, %v223
      %242 = vrot.lane.b32.xlu0 %v218, 18
      %v243 = vpop.permute.xlu0 %242
      %244 = vrot.lane.b32.xlu0 %v219, 18
      %v245 = vpop.permute.xlu0 %244
      %246 = vrot.lane.b32.xlu0 %v220, 18
      %v247 = vpop.permute.xlu0 %246
      %248 = vrot.lane.b32.xlu0 %v221, 18
      %v249 = vpop.permute.xlu0 %248
      %vm250 = vcmask 146432
      %v251 = vsel %vm250, %v243, %v245
      %v252 = vsel %vm250, %v245, %v247
      %v253 = vsel %vm250, %v247, %v249
      %vm257 = vcmask 146432
      %v259 = vsel %vm257, 0, %v243
      %261 = vrot.lane.b32.xlu0 %v218, 17
      %v262 = vpop.permute.xlu0 %261
      %263 = vrot.lane.b32.xlu0 %v219, 17
      %v264 = vpop.permute.xlu0 %263
      %265 = vrot.lane.b32.xlu0 %v220, 17
      %v266 = vpop.permute.xlu0 %265
      %267 = vrot.lane.b32.xlu0 %v221, 17
      %v268 = vpop.permute.xlu0 %267
      %vm269 = vcmask 138240
      %v270 = vsel %vm269, %v262, %v264
      %v271 = vsel %vm269, %v264, %v266
      %v272 = vsel %vm269, %v266, %v268
      %vm276 = vcmask 138240
      %v278 = vsel %vm276, 0, %v262
      %280 = vrot.lane.b32.xlu0 %v218, 1
      %v281 = vpop.permute.xlu0 %280
      %282 = vrot.lane.b32.xlu0 %v219, 1
      %v283 = vpop.permute.xlu0 %282
      %284 = vrot.lane.b32.xlu0 %v220, 1
      %v285 = vpop.permute.xlu0 %284
      %286 = vrot.lane.b32.xlu0 %v221, 1
      %v287 = vpop.permute.xlu0 %286
      %vm288 = vcmask 7168
      %v289 = vsel %vm288, %v281, %v283
      %v290 = vsel %vm288, %v283, %v285
      %v291 = vsel %vm288, %v285, %v287
      %vm295 = vcmask 7168
      %v297 = vsel %vm295, 0, %v281
      %299 = vrot.lane.b32.xlu0 %v218, 127
      %v300 = vpop.permute.xlu0 %299
      %301 = vrot.lane.b32.xlu0 %v219, 127
      %v302 = vpop.permute.xlu0 %301
      %303 = vrot.lane.b32.xlu0 %v220, 127
      %v304 = vpop.permute.xlu0 %303
      %305 = vrot.lane.b32.xlu0 %v221, 127
      %v306 = vpop.permute.xlu0 %305
      %vm307 = vcmask 1039360
      %v308 = vsel %vm307, %v300, %v302
      %v309 = vsel %vm307, %v302, %v304
      %v310 = vsel %vm307, %v304, %v306
      %vm314 = vcmask 1039360
      %v316 = vsel %vm314, %v306, 0
      %v322 = vld [vmem:[%s1] sm:$0xf]
      %v323 = vld [vmem:[%s1 + $0x4] sm:$0xf]
      %v326 = vunpack.c.l.b16 %v322
      %v327 = vunpack.c.l.b16 %v323
      %v328 = vpack.c.b16 %v327, %v326
      %vm329 = vcmask 785408
      %v331 = vsel %vm329, %v328, 0
      %333 = vmatpush.bf16.msra.mxu0 0
      %334 = vmatpush.bf16.msra.mxu0 0
      %335 = vmatpush.bf16.msra.mxu0 %v308
      %336 = vmatpush.bf16.msra.mxu0 %v218
      %337 = vmatpush.bf16.msra.mxu0 %v297
      %338 = vmatpush.bf16.msra.mxu0 %v278
      %339 = vmatpush.bf16.msra.mxu0 %v259
      %340 = vmatpush.bf16.msra.mxu0 %v240
      %341 = vmatmul.bf16.gmra.mxu0 %v331
      %v342 = vpop.f32.mrf.mxu0
      %v343 = vadd.f32 0.0, %v342
      %v344 = vpop.f32.mrf.mxu0
      %v345 = vadd.f32 0.0, %v344
      %346 = vdwg.mxu0
      %347 = vmatpush.bf16.msra.mxu0 0
      %348 = vmatpush.bf16.msra.mxu0 0
      %349 = vmatpush.bf16.msra.mxu0 %v309
      %350 = vmatpush.bf16.msra.mxu0 %v219
      %351 = vmatpush.bf16.msra.mxu0 %v289
      %352 = vmatpush.bf16.msra.mxu0 %v270
      %353 = vmatpush.bf16.msra.mxu0 %v251
      %354 = vmatpush.bf16.msra.mxu0 %v231
      %355 = vmatmul.bf16.gmra.mxu0 %v331
      %v356 = vpop.f32.mrf.mxu0
      %v357 = vadd.f32 0.0, %v356
      %v358 = vpop.f32.mrf.mxu0
      %v359 = vadd.f32 0.0, %v358
      %360 = vdwg.mxu0
      %361 = vmatpush.bf16.msra.mxu0 0
      %362 = vmatpush.bf16.msra.mxu0 0
      %363 = vmatpush.bf16.msra.mxu0 %v310
      %364 = vmatpush.bf16.msra.mxu0 %v220
      %365 = vmatpush.bf16.msra.mxu0 %v290
      %366 = vmatpush.bf16.msra.mxu0 %v271
      %367 = vmatpush.bf16.msra.mxu0 %v252
      %368 = vmatpush.bf16.msra.mxu0 %v232
      %369 = vmatmul.bf16.gmra.mxu0 %v331
      %v370 = vpop.f32.mrf.mxu0
      %v371 = vadd.f32 0.0, %v370
      %v372 = vpop.f32.mrf.mxu0
      %v373 = vadd.f32 0.0, %v372
      %374 = vdwg.mxu0
      %375 = vmatpush.bf16.msra.mxu0 0
      %376 = vmatpush.bf16.msra.mxu0 0
      %377 = vmatpush.bf16.msra.mxu0 %v316
      %378 = vmatpush.bf16.msra.mxu0 %v221
      %379 = vmatpush.bf16.msra.mxu0 %v291
      %380 = vmatpush.bf16.msra.mxu0 %v272
      %381 = vmatpush.bf16.msra.mxu0 %v253
      %382 = vmatpush.bf16.msra.mxu0 %v233
      %383 = vmatmul.bf16.gmra.mxu0 %v331
      %v384 = vpop.f32.mrf.mxu0
      %v385 = vadd.f32 0.0, %v384
      %v386 = vpop.f32.mrf.mxu0
      %v387 = vadd.f32 0.0, %v386
      %388 = vdwg.mxu0
      %v389 = vld [vmem:[%s2] sm:$0xff]
      %v390 = vld [vmem:[%s2 + $0x8] sm:$0xff]
      %v392 = vperm.slane %v205, 0
      %v393 = vperm.slane %v205, 1
      %v394 = vperm.slane %v205, 2
      %v395 = vperm.slane %v205, 3
      %v400 = vmul.f32 %v343, %v392
      %v401 = vmul.f32 %v357, %v393
      %v402 = vmul.f32 %v371, %v394
      %v403 = vmul.f32 %v385, %v395
      %v404 = vmul.f32 %v345, %v392
      %v405 = vmul.f32 %v359, %v393
      %v406 = vmul.f32 %v373, %v394
      %v407 = vmul.f32 %v387, %v395
      %v408 = vadd.f32 %v400, %v401
      %v409 = vadd.f32 %v408, %v402
      %v410 = vadd.f32 %v409, %v403
      %411 = vadd.xlane.f32.xlu0 %v410
      %v412 = vpop.xlane.xlu0 %411
      %v413 = vadd.f32 %v404, %v405
      %v414 = vadd.f32 %v413, %v406
      %v415 = vadd.f32 %v414, %v407
      %416 = vadd.xlane.f32.xlu0 %v415
      %v417 = vpop.xlane.xlu0 %416
      %v418 = vmul.f32 %v412, 0.00390625
      %v419 = vmul.f32 %v417, 0.00390625
      %v420 = vmul.f32 %v400, %v400
      %v421 = vmul.f32 %v401, %v401
      %v422 = vmul.f32 %v402, %v402
      %v423 = vmul.f32 %v403, %v403
      %v424 = vmul.f32 %v404, %v404
      %v425 = vmul.f32 %v405, %v405
      %v426 = vmul.f32 %v406, %v406
      %v427 = vmul.f32 %v407, %v407
      %v428 = vadd.f32 %v420, %v421
      %v429 = vadd.f32 %v428, %v422
      %v430 = vadd.f32 %v429, %v423
      %431 = vadd.xlane.f32.xlu0 %v430
      %v432 = vpop.xlane.xlu0 %431
      %v433 = vadd.f32 %v424, %v425
      %v434 = vadd.f32 %v433, %v426
      %v435 = vadd.f32 %v434, %v427
      %436 = vadd.xlane.f32.xlu0 %v435
      %v437 = vpop.xlane.xlu0 %436
      %v438 = vmul.f32 %v432, 0.00390625
      %v439 = vmul.f32 %v437, 0.00390625
      %v440 = vmul.f32 %v418, %v418
      %v441 = vmul.f32 %v419, %v419
      %v442 = vsub.f32 %v438, %v440
      %v443 = vsub.f32 %v439, %v441
      %v444 = vmax.f32 %v442, 0.0
      %v445 = vmax.f32 %v443, 0.0
      %v446 = vadd.f32 %v444, 1e-05
      %v447 = vadd.f32 %v445, 1e-05
      %v448 = vrsqrt.pop %v446
      %v449 = vmul.f32 %v448, %v446
      %v450 = vmul.f32 %v449, %v448
      %v451 = vmul.f32 0.5, %v450
      %v452 = vsub.f32 1.5, %v451
      %v453 = vmul.f32 %v448, %v452
      %vm454 = vweird.f32 %v446
      %vm455 = vweird.f32 %v448
      %vm456 = vmor %vm454, %vm455
      %v457 = vsel %vm456, %v448, %v453
      %v458 = vrsqrt.pop %v447
      %v459 = vmul.f32 %v458, %v447
      %v460 = vmul.f32 %v459, %v458
      %v461 = vmul.f32 0.5, %v460
      %v462 = vsub.f32 1.5, %v461
      %v463 = vmul.f32 %v458, %v462
      %vm464 = vweird.f32 %v447
      %vm465 = vweird.f32 %v458
      %vm466 = vmor %vm464, %vm465
      %v467 = vsel %vm466, %v458, %v463
      %v468 = vmul.f32 %v389, %v457
      %v469 = vmul.f32 %v390, %v467
      %v470 = vmul.f32 %v418, %v468
      %v471 = vmul.f32 %v419, %v469
      %474 = vrot.lane.b32.xlu0 %v470, 1
      %v475 = vpop.permute.xlu0 %474
      %476 = vrot.lane.b32.xlu0 %v471, 1
      %v477 = vpop.permute.xlu0 %476
      %v480 = vsub.f32 %v389, %v475
      %v481 = vsub.f32 %v390, %v477
      %483 = vset.pattern.permute.xlu0 0
      %484 = vperm.xlu0 %483, %v468
      %v485 = vpop.permute.xlu0 %484
      %488 = vset.pattern.permute.xlu0 0
      %489 = vperm.xlu0 %488, %v469
      %v490 = vpop.permute.xlu0 %489
      %v492 = vmul.f32 %v343, %v485
      %v493 = vmul.f32 %v357, %v485
      %v494 = vmul.f32 %v371, %v485
      %v495 = vmul.f32 %v385, %v485
      %v496 = vmul.f32 %v345, %v490
      %v497 = vmul.f32 %v359, %v490
      %v498 = vmul.f32 %v373, %v490
      %v499 = vmul.f32 %v387, %v490
      %501 = vset.pattern.permute.xlu0 1
      %502 = vperm.xlu0 %501, %v480
      %v503 = vpop.permute.xlu0 %502
      %506 = vset.pattern.permute.xlu0 1
      %507 = vperm.xlu0 %506, %v481
      %v508 = vpop.permute.xlu0 %507
      %v510 = vadd.f32 %v492, %v503
      %v511 = vadd.f32 %v493, %v503
      %v512 = vadd.f32 %v494, %v503
      %v513 = vadd.f32 %v495, %v503
      %v514 = vadd.f32 %v496, %v508
      %v515 = vadd.f32 %v497, %v508
      %v516 = vadd.f32 %v498, %v508
      %v517 = vadd.f32 %v499, %v508
      %vm518 = vcmp.ge.f32.partialorder %v510, 0.0
      %vm519 = vcmp.ge.f32.partialorder %v511, 0.0
      %vm520 = vcmp.ge.f32.partialorder %v512, 0.0
      %vm521 = vcmp.ge.f32.partialorder %v513, 0.0
      %vm522 = vcmp.ge.f32.partialorder %v514, 0.0
      %vm523 = vcmp.ge.f32.partialorder %v515, 0.0
      %vm524 = vcmp.ge.f32.partialorder %v516, 0.0
      %vm525 = vcmp.ge.f32.partialorder %v517, 0.0
      %527 = vset.pattern.permute.xlu0 2
      %528 = vperm.xlu0 %527, %v389
      %v529 = vpop.permute.xlu0 %528
      %532 = vset.pattern.permute.xlu0 2
      %533 = vperm.xlu0 %532, %v390
      %v534 = vpop.permute.xlu0 %533
      %v536 = vmul.f32 %v529, %v510
      %v537 = vmul.f32 %v529, %v511
      %v538 = vmul.f32 %v529, %v512
      %v539 = vmul.f32 %v529, %v513
      %v540 = vmul.f32 %v534, %v514
      %v541 = vmul.f32 %v534, %v515
      %v542 = vmul.f32 %v534, %v516
      %v543 = vmul.f32 %v534, %v517
      %v544 = vsel %vm518, %v510, %v536
      %v545 = vsel %vm519, %v511, %v537
      %v546 = vsel %vm520, %v512, %v538
      %v547 = vsel %vm521, %v513, %v539
      %v548 = vsel %vm522, %v514, %v540
      %v549 = vsel %vm523, %v515, %v541
      %v550 = vsel %vm524, %v516, %v542
      %v551 = vsel %vm525, %v517, %v543
      %v552 = vmul.f32 %v544, %v392
      %v553 = vmul.f32 %v545, %v393
      %v554 = vmul.f32 %v546, %v394
      %v555 = vmul.f32 %v547, %v395
      %v556 = vmul.f32 %v548, %v392
      %v557 = vmul.f32 %v549, %v393
      %v558 = vmul.f32 %v550, %v394
      %v559 = vmul.f32 %v551, %v395
      %v560 = vpack.c.bf16 %v553, %v552
      %v561 = vpack.c.bf16 %v555, %v554
      %v562 = vpack.c.bf16 %v557, %v556
      %v563 = vpack.c.bf16 %v559, %v558
      %564 = vst [vmem:[%s199] sm:$0xff] %v560
      %565 = vst [vmem:[%s199 + $0x8] sm:$0xff] %v561
      %566 = vst [vmem:[%s199 + $0x10] sm:$0xff] %v562
      %567 = vst [vmem:[%s199 + $0x18] sm:$0xff] %v563
      %p568 = scmp.lt.s32.totalorder %s15, 1
      %s569 = scalar_select %p568, %s15, 1
      %s570 = smul.addr %s569, 32
      %s571 = sadd.s32 8, %s570
      %s572 = smul.addr %s571, 4
      %s573 = scalar_lea.vmem %s4, %s572
      // Predicated region
      $region37: #{mask_decoder_forward.4} parent=35 // pred_check
        %p574 = pneg %p122
      $region38: #{mask_decoder_forward.4} parent=35 // pred_check_branch
        %576 = sbr.rel (%p574) target = $region40
      $region39: #{mask_decoder_forward.4} parent=35 // pred_region
        _
      $region40: #{mask_decoder_forward.4} parent=35 // pred_fallthru
        _
    $region36: #{mask_decoder_forward.4} parent=5 // pred_fallthru
      _
    %p577 = scmp.le.s32.totalorder 2, %s10
    // Predicated region
    $region41: #{mask_decoder_forward.4} parent=5 // pred_check
      %p578 = pneg %p577
    $region42: #{mask_decoder_forward.4} parent=5 // pred_check_branch
      %580 = sbr.rel (%p578) target = $region44
    $region43: #{mask_decoder_forward.4} parent=5 // pred_region
      %s581 = ssub.s32 %s10, 2
      // Predicated region
      $region45: #{mask_decoder_forward.4} parent=43 // pred_check
        %p582 = pneg %p128
      $region46: #{mask_decoder_forward.4} parent=43 // pred_check_branch
        %584 = sbr.rel (%p582) target = $region48
      $region47: #{mask_decoder_forward.4} parent=43 // pred_region
        %p585 = scmp.lt.s32.totalorder %s16, 1
        %s586 = scalar_select %p585, %s16, 1
        %s587 = smul.addr %s586, 32
        %s588 = sadd.s32 8, %s587
        %s589 = smul.addr %s588, 4
        %s590 = scalar_lea.vmem %s4, %s589
      $region48: #{mask_decoder_forward.4} parent=43 // pred_fallthru
        _
    $region44: #{mask_decoder_forward.4} parent=5 // pred_fallthru
      _
  $region6: #{mask_decoder_forward.4} parent=0 // loop_footer
    %s14 = sadd.s32 1, %s10
  $region7: #{mask_decoder_forward.4} parent=0 // loop_footer_branch
    %9 = sbr.rel target = $region3
  $region8: #{mask_decoder_forward.4} parent=0 // loop_exit
    _

// kernel: mask_decoder_forward.5
$region0: #{mask_decoder_forward.5}
  #allocation0 [shape = 'u32[]', space=smem, size = 0x4, offset = 0x4, fixed_abs, tag = 'smem constant byte address 0x4 - core index']
  #allocation1 [shape = 'u32[72,128]{1,0:T(1,128)}', space=vmem, size = 0x9000, scoped, tag = 'internal scratch']
  %s0 = inlined_call_operand.vmem [shape: bf16[2,64,512], index: 0, kind: input, shape index: {}, may-alias: {0,4}]
  %s1 = inlined_call_operand.vmem [shape: bf16[16,192], index: 1, kind: input, shape index: {}]
  %s2 = inlined_call_operand.vmem [shape: f32[16,3], index: 2, kind: input, shape index: {}]
  %s3 = inlined_call_operand.vmem [shape: f32[1,512], index: 3, kind: input, shape index: {}]
  %s4 = inlined_call_operand.vmem [shape: bf16[2,64,512], index: 4, kind: output, shape index: {}, may-alias: {0,4}]
  %s5 = sld [smem:[#allocation0]]
  $region49: #{mask_decoder_forward.5} parent=0
    _
  %s7 = ssub.s32 1, %s5
  %s8 = scalar_select 0, %s7, %s5
  loop: start=0, step=1, limit=4
  $region2: #{mask_decoder_forward.5} parent=0 // loop_pre_header
    _
  $region3: #{mask_decoder_forward.5} parent=0 // loop_header
    %s10 = sphi 0, %s14
    %p11 = scmp.ge.s32.totalorder %s10, 4
    %s20 = sphi 0, %s22
    %s23 = sphi 0, %s20
    %s24 = sphi 0, %s23
    %s40 = sphi 0, %s24
    %s44 = sphi 0, %s44
    %s46 = sphi 0, %s44
    %s47 = sphi 0, %s46
    %s61 = sphi 0, %s47
    %s65 = sphi 0, %s65
    %s67 = sphi 0, %s65
    %s68 = sphi 0, %s67
    %s82 = sphi 0, %s68
    %s86 = sphi 0, %s86
    %s88 = sphi 0, %s86
    %s89 = sphi 0, %s88
    %s103 = sphi 0, %s89
    %s109 = sphi 0, %s111
    %s112 = sphi 0, %s109
    %s113 = sphi 0, %s112
    %s129 = sphi 0, %s113
  $region4: #{mask_decoder_forward.5} parent=0 // loop_header_branch
    %13 = sbr.rel (%p11) target = $region8
  $region5: #{mask_decoder_forward.5} parent=0 // loop_body
    %s15 = ssub.s32 %s10, 1
    %s16 = ssub.s32 %s10, 2
    %s17 = sadd.s32 %s10, 1
    %s18 = ssub.s32 %s10, %s17
    %p19 = scmp.eq.s32.totalorder %s18, 0
    %s21 = sadd.s32 %s20, 1
    %s22 = scalar_select %p19, %s20, %s21
    %p25 = pneg %p19
    %p26 = scmp.eq.s32.totalorder %s10, 1
    %p27 = por %p25, %p26
    %p28 = scmp.ne.s32.totalorder %s20, %s23
    %p29 = scmp.eq.s32.totalorder %s10, 0
    %p30 = por %p28, %p29
    %p31 = scmp.ne.s32.totalorder %s20, %s23
    %p32 = scmp.eq.s32.totalorder %s15, 1
    %p33 = por %p31, %p32
    %p34 = scmp.ne.s32.totalorder %s23, %s24
    %p35 = scmp.eq.s32.totalorder %s15, 0
    %p36 = por %p34, %p35
    %p37 = scmp.ne.s32.totalorder %s23, %s24
    %p38 = scmp.eq.s32.totalorder %s16, 1
    %p39 = por %p37, %p38
    %p41 = scmp.ne.s32.totalorder %s24, %s40
    %p42 = scmp.eq.s32.totalorder %s16, 0
    %p43 = por %p41, %p42
    %s45 = sadd.s32 %s44, 1
    %p48 = scmp.eq.s32.totalorder %s10, 1
    %p49 = scmp.ne.s32.totalorder %s44, %s46
    %p50 = scmp.eq.s32.totalorder %s10, 0
    %p51 = por %p49, %p50
    %p52 = scmp.ne.s32.totalorder %s44, %s46
    %p53 = scmp.eq.s32.totalorder %s15, 1
    %p54 = por %p52, %p53
    %p55 = scmp.ne.s32.totalorder %s46, %s47
    %p56 = scmp.eq.s32.totalorder %s15, 0
    %p57 = por %p55, %p56
    %p58 = scmp.ne.s32.totalorder %s46, %s47
    %p59 = scmp.eq.s32.totalorder %s16, 1
    %p60 = por %p58, %p59
    %p62 = scmp.ne.s32.totalorder %s47, %s61
    %p63 = scmp.eq.s32.totalorder %s16, 0
    %p64 = por %p62, %p63
    %s66 = sadd.s32 %s65, 1
    %p69 = scmp.eq.s32.totalorder %s10, 1
    %p70 = scmp.ne.s32.totalorder %s65, %s67
    %p71 = scmp.eq.s32.totalorder %s10, 0
    %p72 = por %p70, %p71
    %p73 = scmp.ne.s32.totalorder %s65, %s67
    %p74 = scmp.eq.s32.totalorder %s15, 1
    %p75 = por %p73, %p74
    %p76 = scmp.ne.s32.totalorder %s67, %s68
    %p77 = scmp.eq.s32.totalorder %s15, 0
    %p78 = por %p76, %p77
    %p79 = scmp.ne.s32.totalorder %s67, %s68
    %p80 = scmp.eq.s32.totalorder %s16, 1
    %p81 = por %p79, %p80
    %p83 = scmp.ne.s32.totalorder %s68, %s82
    %p84 = scmp.eq.s32.totalorder %s16, 0
    %p85 = por %p83, %p84
    %s87 = sadd.s32 %s86, 1
    %p90 = scmp.eq.s32.totalorder %s10, 1
    %p91 = scmp.ne.s32.totalorder %s86, %s88
    %p92 = scmp.eq.s32.totalorder %s10, 0
    %p93 = por %p91, %p92
    %p94 = scmp.ne.s32.totalorder %s86, %s88
    %p95 = scmp.eq.s32.totalorder %s15, 1
    %p96 = por %p94, %p95
    %p97 = scmp.ne.s32.totalorder %s88, %s89
    %p98 = scmp.eq.s32.totalorder %s15, 0
    %p99 = por %p97, %p98
    %p100 = scmp.ne.s32.totalorder %s88, %s89
    %p101 = scmp.eq.s32.totalorder %s16, 1
    %p102 = por %p100, %p101
    %p104 = scmp.ne.s32.totalorder %s89, %s103
    %p105 = scmp.eq.s32.totalorder %s16, 0
    %p106 = por %p104, %p105
    %s107 = ssub.s32 %s10, %s17
    %p108 = scmp.eq.s32.totalorder %s107, 0
    %s110 = sadd.s32 %s109, 1
    %s111 = scalar_select %p108, %s109, %s110
    %p114 = pneg %p108
    %p115 = scmp.eq.s32.totalorder %s10, 1
    %p116 = por %p114, %p115
    %p117 = scmp.ne.s32.totalorder %s109, %s112
    %p118 = scmp.eq.s32.totalorder %s10, 0
    %p119 = por %p117, %p118
    %p120 = scmp.ne.s32.totalorder %s109, %s112
    %p121 = scmp.eq.s32.totalorder %s15, 1
    %p122 = por %p120, %p121
    %p123 = scmp.ne.s32.totalorder %s112, %s113
    %p124 = scmp.eq.s32.totalorder %s15, 0
    %p125 = por %p123, %p124
    %p126 = scmp.ne.s32.totalorder %s112, %s113
    %p127 = scmp.eq.s32.totalorder %s16, 1
    %p128 = por %p126, %p127
    %p130 = scmp.ne.s32.totalorder %s113, %s129
    %p131 = scmp.eq.s32.totalorder %s16, 0
    %p132 = por %p130, %p131
    %p133 = scmp.le.s32.totalorder 1, %s10
    %p134 = scmp.lt.s32.totalorder %s10, 3
    %p135 = pnand %p133, %p134
    %p136 = pneg %p135
    // Predicated region
    $region9: #{mask_decoder_forward.5} parent=5 // pred_check
      _
    $region10: #{mask_decoder_forward.5} parent=5 // pred_check_branch
      %138 = sbr.rel (%p135) target = $region12
    $region11: #{mask_decoder_forward.5} parent=5 // pred_region
      %s139 = ssub.s32 %s10, 1
      // Predicated region
      $region13: #{mask_decoder_forward.5} parent=11 // pred_check
        %p140 = pneg %p57
      $region14: #{mask_decoder_forward.5} parent=11 // pred_check_branch
        %142 = sbr.rel (%p140) target = $region16
      $region15: #{mask_decoder_forward.5} parent=11 // pred_region
        _
      $region16: #{mask_decoder_forward.5} parent=11 // pred_fallthru
        _
      // Predicated region
      $region17: #{mask_decoder_forward.5} parent=11 // pred_check
        %p143 = pneg %p78
      $region18: #{mask_decoder_forward.5} parent=11 // pred_check_branch
        %145 = sbr.rel (%p143) target = $region20
      $region19: #{mask_decoder_forward.5} parent=11 // pred_region
        _
      $region20: #{mask_decoder_forward.5} parent=11 // pred_fallthru
        _
      // Predicated region
      $region21: #{mask_decoder_forward.5} parent=11 // pred_check
        %p146 = pneg %p99
      $region22: #{mask_decoder_forward.5} parent=11 // pred_check_branch
        %148 = sbr.rel (%p146) target = $region24
      $region23: #{mask_decoder_forward.5} parent=11 // pred_region
        _
      $region24: #{mask_decoder_forward.5} parent=11 // pred_fallthru
        _
    $region12: #{mask_decoder_forward.5} parent=5 // pred_fallthru
      _
    %p149 = scmp.lt.s32.totalorder %s10, 2
    // Predicated region
    $region25: #{mask_decoder_forward.5} parent=5 // pred_check
      %p150 = pneg %p149
    $region26: #{mask_decoder_forward.5} parent=5 // pred_check_branch
      %152 = sbr.rel (%p150) target = $region28
    $region27: #{mask_decoder_forward.5} parent=5 // pred_region
      // Predicated region
      $region29: #{mask_decoder_forward.5} parent=27 // pred_check
        %p153 = pneg %p30
      $region30: #{mask_decoder_forward.5} parent=27 // pred_check_branch
        %155 = sbr.rel (%p153) target = $region32
      $region31: #{mask_decoder_forward.5} parent=27 // pred_region
        %p156 = scmp.lt.s32.totalorder %s10, 1
        %s157 = scalar_select %p156, %s10, 1
        %s158 = smul.addr %s157, 32
        %s159 = smul.addr %s158, 4
        %s160 = scalar_lea.vmem %s0, %s159
      $region32: #{mask_decoder_forward.5} parent=27 // pred_fallthru
        _
    $region28: #{mask_decoder_forward.5} parent=5 // pred_fallthru
      _
    %p161 = scmp.le.s32.totalorder 1, %s10
    %p162 = scmp.lt.s32.totalorder %s10, 3
    %p163 = pnand %p161, %p162
    %p164 = pneg %p163
    // Predicated region
    $region33: #{mask_decoder_forward.5} parent=5 // pred_check
      _
    $region34: #{mask_decoder_forward.5} parent=5 // pred_check_branch
      %166 = sbr.rel (%p163) target = $region36
    $region35: #{mask_decoder_forward.5} parent=5 // pred_region
      %s167 = ssub.s32 %s10, 1
      %p168 = scmp.lt.s32.totalorder %s15, 1
      %s169 = scalar_select %p168, %s15, 1
      %s170 = smul.addr %s169, 32
      %s171 = smul.addr %s170, 4
      %s172 = scalar_lea.vmem %s0, %s171
      %p173 = pneg %p36
      %p174 = pneg %p33
      %p175 = pneg %p57
      %p176 = pneg %p54
      %p177 = pneg %p78
      %p178 = pneg %p75
      %p179 = pneg %p99
      %p180 = pneg %p96
      %p181 = pneg %p125
      %p182 = pneg %p122
      %p183 = scmp.lt.s32.totalorder %s15, 1
      %s184 = scalar_select %p183, %s15, 1
      %s185 = smul.addr %s184, 32
      %s186 = sadd.s32 16, %s185
      %s187 = smul.addr %s186, 4
      %s188 = scalar_lea.vmem %s4, %s187
      %p189 = scmp.lt.s32.totalorder %s15, 1
      %s190 = scalar_select %p189, %s15, 1
      %s191 = smul.addr %s190, 32
      %s192 = smul.addr %s191, 4
      %s193 = scalar_lea.vmem %s0, %s192
      %p194 = scmp.lt.s32.totalorder %s15, 1
      %s195 = scalar_select %p194, %s15, 1
      %s196 = smul.addr %s195, 32
      %s197 = sadd.s32 16, %s196
      %s198 = smul.addr %s197, 4
      %s199 = scalar_lea.vmem %s4, %s198
      %v201 = vld [vmem:[%s193] sm:$0xff]
      %v202 = vld [vmem:[%s193 + $0x8] sm:$0xff]
      %v203 = vld [vmem:[%s193 + $0x10] sm:$0xff]
      %v204 = vld [vmem:[%s193 + $0x18] sm:$0xff]
      %v205 = vld [vmem:[%s193 + $0x20] sm:$0xff]
      %v206 = vld [vmem:[%s193 + $0x28] sm:$0xff]
      %v207 = vld [vmem:[%s193 + $0x30] sm:$0xff]
      %v208 = vld [vmem:[%s193 + $0x38] sm:$0xff]
      %v209 = vld [vmem:[%s3] sm:$0xf]
      %v218 = vunpack.c.l.b16 %v201
      %v219 = vunpack.c.h.b16 %v201
      %v220 = vunpack.c.l.b16 %v202
      %v221 = vunpack.c.h.b16 %v202
      %v222 = vunpack.c.l.b16 %v203
      %v223 = vunpack.c.h.b16 %v203
      %v224 = vunpack.c.l.b16 %v204
      %v225 = vunpack.c.h.b16 %v204
      %v226 = vunpack.c.l.b16 %v205
      %v227 = vunpack.c.h.b16 %v205
      %v228 = vunpack.c.l.b16 %v206
      %v229 = vunpack.c.h.b16 %v206
      %v230 = vunpack.c.l.b16 %v207
      %v231 = vunpack.c.h.b16 %v207
      %v232 = vunpack.c.l.b16 %v208
      %v233 = vunpack.c.h.b16 %v208
      %v234 = vpack.c.b16 %v222, %v218
      %v235 = vpack.c.b16 %v223, %v219
      %v236 = vpack.c.b16 %v224, %v220
      %v237 = vpack.c.b16 %v225, %v221
      %v238 = vpack.c.b16 %v230, %v226
      %v239 = vpack.c.b16 %v231, %v227
      %v240 = vpack.c.b16 %v232, %v228
      %v241 = vpack.c.b16 %v233, %v229
      %242 = vrot.lane.b32.xlu0 %v234, 37
      %v243 = vpop.permute.xlu0 %242
      %244 = vrot.lane.b32.xlu0 %v235, 37
      %v245 = vpop.permute.xlu0 %244
      %246 = vrot.lane.b32.xlu0 %v236, 37
      %v247 = vpop.permute.xlu0 %246
      %248 = vrot.lane.b32.xlu0 %v237, 37
      %v249 = vpop.permute.xlu0 %248
      %250 = vrot.lane.b32.xlu0 %v238, 37
      %v251 = vpop.permute.xlu0 %250
      %252 = vrot.lane.b32.xlu0 %v239, 37
      %v253 = vpop.permute.xlu0 %252
      %254 = vrot.lane.b32.xlu0 %v240, 37
      %v255 = vpop.permute.xlu0 %254
      %256 = vrot.lane.b32.xlu0 %v241, 37
      %v257 = vpop.permute.xlu0 %256
      %vm258 = vcmask 302080
      %v259 = vsel %vm258, %v243, %v245
      %v260 = vsel %vm258, %v245, %v247
      %v261 = vsel %vm258, %v247, %v249
      %v262 = vsel %vm258, %v251, %v253
      %v263 = vsel %vm258, %v253, %v255
      %v264 = vsel %vm258, %v255, %v257
      %vm271 = vcmask 302080
      %v274 = vsel %vm271, 0, %v243
      %v277 = vsel %vm271, 0, %v251
      %279 = vrot.lane.b32.xlu0 %v234, 36
      %v280 = vpop.permute.xlu0 %279
      %281 = vrot.lane.b32.xlu0 %v235, 36
      %v282 = vpop.permute.xlu0 %281
      %283 = vrot.lane.b32.xlu0 %v236, 36
      %v284 = vpop.permute.xlu0 %283
      %285 = vrot.lane.b32.xlu0 %v237, 36
      %v286 = vpop.permute.xlu0 %285
      %287 = vrot.lane.b32.xlu0 %v238, 36
      %v288 = vpop.permute.xlu0 %287
      %289 = vrot.lane.b32.xlu0 %v239, 36
      %v290 = vpop.permute.xlu0 %289
      %291 = vrot.lane.b32.xlu0 %v240, 36
      %v292 = vpop.permute.xlu0 %291
      %293 = vrot.lane.b32.xlu0 %v241, 36
      %v294 = vpop.permute.xlu0 %293
      %vm295 = vcmask 293888
      %v296 = vsel %vm295, %v280, %v282
      %v297 = vsel %vm295, %v282, %v284
      %v298 = vsel %vm295, %v284, %v286
      %v299 = vsel %vm295, %v288, %v290
      %v300 = vsel %vm295, %v290, %v292
      %v301 = vsel %vm295, %v292, %v294
      %vm308 = vcmask 293888
      %v310 = vsel %vm308, 0, %v280
      %v313 = vsel %vm308, 0, %v288
      %315 = vrot.lane.b32.xlu0 %v234, 35
      %v316 = vpop.permute.xlu0 %315
      %317 = vrot.lane.b32.xlu0 %v235, 35
      %v318 = vpop.permute.xlu0 %317
      %319 = vrot.lane.b32.xlu0 %v236, 35
      %v320 = vpop.permute.xlu0 %319
      %321 = vrot.lane.b32.xlu0 %v237, 35
      %v322 = vpop.permute.xlu0 %321
      %323 = vrot.lane.b32.xlu0 %v238, 35
      %v324 = vpop.permute.xlu0 %323
      %325 = vrot.lane.b32.xlu0 %v239, 35
      %v326 = vpop.permute.xlu0 %325
      %327 = vrot.lane.b32.xlu0 %v240, 35
      %v328 = vpop.permute.xlu0 %327
      %329 = vrot.lane.b32.xlu0 %v241, 35
      %v330 = vpop.permute.xlu0 %329
      %vm331 = vcmask 285696
      %v332 = vsel %vm331, %v316, %v318
      %v333 = vsel %vm331, %v318, %v320
      %v334 = vsel %vm331, %v320, %v322
      %v335 = vsel %vm331, %v324, %v326
      %v336 = vsel %vm331, %v326, %v328
      %v337 = vsel %vm331, %v328, %v330
      %vm344 = vcmask 285696
      %v346 = vsel %vm344, 0, %v316
      %v349 = vsel %vm344, 0, %v324
      %351 = vrot.lane.b32.xlu0 %v234, 1
      %v352 = vpop.permute.xlu0 %351
      %353 = vrot.lane.b32.xlu0 %v235, 1
      %v354 = vpop.permute.xlu0 %353
      %355 = vrot.lane.b32.xlu0 %v236, 1
      %v356 = vpop.permute.xlu0 %355
      %357 = vrot.lane.b32.xlu0 %v237, 1
      %v358 = vpop.permute.xlu0 %357
      %359 = vrot.lane.b32.xlu0 %v238, 1
      %v360 = vpop.permute.xlu0 %359
      %361 = vrot.lane.b32.xlu0 %v239, 1
      %v362 = vpop.permute.xlu0 %361
      %363 = vrot.lane.b32.xlu0 %v240, 1
      %v364 = vpop.permute.xlu0 %363
      %365 = vrot.lane.b32.xlu0 %v241, 1
      %v366 = vpop.permute.xlu0 %365
      %vm367 = vcmask 7168
      %v368 = vsel %vm367, %v352, %v354
      %v369 = vsel %vm367, %v354, %v356
      %v370 = vsel %vm367, %v356, %v358
      %v371 = vsel %vm367, %v360, %v362
      %v372 = vsel %vm367, %v362, %v364
      %v373 = vsel %vm367, %v364, %v366
      %vm380 = vcmask 7168
      %v382 = vsel %vm380, 0, %v352
      %v385 = vsel %vm380, 0, %v360
      %387 = vrot.lane.b32.xlu0 %v234, 127
      %v388 = vpop.permute.xlu0 %387
      %389 = vrot.lane.b32.xlu0 %v235, 127
      %v390 = vpop.permute.xlu0 %389
      %391 = vrot.lane.b32.xlu0 %v236, 127
      %v392 = vpop.permute.xlu0 %391
      %393 = vrot.lane.b32.xlu0 %v237, 127
      %v394 = vpop.permute.xlu0 %393
      %395 = vrot.lane.b32.xlu0 %v238, 127
      %v396 = vpop.permute.xlu0 %395
      %397 = vrot.lane.b32.xlu0 %v239, 127
      %v398 = vpop.permute.xlu0 %397
      %399 = vrot.lane.b32.xlu0 %v240, 127
      %v400 = vpop.permute.xlu0 %399
      %401 = vrot.lane.b32.xlu0 %v241, 127
      %v402 = vpop.permute.xlu0 %401
      %vm403 = vcmask 1039360
      %v404 = vsel %vm403, %v388, %v390
      %v405 = vsel %vm403, %v390, %v392
      %v406 = vsel %vm403, %v392, %v394
      %v407 = vsel %vm403, %v396, %v398
      %v408 = vsel %vm403, %v398, %v400
      %v409 = vsel %vm403, %v400, %v402
      %vm416 = vcmask 1039360
      %v418 = vsel %vm416, %v394, 0
      %v421 = vsel %vm416, %v402, 0
      %v431 = vld [vmem:[%s1] sm:$0xff]
      %v432 = vld [vmem:[%s1 + $0x8] sm:$0xff]
      %v435 = vunpack.c.l.b16 %v431
      %v436 = vunpack.c.h.b16 %v431
      %v437 = vunpack.c.l.b16 %v432
      %v438 = vunpack.c.h.b16 %v432
      %v439 = vpack.c.b16 %v437, %v435
      %v440 = vpack.c.b16 %v438, %v436
      %vm442 = vcmask 523264
      %v444 = vsel %vm442, %v440, 0
      %446 = vmatpush.bf16.msra.mxu0 %v385
      %447 = vmatpush.bf16.msra.mxu0 %v382
      %448 = vmatpush.bf16.msra.mxu0 %v349
      %449 = vmatpush.bf16.msra.mxu0 %v346
      %450 = vmatpush.bf16.msra.mxu0 %v313
      %451 = vmatpush.bf16.msra.mxu0 %v310
      %452 = vmatpush.bf16.msra.mxu0 %v277
      %453 = vmatpush.bf16.msra.mxu0 %v274
      %454 = vmatmul.bf16.gmra.mxu0 %v439
      %v455 = vpop.f32.mrf.mxu0
      %v456 = vadd.f32 0.0, %v455
      %v457 = vpop.f32.mrf.mxu0
      %v458 = vadd.f32 0.0, %v457
      %459 = vdwg.mxu0
      %460 = vmatpush.bf16.msra.mxu0 0
      %461 = vmatpush.bf16.msra.mxu0 0
      %462 = vmatpush.bf16.msra.mxu0 0
      %463 = vmatpush.bf16.msra.mxu0 0
      %464 = vmatpush.bf16.msra.mxu0 %v407
      %465 = vmatpush.bf16.msra.mxu0 %v404
      %466 = vmatpush.bf16.msra.mxu0 %v238
      %467 = vmatpush.bf16.msra.mxu0 %v234
      %468 = vmatmul.bf16.gmra.mxu0 %v444
      %v469 = vpop.f32.mrf.mxu0
      %v470 = vadd.f32 %v456, %v469
      %v471 = vpop.f32.mrf.mxu0
      %v472 = vadd.f32 %v458, %v471
      %473 = vdwg.mxu0
      %474 = vmatpush.bf16.msra.mxu0 %v371
      %475 = vmatpush.bf16.msra.mxu0 %v368
      %476 = vmatpush.bf16.msra.mxu0 %v335
      %477 = vmatpush.bf16.msra.mxu0 %v332
      %478 = vmatpush.bf16.msra.mxu0 %v299
      %479 = vmatpush.bf16.msra.mxu0 %v296
      %480 = vmatpush.bf16.msra.mxu0 %v262
      %481 = vmatpush.bf16.msra.mxu0 %v259
      %482 = vmatmul.bf16.gmra.mxu0 %v439
      %v483 = vpop.f32.mrf.mxu0
      %v484 = vadd.f32 0.0, %v483
      %v485 = vpop.f32.mrf.mxu0
      %v486 = vadd.f32 0.0, %v485
      %487 = vdwg.mxu0
      %488 = vmatpush.bf16.msra.mxu0 0
      %489 = vmatpush.bf16.msra.mxu0 0
      %490 = vmatpush.bf16.msra.mxu0 0
      %491 = vmatpush.bf16.msra.mxu0 0
      %492 = vmatpush.bf16.msra.mxu0 %v408
      %493 = vmatpush.bf16.msra.mxu0 %v405
      %494 = vmatpush.bf16.msra.mxu0 %v239
      %495 = vmatpush.bf16.msra.mxu0 %v235
      %496 = vmatmul.bf16.gmra.mxu0 %v444
      %v497 = vpop.f32.mrf.mxu0
      %v498 = vadd.f32 %v484, %v497
      %v499 = vpop.f32.mrf.mxu0
      %v500 = vadd.f32 %v486, %v499
      %501 = vdwg.mxu0
      %502 = vmatpush.bf16.msra.mxu0 %v372
      %503 = vmatpush.bf16.msra.mxu0 %v369
      %504 = vmatpush.bf16.msra.mxu0 %v336
      %505 = vmatpush.bf16.msra.mxu0 %v333
      %506 = vmatpush.bf16.msra.mxu0 %v300
      %507 = vmatpush.bf16.msra.mxu0 %v297
      %508 = vmatpush.bf16.msra.mxu0 %v263
      %509 = vmatpush.bf16.msra.mxu0 %v260
      %510 = vmatmul.bf16.gmra.mxu0 %v439
      %v511 = vpop.f32.mrf.mxu0
      %v512 = vadd.f32 0.0, %v511
      %v513 = vpop.f32.mrf.mxu0
      %v514 = vadd.f32 0.0, %v513
      %515 = vdwg.mxu0
      %516 = vmatpush.bf16.msra.mxu0 0
      %517 = vmatpush.bf16.msra.mxu0 0
      %518 = vmatpush.bf16.msra.mxu0 0
      %519 = vmatpush.bf16.msra.mxu0 0
      %520 = vmatpush.bf16.msra.mxu0 %v409
      %521 = vmatpush.bf16.msra.mxu0 %v406
      %522 = vmatpush.bf16.msra.mxu0 %v240
      %523 = vmatpush.bf16.msra.mxu0 %v236
      %524 = vmatmul.bf16.gmra.mxu0 %v444
      %v525 = vpop.f32.mrf.mxu0
      %v526 = vadd.f32 %v512, %v525
      %v527 = vpop.f32.mrf.mxu0
      %v528 = vadd.f32 %v514, %v527
      %529 = vdwg.mxu0
      %530 = vmatpush.bf16.msra.mxu0 %v373
      %531 = vmatpush.bf16.msra.mxu0 %v370
      %532 = vmatpush.bf16.msra.mxu0 %v337
      %533 = vmatpush.bf16.msra.mxu0 %v334
      %534 = vmatpush.bf16.msra.mxu0 %v301
      %535 = vmatpush.bf16.msra.mxu0 %v298
      %536 = vmatpush.bf16.msra.mxu0 %v264
      %537 = vmatpush.bf16.msra.mxu0 %v261
      %538 = vmatmul.bf16.gmra.mxu0 %v439
      %v539 = vpop.f32.mrf.mxu0
      %v540 = vadd.f32 0.0, %v539
      %v541 = vpop.f32.mrf.mxu0
      %v542 = vadd.f32 0.0, %v541
      %543 = vdwg.mxu0
      %544 = vmatpush.bf16.msra.mxu0 0
      %545 = vmatpush.bf16.msra.mxu0 0
      %546 = vmatpush.bf16.msra.mxu0 0
      %547 = vmatpush.bf16.msra.mxu0 0
      %548 = vmatpush.bf16.msra.mxu0 %v421
      %549 = vmatpush.bf16.msra.mxu0 %v418
      %550 = vmatpush.bf16.msra.mxu0 %v241
      %551 = vmatpush.bf16.msra.mxu0 %v237
      %552 = vmatmul.bf16.gmra.mxu0 %v444
      %v553 = vpop.f32.mrf.mxu0
      %v554 = vadd.f32 %v540, %v553
      %v555 = vpop.f32.mrf.mxu0
      %v556 = vadd.f32 %v542, %v555
      %557 = vdwg.mxu0
      %v558 = vld [vmem:[%s2] sm:$0xff]
      %v559 = vld [vmem:[%s2 + $0x8] sm:$0xff]
      %v561 = vperm.slane %v209, 0
      %v562 = vperm.slane %v209, 1
      %v563 = vperm.slane %v209, 2
      %v564 = vperm.slane %v209, 3
      %v569 = vmul.f32 %v470, %v561
      %v570 = vmul.f32 %v498, %v562
      %v571 = vmul.f32 %v526, %v563
      %v572 = vmul.f32 %v554, %v564
      %v573 = vmul.f32 %v472, %v561
      %v574 = vmul.f32 %v500, %v562
      %v575 = vmul.f32 %v528, %v563
      %v576 = vmul.f32 %v556, %v564
      %v577 = vadd.f32 %v569, %v570
      %v578 = vadd.f32 %v577, %v571
      %v579 = vadd.f32 %v578, %v572
      %580 = vadd.xlane.f32.xlu0 %v579
      %v581 = vpop.xlane.xlu0 %580
      %v582 = vadd.f32 %v573, %v574
      %v583 = vadd.f32 %v582, %v575
      %v584 = vadd.f32 %v583, %v576
      %585 = vadd.xlane.f32.xlu0 %v584
      %v586 = vpop.xlane.xlu0 %585
      %v587 = vmul.f32 %v581, 0.00390625
      %v588 = vmul.f32 %v586, 0.00390625
      %v589 = vmul.f32 %v569, %v569
      %v590 = vmul.f32 %v570, %v570
      %v591 = vmul.f32 %v571, %v571
      %v592 = vmul.f32 %v572, %v572
      %v593 = vmul.f32 %v573, %v573
      %v594 = vmul.f32 %v574, %v574
      %v595 = vmul.f32 %v575, %v575
      %v596 = vmul.f32 %v576, %v576
      %v597 = vadd.f32 %v589, %v590
      %v598 = vadd.f32 %v597, %v591
      %v599 = vadd.f32 %v598, %v592
      %600 = vadd.xlane.f32.xlu0 %v599
      %v601 = vpop.xlane.xlu0 %600
      %v602 = vadd.f32 %v593, %v594
      %v603 = vadd.f32 %v602, %v595
      %v604 = vadd.f32 %v603, %v596
      %605 = vadd.xlane.f32.xlu0 %v604
      %v606 = vpop.xlane.xlu0 %605
      %v607 = vmul.f32 %v601, 0.00390625
      %v608 = vmul.f32 %v606, 0.00390625
      %v609 = vmul.f32 %v587, %v587
      %v610 = vmul.f32 %v588, %v588
      %v611 = vsub.f32 %v607, %v609
      %v612 = vsub.f32 %v608, %v610
      %v613 = vmax.f32 %v611, 0.0
      %v614 = vmax.f32 %v612, 0.0
      %v615 = vadd.f32 %v613, 1e-05
      %v616 = vadd.f32 %v614, 1e-05
      %v617 = vrsqrt.pop %v615
      %v618 = vmul.f32 %v617, %v615
      %v619 = vmul.f32 %v618, %v617
      %v620 = vmul.f32 0.5, %v619
      %v621 = vsub.f32 1.5, %v620
      %v622 = vmul.f32 %v617, %v621
      %vm623 = vweird.f32 %v615
      %vm624 = vweird.f32 %v617
      %vm625 = vmor %vm623, %vm624
      %v626 = vsel %vm625, %v617, %v622
      %v627 = vrsqrt.pop %v616
      %v628 = vmul.f32 %v627, %v616
      %v629 = vmul.f32 %v628, %v627
      %v630 = vmul.f32 0.5, %v629
      %v631 = vsub.f32 1.5, %v630
      %v632 = vmul.f32 %v627, %v631
      %vm633 = vweird.f32 %v616
      %vm634 = vweird.f32 %v627
      %vm635 = vmor %vm633, %vm634
      %v636 = vsel %vm635, %v627, %v632
      %v637 = vmul.f32 %v558, %v626
      %v638 = vmul.f32 %v559, %v636
      %v639 = vmul.f32 %v587, %v637
      %v640 = vmul.f32 %v588, %v638
      %643 = vrot.lane.b32.xlu0 %v639, 1
      %v644 = vpop.permute.xlu0 %643
      %645 = vrot.lane.b32.xlu0 %v640, 1
      %v646 = vpop.permute.xlu0 %645
      %v649 = vsub.f32 %v558, %v644
      %v650 = vsub.f32 %v559, %v646
      %652 = vset.pattern.permute.xlu0 0
      %653 = vperm.xlu0 %652, %v637
      %v654 = vpop.permute.xlu0 %653
      %657 = vset.pattern.permute.xlu0 0
      %658 = vperm.xlu0 %657, %v638
      %v659 = vpop.permute.xlu0 %658
      %v661 = vmul.f32 %v470, %v654
      %v662 = vmul.f32 %v498, %v654
      %v663 = vmul.f32 %v526, %v654
      %v664 = vmul.f32 %v554, %v654
      %v665 = vmul.f32 %v472, %v659
      %v666 = vmul.f32 %v500, %v659
      %v667 = vmul.f32 %v528, %v659
      %v668 = vmul.f32 %v556, %v659
      %670 = vset.pattern.permute.xlu0 1
      %671 = vperm.xlu0 %670, %v649
      %v672 = vpop.permute.xlu0 %671
      %675 = vset.pattern.permute.xlu0 1
      %676 = vperm.xlu0 %675, %v650
      %v677 = vpop.permute.xlu0 %676
      %v679 = vadd.f32 %v661, %v672
      %v680 = vadd.f32 %v662, %v672
      %v681 = vadd.f32 %v663, %v672
      %v682 = vadd.f32 %v664, %v672
      %v683 = vadd.f32 %v665, %v677
      %v684 = vadd.f32 %v666, %v677
      %v685 = vadd.f32 %v667, %v677
      %v686 = vadd.f32 %v668, %v677
      %vm687 = vcmp.ge.f32.partialorder %v679, 0.0
      %vm688 = vcmp.ge.f32.partialorder %v680, 0.0
      %vm689 = vcmp.ge.f32.partialorder %v681, 0.0
      %vm690 = vcmp.ge.f32.partialorder %v682, 0.0
      %vm691 = vcmp.ge.f32.partialorder %v683, 0.0
      %vm692 = vcmp.ge.f32.partialorder %v684, 0.0
      %vm693 = vcmp.ge.f32.partialorder %v685, 0.0
      %vm694 = vcmp.ge.f32.partialorder %v686, 0.0
      %696 = vset.pattern.permute.xlu0 2
      %697 = vperm.xlu0 %696, %v558
      %v698 = vpop.permute.xlu0 %697
      %701 = vset.pattern.permute.xlu0 2
      %702 = vperm.xlu0 %701, %v559
      %v703 = vpop.permute.xlu0 %702
      %v705 = vmul.f32 %v698, %v679
      %v706 = vmul.f32 %v698, %v680
      %v707 = vmul.f32 %v698, %v681
      %v708 = vmul.f32 %v698, %v682
      %v709 = vmul.f32 %v703, %v683
      %v710 = vmul.f32 %v703, %v684
      %v711 = vmul.f32 %v703, %v685
      %v712 = vmul.f32 %v703, %v686
      %v713 = vsel %vm687, %v679, %v705
      %v714 = vsel %vm688, %v680, %v706
      %v715 = vsel %vm689, %v681, %v707
      %v716 = vsel %vm690, %v682, %v708
      %v717 = vsel %vm691, %v683, %v709
      %v718 = vsel %vm692, %v684, %v710
      %v719 = vsel %vm693, %v685, %v711
      %v720 = vsel %vm694, %v686, %v712
      %v721 = vmul.f32 %v713, %v561
      %v722 = vmul.f32 %v714, %v562
      %v723 = vmul.f32 %v715, %v563
      %v724 = vmul.f32 %v716, %v564
      %v725 = vmul.f32 %v717, %v561
      %v726 = vmul.f32 %v718, %v562
      %v727 = vmul.f32 %v719, %v563
      %v728 = vmul.f32 %v720, %v564
      %v729 = vpack.c.bf16 %v722, %v721
      %v730 = vpack.c.bf16 %v724, %v723
      %v731 = vpack.c.bf16 %v726, %v725
      %v732 = vpack.c.bf16 %v728, %v727
      %733 = vst [vmem:[%s199] sm:$0xff] %v729
      %734 = vst [vmem:[%s199 + $0x8] sm:$0xff] %v730
      %735 = vst [vmem:[%s199 + $0x10] sm:$0xff] %v731
      %736 = vst [vmem:[%s199 + $0x18] sm:$0xff] %v732
      %p737 = scmp.lt.s32.totalorder %s15, 1
      %s738 = scalar_select %p737, %s15, 1
      %s739 = smul.addr %s738, 32
      %s740 = sadd.s32 16, %s739
      %s741 = smul.addr %s740, 4
      %s742 = scalar_lea.vmem %s4, %s741
      // Predicated region
      $region37: #{mask_decoder_forward.5} parent=35 // pred_check
        %p743 = pneg %p122
      $region38: #{mask_decoder_forward.5} parent=35 // pred_check_branch
        %745 = sbr.rel (%p743) target = $region40
      $region39: #{mask_decoder_forward.5} parent=35 // pred_region
        _
      $region40: #{mask_decoder_forward.5} parent=35 // pred_fallthru
        _
    $region36: #{mask_decoder_forward.5} parent=5 // pred_fallthru
      _
    %p746 = scmp.le.s32.totalorder 2, %s10
    // Predicated region
    $region41: #{mask_decoder_forward.5} parent=5 // pred_check
      %p747 = pneg %p746
    $region42: #{mask_decoder_forward.5} parent=5 // pred_check_branch
      %749 = sbr.rel (%p747) target = $region44
    $region43: #{mask_decoder_forward.5} parent=5 // pred_region
      %s750 = ssub.s32 %s10, 2
      // Predicated region
      $region45: #{mask_decoder_forward.5} parent=43 // pred_check
        %p751 = pneg %p128
      $region46: #{mask_decoder_forward.5} parent=43 // pred_check_branch
        %753 = sbr.rel (%p751) target = $region48
      $region47: #{mask_decoder_forward.5} parent=43 // pred_region
        %p754 = scmp.lt.s32.totalorder %s16, 1
        %s755 = scalar_select %p754, %s16, 1
        %s756 = smul.addr %s755, 32
        %s757 = sadd.s32 16, %s756
        %s758 = smul.addr %s757, 4
        %s759 = scalar_lea.vmem %s4, %s758
      $region48: #{mask_decoder_forward.5} parent=43 // pred_fallthru
        _
    $region44: #{mask_decoder_forward.5} parent=5 // pred_fallthru
      _
  $region6: #{mask_decoder_forward.5} parent=0 // loop_footer
    %s14 = sadd.s32 1, %s10
  $region7: #{mask_decoder_forward.5} parent=0 // loop_footer_branch
    %9 = sbr.rel target = $region3
  $region8: #{mask_decoder_forward.5} parent=0 // loop_exit
    _

// kernel: mask_decoder_forward.6
$region0: #{mask_decoder_forward.6}
  #allocation0 [shape = 'u32[]', space=smem, size = 0x4, offset = 0x4, fixed_abs, tag = 'smem constant byte address 0x4 - core index']
  #allocation1 [shape = 'u32[72,128]{1,0:T(1,128)}', space=vmem, size = 0x9000, scoped, tag = 'internal scratch']
  %s0 = inlined_call_operand.vmem [shape: bf16[2,64,512], index: 0, kind: input, shape index: {}, may-alias: {0,4}]
  %s1 = inlined_call_operand.vmem [shape: bf16[16,288], index: 1, kind: input, shape index: {}]
  %s2 = inlined_call_operand.vmem [shape: f32[16,3], index: 2, kind: input, shape index: {}]
  %s3 = inlined_call_operand.vmem [shape: f32[1,512], index: 3, kind: input, shape index: {}]
  %s4 = inlined_call_operand.vmem [shape: bf16[2,64,512], index: 4, kind: output, shape index: {}, may-alias: {0,4}]
  %s5 = sld [smem:[#allocation0]]
  $region49: #{mask_decoder_forward.6} parent=0
    _
  %s7 = ssub.s32 1, %s5
  %s8 = scalar_select 0, %s7, %s5
  loop: start=0, step=1, limit=4
  $region2: #{mask_decoder_forward.6} parent=0 // loop_pre_header
    _
  $region3: #{mask_decoder_forward.6} parent=0 // loop_header
    %s10 = sphi 0, %s14
    %p11 = scmp.ge.s32.totalorder %s10, 4
    %s20 = sphi 0, %s22
    %s23 = sphi 0, %s20
    %s24 = sphi 0, %s23
    %s40 = sphi 0, %s24
    %s44 = sphi 0, %s44
    %s46 = sphi 0, %s44
    %s47 = sphi 0, %s46
    %s61 = sphi 0, %s47
    %s65 = sphi 0, %s65
    %s67 = sphi 0, %s65
    %s68 = sphi 0, %s67
    %s82 = sphi 0, %s68
    %s86 = sphi 0, %s86
    %s88 = sphi 0, %s86
    %s89 = sphi 0, %s88
    %s103 = sphi 0, %s89
    %s109 = sphi 0, %s111
    %s112 = sphi 0, %s109
    %s113 = sphi 0, %s112
    %s129 = sphi 0, %s113
  $region4: #{mask_decoder_forward.6} parent=0 // loop_header_branch
    %13 = sbr.rel (%p11) target = $region8
  $region5: #{mask_decoder_forward.6} parent=0 // loop_body
    %s15 = ssub.s32 %s10, 1
    %s16 = ssub.s32 %s10, 2
    %s17 = sadd.s32 %s10, 1
    %s18 = ssub.s32 %s10, %s17
    %p19 = scmp.eq.s32.totalorder %s18, 0
    %s21 = sadd.s32 %s20, 1
    %s22 = scalar_select %p19, %s20, %s21
    %p25 = pneg %p19
    %p26 = scmp.eq.s32.totalorder %s10, 1
    %p27 = por %p25, %p26
    %p28 = scmp.ne.s32.totalorder %s20, %s23
    %p29 = scmp.eq.s32.totalorder %s10, 0
    %p30 = por %p28, %p29
    %p31 = scmp.ne.s32.totalorder %s20, %s23
    %p32 = scmp.eq.s32.totalorder %s15, 1
    %p33 = por %p31, %p32
    %p34 = scmp.ne.s32.totalorder %s23, %s24
    %p35 = scmp.eq.s32.totalorder %s15, 0
    %p36 = por %p34, %p35
    %p37 = scmp.ne.s32.totalorder %s23, %s24
    %p38 = scmp.eq.s32.totalorder %s16, 1
    %p39 = por %p37, %p38
    %p41 = scmp.ne.s32.totalorder %s24, %s40
    %p42 = scmp.eq.s32.totalorder %s16, 0
    %p43 = por %p41, %p42
    %s45 = sadd.s32 %s44, 1
    %p48 = scmp.eq.s32.totalorder %s10, 1
    %p49 = scmp.ne.s32.totalorder %s44, %s46
    %p50 = scmp.eq.s32.totalorder %s10, 0
    %p51 = por %p49, %p50
    %p52 = scmp.ne.s32.totalorder %s44, %s46
    %p53 = scmp.eq.s32.totalorder %s15, 1
    %p54 = por %p52, %p53
    %p55 = scmp.ne.s32.totalorder %s46, %s47
    %p56 = scmp.eq.s32.totalorder %s15, 0
    %p57 = por %p55, %p56
    %p58 = scmp.ne.s32.totalorder %s46, %s47
    %p59 = scmp.eq.s32.totalorder %s16, 1
    %p60 = por %p58, %p59
    %p62 = scmp.ne.s32.totalorder %s47, %s61
    %p63 = scmp.eq.s32.totalorder %s16, 0
    %p64 = por %p62, %p63
    %s66 = sadd.s32 %s65, 1
    %p69 = scmp.eq.s32.totalorder %s10, 1
    %p70 = scmp.ne.s32.totalorder %s65, %s67
    %p71 = scmp.eq.s32.totalorder %s10, 0
    %p72 = por %p70, %p71
    %p73 = scmp.ne.s32.totalorder %s65, %s67
    %p74 = scmp.eq.s32.totalorder %s15, 1
    %p75 = por %p73, %p74
    %p76 = scmp.ne.s32.totalorder %s67, %s68
    %p77 = scmp.eq.s32.totalorder %s15, 0
    %p78 = por %p76, %p77
    %p79 = scmp.ne.s32.totalorder %s67, %s68
    %p80 = scmp.eq.s32.totalorder %s16, 1
    %p81 = por %p79, %p80
    %p83 = scmp.ne.s32.totalorder %s68, %s82
    %p84 = scmp.eq.s32.totalorder %s16, 0
    %p85 = por %p83, %p84
    %s87 = sadd.s32 %s86, 1
    %p90 = scmp.eq.s32.totalorder %s10, 1
    %p91 = scmp.ne.s32.totalorder %s86, %s88
    %p92 = scmp.eq.s32.totalorder %s10, 0
    %p93 = por %p91, %p92
    %p94 = scmp.ne.s32.totalorder %s86, %s88
    %p95 = scmp.eq.s32.totalorder %s15, 1
    %p96 = por %p94, %p95
    %p97 = scmp.ne.s32.totalorder %s88, %s89
    %p98 = scmp.eq.s32.totalorder %s15, 0
    %p99 = por %p97, %p98
    %p100 = scmp.ne.s32.totalorder %s88, %s89
    %p101 = scmp.eq.s32.totalorder %s16, 1
    %p102 = por %p100, %p101
    %p104 = scmp.ne.s32.totalorder %s89, %s103
    %p105 = scmp.eq.s32.totalorder %s16, 0
    %p106 = por %p104, %p105
    %s107 = ssub.s32 %s10, %s17
    %p108 = scmp.eq.s32.totalorder %s107, 0
    %s110 = sadd.s32 %s109, 1
    %s111 = scalar_select %p108, %s109, %s110
    %p114 = pneg %p108
    %p115 = scmp.eq.s32.totalorder %s10, 1
    %p116 = por %p114, %p115
    %p117 = scmp.ne.s32.totalorder %s109, %s112
    %p118 = scmp.eq.s32.totalorder %s10, 0
    %p119 = por %p117, %p118
    %p120 = scmp.ne.s32.totalorder %s109, %s112
    %p121 = scmp.eq.s32.totalorder %s15, 1
    %p122 = por %p120, %p121
    %p123 = scmp.ne.s32.totalorder %s112, %s113
    %p124 = scmp.eq.s32.totalorder %s15, 0
    %p125 = por %p123, %p124
    %p126 = scmp.ne.s32.totalorder %s112, %s113
    %p127 = scmp.eq.s32.totalorder %s16, 1
    %p128 = por %p126, %p127
    %p130 = scmp.ne.s32.totalorder %s113, %s129
    %p131 = scmp.eq.s32.totalorder %s16, 0
    %p132 = por %p130, %p131
    %p133 = scmp.le.s32.totalorder 1, %s10
    %p134 = scmp.lt.s32.totalorder %s10, 3
    %p135 = pnand %p133, %p134
    %p136 = pneg %p135
    // Predicated region
    $region9: #{mask_decoder_forward.6} parent=5 // pred_check
      _
    $region10: #{mask_decoder_forward.6} parent=5 // pred_check_branch
      %138 = sbr.rel (%p135) target = $region12
    $region11: #{mask_decoder_forward.6} parent=5 // pred_region
      %s139 = ssub.s32 %s10, 1
      // Predicated region
      $region13: #{mask_decoder_forward.6} parent=11 // pred_check
        %p140 = pneg %p57
      $region14: #{mask_decoder_forward.6} parent=11 // pred_check_branch
        %142 = sbr.rel (%p140) target = $region16
      $region15: #{mask_decoder_forward.6} parent=11 // pred_region
        _
      $region16: #{mask_decoder_forward.6} parent=11 // pred_fallthru
        _
      // Predicated region
      $region17: #{mask_decoder_forward.6} parent=11 // pred_check
        %p143 = pneg %p78
      $region18: #{mask_decoder_forward.6} parent=11 // pred_check_branch
        %145 = sbr.rel (%p143) target = $region20
      $region19: #{mask_decoder_forward.6} parent=11 // pred_region
        _
      $region20: #{mask_decoder_forward.6} parent=11 // pred_fallthru
        _
      // Predicated region
      $region21: #{mask_decoder_forward.6} parent=11 // pred_check
        %p146 = pneg %p99
      $region22: #{mask_decoder_forward.6} parent=11 // pred_check_branch
        %148 = sbr.rel (%p146) target = $region24
      $region23: #{mask_decoder_forward.6} parent=11 // pred_region
        _
      $region24: #{mask_decoder_forward.6} parent=11 // pred_fallthru
        _
    $region12: #{mask_decoder_forward.6} parent=5 // pred_fallthru
      _
    %p149 = scmp.lt.s32.totalorder %s10, 2
    // Predicated region
    $region25: #{mask_decoder_forward.6} parent=5 // pred_check
      %p150 = pneg %p149
    $region26: #{mask_decoder_forward.6} parent=5 // pred_check_branch
      %152 = sbr.rel (%p150) target = $region28
    $region27: #{mask_decoder_forward.6} parent=5 // pred_region
      // Predicated region
      $region29: #{mask_decoder_forward.6} parent=27 // pred_check
        %p153 = pneg %p30
      $region30: #{mask_decoder_forward.6} parent=27 // pred_check_branch
        %155 = sbr.rel (%p153) target = $region32
      $region31: #{mask_decoder_forward.6} parent=27 // pred_region
        %p156 = scmp.lt.s32.totalorder %s10, 1
        %s157 = scalar_select %p156, %s10, 1
        %s158 = smul.addr %s157, 32
        %s159 = smul.addr %s158, 4
        %s160 = scalar_lea.vmem %s0, %s159
      $region32: #{mask_decoder_forward.6} parent=27 // pred_fallthru
        _
    $region28: #{mask_decoder_forward.6} parent=5 // pred_fallthru
      _
    %p161 = scmp.le.s32.totalorder 1, %s10
    %p162 = scmp.lt.s32.totalorder %s10, 3
    %p163 = pnand %p161, %p162
    %p164 = pneg %p163
    // Predicated region
    $region33: #{mask_decoder_forward.6} parent=5 // pred_check
      _
    $region34: #{mask_decoder_forward.6} parent=5 // pred_check_branch
      %166 = sbr.rel (%p163) target = $region36
    $region35: #{mask_decoder_forward.6} parent=5 // pred_region
      %s167 = ssub.s32 %s10, 1
      %p168 = scmp.lt.s32.totalorder %s15, 1
      %s169 = scalar_select %p168, %s15, 1
      %s170 = smul.addr %s169, 32
      %s171 = smul.addr %s170, 4
      %s172 = scalar_lea.vmem %s0, %s171
      %p173 = pneg %p36
      %p174 = pneg %p33
      %p175 = pneg %p57
      %p176 = pneg %p54
      %p177 = pneg %p78
      %p178 = pneg %p75
      %p179 = pneg %p99
      %p180 = pneg %p96
      %p181 = pneg %p125
      %p182 = pneg %p122
      %p183 = scmp.lt.s32.totalorder %s15, 1
      %s184 = scalar_select %p183, %s15, 1
      %s185 = smul.addr %s184, 32
      %s186 = sadd.s32 24, %s185
      %s187 = smul.addr %s186, 4
      %s188 = scalar_lea.vmem %s4, %s187
      %p189 = scmp.lt.s32.totalorder %s15, 1
      %s190 = scalar_select %p189, %s15, 1
      %s191 = smul.addr %s190, 32
      %s192 = smul.addr %s191, 4
      %s193 = scalar_lea.vmem %s0, %s192
      %p194 = scmp.lt.s32.totalorder %s15, 1
      %s195 = scalar_select %p194, %s15, 1
      %s196 = smul.addr %s195, 32
      %s197 = sadd.s32 24, %s196
      %s198 = smul.addr %s197, 4
      %s199 = scalar_lea.vmem %s4, %s198
      %v201 = vld [vmem:[%s193] sm:$0xff]
      %v202 = vld [vmem:[%s193 + $0x8] sm:$0xff]
      %v203 = vld [vmem:[%s193 + $0x10] sm:$0xff]
      %v204 = vld [vmem:[%s193 + $0x18] sm:$0xff]
      %v205 = vld [vmem:[%s193 + $0x20] sm:$0xff]
      %v206 = vld [vmem:[%s193 + $0x28] sm:$0xff]
      %v207 = vld [vmem:[%s193 + $0x30] sm:$0xff]
      %v208 = vld [vmem:[%s193 + $0x38] sm:$0xff]
      %v209 = vld [vmem:[%s193 + $0x40] sm:$0xff]
      %v210 = vld [vmem:[%s193 + $0x48] sm:$0xff]
      %v211 = vld [vmem:[%s193 + $0x50] sm:$0xff]
      %v212 = vld [vmem:[%s193 + $0x58] sm:$0xff]
      %v213 = vld [vmem:[%s3] sm:$0xf]
      %v226 = vunpack.c.l.b16 %v201
      %v227 = vunpack.c.h.b16 %v201
      %v228 = vunpack.c.l.b16 %v202
      %v229 = vunpack.c.h.b16 %v202
      %v230 = vunpack.c.l.b16 %v203
      %v231 = vunpack.c.h.b16 %v203
      %v232 = vunpack.c.l.b16 %v204
      %v233 = vunpack.c.h.b16 %v204
      %v234 = vunpack.c.l.b16 %v205
      %v235 = vunpack.c.h.b16 %v205
      %v236 = vunpack.c.l.b16 %v206
      %v237 = vunpack.c.h.b16 %v206
      %v238 = vunpack.c.l.b16 %v207
      %v239 = vunpack.c.h.b16 %v207
      %v240 = vunpack.c.l.b16 %v208
      %v241 = vunpack.c.h.b16 %v208
      %v242 = vunpack.c.l.b16 %v209
      %v243 = vunpack.c.h.b16 %v209
      %v244 = vunpack.c.l.b16 %v210
      %v245 = vunpack.c.h.b16 %v210
      %v246 = vunpack.c.l.b16 %v211
      %v247 = vunpack.c.h.b16 %v211
      %v248 = vunpack.c.l.b16 %v212
      %v249 = vunpack.c.h.b16 %v212
      %v250 = vpack.c.b16 %v230, %v226
      %v251 = vpack.c.b16 %v231, %v227
      %v252 = vpack.c.b16 %v232, %v228
      %v253 = vpack.c.b16 %v233, %v229
      %v254 = vpack.c.b16 %v238, %v234
      %v255 = vpack.c.b16 %v239, %v235
      %v256 = vpack.c.b16 %v240, %v236
      %v257 = vpack.c.b16 %v241, %v237
      %v258 = vpack.c.b16 %v246, %v242
      %v259 = vpack.c.b16 %v247, %v243
      %v260 = vpack.c.b16 %v248, %v244
      %v261 = vpack.c.b16 %v249, %v245
      %262 = vrot.lane.b32.xlu0 %v250, 73
      %v263 = vpop.permute.xlu0 %262
      %264 = vrot.lane.b32.xlu0 %v251, 73
      %v265 = vpop.permute.xlu0 %264
      %266 = vrot.lane.b32.xlu0 %v252, 73
      %v267 = vpop.permute.xlu0 %266
      %268 = vrot.lane.b32.xlu0 %v253, 73
      %v269 = vpop.permute.xlu0 %268
      %270 = vrot.lane.b32.xlu0 %v254, 73
      %v271 = vpop.permute.xlu0 %270
      %272 = vrot.lane.b32.xlu0 %v255, 73
      %v273 = vpop.permute.xlu0 %272
      %274 = vrot.lane.b32.xlu0 %v256, 73
      %v275 = vpop.permute.xlu0 %274
      %276 = vrot.lane.b32.xlu0 %v257, 73
      %v277 = vpop.permute.xlu0 %276
      %278 = vrot.lane.b32.xlu0 %v258, 73
      %v279 = vpop.permute.xlu0 %278
      %280 = vrot.lane.b32.xlu0 %v259, 73
      %v281 = vpop.permute.xlu0 %280
      %282 = vrot.lane.b32.xlu0 %v260, 73
      %v283 = vpop.permute.xlu0 %282
      %284 = vrot.lane.b32.xlu0 %v261, 73
      %v285 = vpop.permute.xlu0 %284
      %vm286 = vcmask 596992
      %v287 = vsel %vm286, %v263, %v265
      %v288 = vsel %vm286, %v265, %v267
      %v289 = vsel %vm286, %v267, %v269
      %v290 = vsel %vm286, %v271, %v273
      %v291 = vsel %vm286, %v273, %v275
      %v292 = vsel %vm286, %v275, %v277
      %v293 = vsel %vm286, %v279, %v281
      %v294 = vsel %vm286, %v281, %v283
      %v295 = vsel %vm286, %v283, %v285
      %vm305 = vcmask 596992
      %v308 = vsel %vm305, 0, %v263
      %v311 = vsel %vm305, 0, %v271
      %v314 = vsel %vm305, 0, %v279
      %316 = vrot.lane.b32.xlu0 %v250, 72
      %v317 = vpop.permute.xlu0 %316
      %318 = vrot.lane.b32.xlu0 %v251, 72
      %v319 = vpop.permute.xlu0 %318
      %320 = vrot.lane.b32.xlu0 %v252, 72
      %v321 = vpop.permute.xlu0 %320
      %322 = vrot.lane.b32.xlu0 %v253, 72
      %v323 = vpop.permute.xlu0 %322
      %324 = vrot.lane.b32.xlu0 %v254, 72
      %v325 = vpop.permute.xlu0 %324
      %326 = vrot.lane.b32.xlu0 %v255, 72
      %v327 = vpop.permute.xlu0 %326
      %328 = vrot.lane.b32.xlu0 %v256, 72
      %v329 = vpop.permute.xlu0 %328
      %330 = vrot.lane.b32.xlu0 %v257, 72
      %v331 = vpop.permute.xlu0 %330
      %332 = vrot.lane.b32.xlu0 %v258, 72
      %v333 = vpop.permute.xlu0 %332
      %334 = vrot.lane.b32.xlu0 %v259, 72
      %v335 = vpop.permute.xlu0 %334
      %336 = vrot.lane.b32.xlu0 %v260, 72
      %v337 = vpop.permute.xlu0 %336
      %338 = vrot.lane.b32.xlu0 %v261, 72
      %v339 = vpop.permute.xlu0 %338
      %vm340 = vcmask 588800
      %v341 = vsel %vm340, %v317, %v319
      %v342 = vsel %vm340, %v319, %v321
      %v343 = vsel %vm340, %v321, %v323
      %v344 = vsel %vm340, %v325, %v327
      %v345 = vsel %vm340, %v327, %v329
      %v346 = vsel %vm340, %v329, %v331
      %v347 = vsel %vm340, %v333, %v335
      %v348 = vsel %vm340, %v335, %v337
      %v349 = vsel %vm340, %v337, %v339
      %vm359 = vcmask 588800
      %v361 = vsel %vm359, 0, %v317
      %v364 = vsel %vm359, 0, %v325
      %v367 = vsel %vm359, 0, %v333
      %369 = vrot.lane.b32.xlu0 %v250, 71
      %v370 = vpop.permute.xlu0 %369
      %371 = vrot.lane.b32.xlu0 %v251, 71
      %v372 = vpop.permute.xlu0 %371
      %373 = vrot.lane.b32.xlu0 %v252, 71
      %v374 = vpop.permute.xlu0 %373
      %375 = vrot.lane.b32.xlu0 %v253, 71
      %v376 = vpop.permute.xlu0 %375
      %377 = vrot.lane.b32.xlu0 %v254, 71
      %v378 = vpop.permute.xlu0 %377
      %379 = vrot.lane.b32.xlu0 %v255, 71
      %v380 = vpop.permute.xlu0 %379
      %381 = vrot.lane.b32.xlu0 %v256, 71
      %v382 = vpop.permute.xlu0 %381
      %383 = vrot.lane.b32.xlu0 %v257, 71
      %v384 = vpop.permute.xlu0 %383
      %385 = vrot.lane.b32.xlu0 %v258, 71
      %v386 = vpop.permute.xlu0 %385
      %387 = vrot.lane.b32.xlu0 %v259, 71
      %v388 = vpop.permute.xlu0 %387
      %389 = vrot.lane.b32.xlu0 %v260, 71
      %v390 = vpop.permute.xlu0 %389
      %391 = vrot.lane.b32.xlu0 %v261, 71
      %v392 = vpop.permute.xlu0 %391
      %vm393 = vcmask 580608
      %v394 = vsel %vm393, %v370, %v372
      %v395 = vsel %vm393, %v372, %v374
      %v396 = vsel %vm393, %v374, %v376
      %v397 = vsel %vm393, %v378, %v380
      %v398 = vsel %vm393, %v380, %v382
      %v399 = vsel %vm393, %v382, %v384
      %v400 = vsel %vm393, %v386, %v388
      %v401 = vsel %vm393, %v388, %v390
      %v402 = vsel %vm393, %v390, %v392
      %vm412 = vcmask 580608
      %v414 = vsel %vm412, 0, %v370
      %v417 = vsel %vm412, 0, %v378
      %v420 = vsel %vm412, 0, %v386
      %422 = vrot.lane.b32.xlu0 %v250, 1
      %v423 = vpop.permute.xlu0 %422
      %424 = vrot.lane.b32.xlu0 %v251, 1
      %v425 = vpop.permute.xlu0 %424
      %426 = vrot.lane.b32.xlu0 %v252, 1
      %v427 = vpop.permute.xlu0 %426
      %428 = vrot.lane.b32.xlu0 %v253, 1
      %v429 = vpop.permute.xlu0 %428
      %430 = vrot.lane.b32.xlu0 %v254, 1
      %v431 = vpop.permute.xlu0 %430
      %432 = vrot.lane.b32.xlu0 %v255, 1
      %v433 = vpop.permute.xlu0 %432
      %434 = vrot.lane.b32.xlu0 %v256, 1
      %v435 = vpop.permute.xlu0 %434
      %436 = vrot.lane.b32.xlu0 %v257, 1
      %v437 = vpop.permute.xlu0 %436
      %438 = vrot.lane.b32.xlu0 %v258, 1
      %v439 = vpop.permute.xlu0 %438
      %440 = vrot.lane.b32.xlu0 %v259, 1
      %v441 = vpop.permute.xlu0 %440
      %442 = vrot.lane.b32.xlu0 %v260, 1
      %v443 = vpop.permute.xlu0 %442
      %444 = vrot.lane.b32.xlu0 %v261, 1
      %v445 = vpop.permute.xlu0 %444
      %vm446 = vcmask 7168
      %v447 = vsel %vm446, %v423, %v425
      %v448 = vsel %vm446, %v425, %v427
      %v449 = vsel %vm446, %v427, %v429
      %v450 = vsel %vm446, %v431, %v433
      %v451 = vsel %vm446, %v433, %v435
      %v452 = vsel %vm446, %v435, %v437
      %v453 = vsel %vm446, %v439, %v441
      %v454 = vsel %vm446, %v441, %v443
      %v455 = vsel %vm446, %v443, %v445
      %vm465 = vcmask 7168
      %v467 = vsel %vm465, 0, %v423
      %v470 = vsel %vm465, 0, %v431
      %v473 = vsel %vm465, 0, %v439
      %475 = vrot.lane.b32.xlu0 %v250, 127
      %v476 = vpop.permute.xlu0 %475
      %477 = vrot.lane.b32.xlu0 %v251, 127
      %v478 = vpop.permute.xlu0 %477
      %479 = vrot.lane.b32.xlu0 %v252, 127
      %v480 = vpop.permute.xlu0 %479
      %481 = vrot.lane.b32.xlu0 %v253, 127
      %v482 = vpop.permute.xlu0 %481
      %483 = vrot.lane.b32.xlu0 %v254, 127
      %v484 = vpop.permute.xlu0 %483
      %485 = vrot.lane.b32.xlu0 %v255, 127
      %v486 = vpop.permute.xlu0 %485
      %487 = vrot.lane.b32.xlu0 %v256, 127
      %v488 = vpop.permute.xlu0 %487
      %489 = vrot.lane.b32.xlu0 %v257, 127
      %v490 = vpop.permute.xlu0 %489
      %491 = vrot.lane.b32.xlu0 %v258, 127
      %v492 = vpop.permute.xlu0 %491
      %493 = vrot.lane.b32.xlu0 %v259, 127
      %v494 = vpop.permute.xlu0 %493
      %495 = vrot.lane.b32.xlu0 %v260, 127
      %v496 = vpop.permute.xlu0 %495
      %497 = vrot.lane.b32.xlu0 %v261, 127
      %v498 = vpop.permute.xlu0 %497
      %vm499 = vcmask 1039360
      %v500 = vsel %vm499, %v476, %v478
      %v501 = vsel %vm499, %v478, %v480
      %v502 = vsel %vm499, %v480, %v482
      %v503 = vsel %vm499, %v484, %v486
      %v504 = vsel %vm499, %v486, %v488
      %v505 = vsel %vm499, %v488, %v490
      %v506 = vsel %vm499, %v492, %v494
      %v507 = vsel %vm499, %v494, %v496
      %v508 = vsel %vm499, %v496, %v498
      %vm518 = vcmask 1039360
      %v520 = vsel %vm518, %v482, 0
      %v523 = vsel %vm518, %v490, 0
      %v526 = vsel %vm518, %v498, 0
      %v540 = vld [vmem:[%s1] sm:$0xff]
      %v541 = vld [vmem:[%s1 + $0x8] sm:$0xf]
      %v542 = vld [vmem:[%s1 + $0xc] sm:$0xff]
      %v543 = vld [vmem:[%s1 + $0x14] sm:$0xf]
      %v548 = vunpack.c.l.b16 %v540
      %v549 = vunpack.c.h.b16 %v540
      %v550 = vunpack.c.l.b16 %v541
      %v551 = vunpack.c.l.b16 %v542
      %v552 = vunpack.c.h.b16 %v542
      %v553 = vunpack.c.l.b16 %v543
      %v554 = vpack.c.b16 %v551, %v548
      %v555 = vpack.c.b16 %v552, %v549
      %v556 = vpack.c.b16 %v553, %v550
      %vm559 = vcmask 261120
      %v561 = vsel %vm559, %v556, 0
      %563 = vmatpush.bf16.msra.mxu0 %v417
      %564 = vmatpush.bf16.msra.mxu0 %v414
      %565 = vmatpush.bf16.msra.mxu0 %v367
      %566 = vmatpush.bf16.msra.mxu0 %v364
      %567 = vmatpush.bf16.msra.mxu0 %v361
      %568 = vmatpush.bf16.msra.mxu0 %v314
      %569 = vmatpush.bf16.msra.mxu0 %v311
      %570 = vmatpush.bf16.msra.mxu0 %v308
      %571 = vmatmul.bf16.gmra.mxu0 %v554
      %v572 = vpop.f32.mrf.mxu0
      %v573 = vadd.f32 0.0, %v572
      %v574 = vpop.f32.mrf.mxu0
      %v575 = vadd.f32 0.0, %v574
      %576 = vdwg.mxu0
      %577 = vmatpush.bf16.msra.mxu0 %v500
      %578 = vmatpush.bf16.msra.mxu0 %v258
      %579 = vmatpush.bf16.msra.mxu0 %v254
      %580 = vmatpush.bf16.msra.mxu0 %v250
      %581 = vmatpush.bf16.msra.mxu0 %v473
      %582 = vmatpush.bf16.msra.mxu0 %v470
      %583 = vmatpush.bf16.msra.mxu0 %v467
      %584 = vmatpush.bf16.msra.mxu0 %v420
      %585 = vmatmul.bf16.gmra.mxu0 %v555
      %v586 = vpop.f32.mrf.mxu0
      %v587 = vadd.f32 %v573, %v586
      %v588 = vpop.f32.mrf.mxu0
      %v589 = vadd.f32 %v575, %v588
      %590 = vdwg.mxu0
      %591 = vmatpush.bf16.msra.mxu0 0
      %592 = vmatpush.bf16.msra.mxu0 0
      %593 = vmatpush.bf16.msra.mxu0 0
      %594 = vmatpush.bf16.msra.mxu0 0
      %595 = vmatpush.bf16.msra.mxu0 0
      %596 = vmatpush.bf16.msra.mxu0 0
      %597 = vmatpush.bf16.msra.mxu0 %v506
      %598 = vmatpush.bf16.msra.mxu0 %v503
      %599 = vmatmul.bf16.gmra.mxu0 %v561
      %v600 = vpop.f32.mrf.mxu0
      %v601 = vadd.f32 %v587, %v600
      %v602 = vpop.f32.mrf.mxu0
      %v603 = vadd.f32 %v589, %v602
      %604 = vdwg.mxu0
      %605 = vmatpush.bf16.msra.mxu0 %v397
      %606 = vmatpush.bf16.msra.mxu0 %v394
      %607 = vmatpush.bf16.msra.mxu0 %v347
      %608 = vmatpush.bf16.msra.mxu0 %v344
      %609 = vmatpush.bf16.msra.mxu0 %v341
      %610 = vmatpush.bf16.msra.mxu0 %v293
      %611 = vmatpush.bf16.msra.mxu0 %v290
      %612 = vmatpush.bf16.msra.mxu0 %v287
      %613 = vmatmul.bf16.gmra.mxu0 %v554
      %v614 = vpop.f32.mrf.mxu0
      %v615 = vadd.f32 0.0, %v614
      %v616 = vpop.f32.mrf.mxu0
      %v617 = vadd.f32 0.0, %v616
      %618 = vdwg.mxu0
      %619 = vmatpush.bf16.msra.mxu0 %v501
      %620 = vmatpush.bf16.msra.mxu0 %v259
      %621 = vmatpush.bf16.msra.mxu0 %v255
      %622 = vmatpush.bf16.msra.mxu0 %v251
      %623 = vmatpush.bf16.msra.mxu0 %v453
      %624 = vmatpush.bf16.msra.mxu0 %v450
      %625 = vmatpush.bf16.msra.mxu0 %v447
      %626 = vmatpush.bf16.msra.mxu0 %v400
      %627 = vmatmul.bf16.gmra.mxu0 %v555
      %v628 = vpop.f32.mrf.mxu0
      %v629 = vadd.f32 %v615, %v628
      %v630 = vpop.f32.mrf.mxu0
      %v631 = vadd.f32 %v617, %v630
      %632 = vdwg.mxu0
      %633 = vmatpush.bf16.msra.mxu0 0
      %634 = vmatpush.bf16.msra.mxu0 0
      %635 = vmatpush.bf16.msra.mxu0 0
      %636 = vmatpush.bf16.msra.mxu0 0
      %637 = vmatpush.bf16.msra.mxu0 0
      %638 = vmatpush.bf16.msra.mxu0 0
      %639 = vmatpush.bf16.msra.mxu0 %v507
      %640 = vmatpush.bf16.msra.mxu0 %v504
      %641 = vmatmul.bf16.gmra.mxu0 %v561
      %v642 = vpop.f32.mrf.mxu0
      %v643 = vadd.f32 %v629, %v642
      %v644 = vpop.f32.mrf.mxu0
      %v645 = vadd.f32 %v631, %v644
      %646 = vdwg.mxu0
      %647 = vmatpush.bf16.msra.mxu0 %v398
      %648 = vmatpush.bf16.msra.mxu0 %v395
      %649 = vmatpush.bf16.msra.mxu0 %v348
      %650 = vmatpush.bf16.msra.mxu0 %v345
      %651 = vmatpush.bf16.msra.mxu0 %v342
      %652 = vmatpush.bf16.msra.mxu0 %v294
      %653 = vmatpush.bf16.msra.mxu0 %v291
      %654 = vmatpush.bf16.msra.mxu0 %v288
      %655 = vmatmul.bf16.gmra.mxu0 %v554
      %v656 = vpop.f32.mrf.mxu0
      %v657 = vadd.f32 0.0, %v656
      %v658 = vpop.f32.mrf.mxu0
      %v659 = vadd.f32 0.0, %v658
      %660 = vdwg.mxu0
      %661 = vmatpush.bf16.msra.mxu0 %v502
      %662 = vmatpush.bf16.msra.mxu0 %v260
      %663 = vmatpush.bf16.msra.mxu0 %v256
      %664 = vmatpush.bf16.msra.mxu0 %v252
      %665 = vmatpush.bf16.msra.mxu0 %v454
      %666 = vmatpush.bf16.msra.mxu0 %v451
      %667 = vmatpush.bf16.msra.mxu0 %v448
      %668 = vmatpush.bf16.msra.mxu0 %v401
      %669 = vmatmul.bf16.gmra.mxu0 %v555
      %v670 = vpop.f32.mrf.mxu0
      %v671 = vadd.f32 %v657, %v670
      %v672 = vpop.f32.mrf.mxu0
      %v673 = vadd.f32 %v659, %v672
      %674 = vdwg.mxu0
      %675 = vmatpush.bf16.msra.mxu0 0
      %676 = vmatpush.bf16.msra.mxu0 0
      %677 = vmatpush.bf16.msra.mxu0 0
      %678 = vmatpush.bf16.msra.mxu0 0
      %679 = vmatpush.bf16.msra.mxu0 0
      %680 = vmatpush.bf16.msra.mxu0 0
      %681 = vmatpush.bf16.msra.mxu0 %v508
      %682 = vmatpush.bf16.msra.mxu0 %v505
      %683 = vmatmul.bf16.gmra.mxu0 %v561
      %v684 = vpop.f32.mrf.mxu0
      %v685 = vadd.f32 %v671, %v684
      %v686 = vpop.f32.mrf.mxu0
      %v687 = vadd.f32 %v673, %v686
      %688 = vdwg.mxu0
      %689 = vmatpush.bf16.msra.mxu0 %v399
      %690 = vmatpush.bf16.msra.mxu0 %v396
      %691 = vmatpush.bf16.msra.mxu0 %v349
      %692 = vmatpush.bf16.msra.mxu0 %v346
      %693 = vmatpush.bf16.msra.mxu0 %v343
      %694 = vmatpush.bf16.msra.mxu0 %v295
      %695 = vmatpush.bf16.msra.mxu0 %v292
      %696 = vmatpush.bf16.msra.mxu0 %v289
      %697 = vmatmul.bf16.gmra.mxu0 %v554
      %v698 = vpop.f32.mrf.mxu0
      %v699 = vadd.f32 0.0, %v698
      %v700 = vpop.f32.mrf.mxu0
      %v701 = vadd.f32 0.0, %v700
      %702 = vdwg.mxu0
      %703 = vmatpush.bf16.msra.mxu0 %v520
      %704 = vmatpush.bf16.msra.mxu0 %v261
      %705 = vmatpush.bf16.msra.mxu0 %v257
      %706 = vmatpush.bf16.msra.mxu0 %v253
      %707 = vmatpush.bf16.msra.mxu0 %v455
      %708 = vmatpush.bf16.msra.mxu0 %v452
      %709 = vmatpush.bf16.msra.mxu0 %v449
      %710 = vmatpush.bf16.msra.mxu0 %v402
      %711 = vmatmul.bf16.gmra.mxu0 %v555
      %v712 = vpop.f32.mrf.mxu0
      %v713 = vadd.f32 %v699, %v712
      %v714 = vpop.f32.mrf.mxu0
      %v715 = vadd.f32 %v701, %v714
      %716 = vdwg.mxu0
      %717 = vmatpush.bf16.msra.mxu0 0
      %718 = vmatpush.bf16.msra.mxu0 0
      %719 = vmatpush.bf16.msra.mxu0 0
      %720 = vmatpush.bf16.msra.mxu0 0
      %721 = vmatpush.bf16.msra.mxu0 0
      %722 = vmatpush.bf16.msra.mxu0 0
      %723 = vmatpush.bf16.msra.mxu0 %v526
      %724 = vmatpush.bf16.msra.mxu0 %v523
      %725 = vmatmul.bf16.gmra.mxu0 %v561
      %v726 = vpop.f32.mrf.mxu0
      %v727 = vadd.f32 %v713, %v726
      %v728 = vpop.f32.mrf.mxu0
      %v729 = vadd.f32 %v715, %v728
      %730 = vdwg.mxu0
      %v731 = vld [vmem:[%s2] sm:$0xff]
      %v732 = vld [vmem:[%s2 + $0x8] sm:$0xff]
      %v734 = vperm.slane %v213, 0
      %v735 = vperm.slane %v213, 1
      %v736 = vperm.slane %v213, 2
      %v737 = vperm.slane %v213, 3
      %v742 = vmul.f32 %v601, %v734
      %v743 = vmul.f32 %v643, %v735
      %v744 = vmul.f32 %v685, %v736
      %v745 = vmul.f32 %v727, %v737
      %v746 = vmul.f32 %v603, %v734
      %v747 = vmul.f32 %v645, %v735
      %v748 = vmul.f32 %v687, %v736
      %v749 = vmul.f32 %v729, %v737
      %v750 = vadd.f32 %v742, %v743
      %v751 = vadd.f32 %v750, %v744
      %v752 = vadd.f32 %v751, %v745
      %753 = vadd.xlane.f32.xlu0 %v752
      %v754 = vpop.xlane.xlu0 %753
      %v755 = vadd.f32 %v746, %v747
      %v756 = vadd.f32 %v755, %v748
      %v757 = vadd.f32 %v756, %v749
      %758 = vadd.xlane.f32.xlu0 %v757
      %v759 = vpop.xlane.xlu0 %758
      %v760 = vmul.f32 %v754, 0.00390625
      %v761 = vmul.f32 %v759, 0.00390625
      %v762 = vmul.f32 %v742, %v742
      %v763 = vmul.f32 %v743, %v743
      %v764 = vmul.f32 %v744, %v744
      %v765 = vmul.f32 %v745, %v745
      %v766 = vmul.f32 %v746, %v746
      %v767 = vmul.f32 %v747, %v747
      %v768 = vmul.f32 %v748, %v748
      %v769 = vmul.f32 %v749, %v749
      %v770 = vadd.f32 %v762, %v763
      %v771 = vadd.f32 %v770, %v764
      %v772 = vadd.f32 %v771, %v765
      %773 = vadd.xlane.f32.xlu0 %v772
      %v774 = vpop.xlane.xlu0 %773
      %v775 = vadd.f32 %v766, %v767
      %v776 = vadd.f32 %v775, %v768
      %v777 = vadd.f32 %v776, %v769
      %778 = vadd.xlane.f32.xlu0 %v777
      %v779 = vpop.xlane.xlu0 %778
      %v780 = vmul.f32 %v774, 0.00390625
      %v781 = vmul.f32 %v779, 0.00390625
      %v782 = vmul.f32 %v760, %v760
      %v783 = vmul.f32 %v761, %v761
      %v784 = vsub.f32 %v780, %v782
      %v785 = vsub.f32 %v781, %v783
      %v786 = vmax.f32 %v784, 0.0
      %v787 = vmax.f32 %v785, 0.0
      %v788 = vadd.f32 %v786, 1e-05
      %v789 = vadd.f32 %v787, 1e-05
      %v790 = vrsqrt.pop %v788
      %v791 = vmul.f32 %v790, %v788
      %v792 = vmul.f32 %v791, %v790
      %v793 = vmul.f32 0.5, %v792
      %v794 = vsub.f32 1.5, %v793
      %v795 = vmul.f32 %v790, %v794
      %vm796 = vweird.f32 %v788
      %vm797 = vweird.f32 %v790
      %vm798 = vmor %vm796, %vm797
      %v799 = vsel %vm798, %v790, %v795
      %v800 = vrsqrt.pop %v789
      %v801 = vmul.f32 %v800, %v789
      %v802 = vmul.f32 %v801, %v800
      %v803 = vmul.f32 0.5, %v802
      %v804 = vsub.f32 1.5, %v803
      %v805 = vmul.f32 %v800, %v804
      %vm806 = vweird.f32 %v789
      %vm807 = vweird.f32 %v800
      %vm808 = vmor %vm806, %vm807
      %v809 = vsel %vm808, %v800, %v805
      %v810 = vmul.f32 %v731, %v799
      %v811 = vmul.f32 %v732, %v809
      %v812 = vmul.f32 %v760, %v810
      %v813 = vmul.f32 %v761, %v811
      %816 = vrot.lane.b32.xlu0 %v812, 1
      %v817 = vpop.permute.xlu0 %816
      %818 = vrot.lane.b32.xlu0 %v813, 1
      %v819 = vpop.permute.xlu0 %818
      %v822 = vsub.f32 %v731, %v817
      %v823 = vsub.f32 %v732, %v819
      %825 = vset.pattern.permute.xlu0 0
      %826 = vperm.xlu0 %825, %v810
      %v827 = vpop.permute.xlu0 %826
      %830 = vset.pattern.permute.xlu0 0
      %831 = vperm.xlu0 %830, %v811
      %v832 = vpop.permute.xlu0 %831
      %v834 = vmul.f32 %v601, %v827
      %v835 = vmul.f32 %v643, %v827
      %v836 = vmul.f32 %v685, %v827
      %v837 = vmul.f32 %v727, %v827
      %v838 = vmul.f32 %v603, %v832
      %v839 = vmul.f32 %v645, %v832
      %v840 = vmul.f32 %v687, %v832
      %v841 = vmul.f32 %v729, %v832
      %843 = vset.pattern.permute.xlu0 1
      %844 = vperm.xlu0 %843, %v822
      %v845 = vpop.permute.xlu0 %844
      %848 = vset.pattern.permute.xlu0 1
      %849 = vperm.xlu0 %848, %v823
      %v850 = vpop.permute.xlu0 %849
      %v852 = vadd.f32 %v834, %v845
      %v853 = vadd.f32 %v835, %v845
      %v854 = vadd.f32 %v836, %v845
      %v855 = vadd.f32 %v837, %v845
      %v856 = vadd.f32 %v838, %v850
      %v857 = vadd.f32 %v839, %v850
      %v858 = vadd.f32 %v840, %v850
      %v859 = vadd.f32 %v841, %v850
      %vm860 = vcmp.ge.f32.partialorder %v852, 0.0
      %vm861 = vcmp.ge.f32.partialorder %v853, 0.0
      %vm862 = vcmp.ge.f32.partialorder %v854, 0.0
      %vm863 = vcmp.ge.f32.partialorder %v855, 0.0
      %vm864 = vcmp.ge.f32.partialorder %v856, 0.0
      %vm865 = vcmp.ge.f32.partialorder %v857, 0.0
      %vm866 = vcmp.ge.f32.partialorder %v858, 0.0
      %vm867 = vcmp.ge.f32.partialorder %v859, 0.0
      %869 = vset.pattern.permute.xlu0 2
      %870 = vperm.xlu0 %869, %v731
      %v871 = vpop.permute.xlu0 %870
      %874 = vset.pattern.permute.xlu0 2
      %875 = vperm.xlu0 %874, %v732
      %v876 = vpop.permute.xlu0 %875
      %v878 = vmul.f32 %v871, %v852
      %v879 = vmul.f32 %v871, %v853
      %v880 = vmul.f32 %v871, %v854
      %v881 = vmul.f32 %v871, %v855
      %v882 = vmul.f32 %v876, %v856
      %v883 = vmul.f32 %v876, %v857
      %v884 = vmul.f32 %v876, %v858
      %v885 = vmul.f32 %v876, %v859
      %v886 = vsel %vm860, %v852, %v878
      %v887 = vsel %vm861, %v853, %v879
      %v888 = vsel %vm862, %v854, %v880
      %v889 = vsel %vm863, %v855, %v881
      %v890 = vsel %vm864, %v856, %v882
      %v891 = vsel %vm865, %v857, %v883
      %v892 = vsel %vm866, %v858, %v884
      %v893 = vsel %vm867, %v859, %v885
      %v894 = vmul.f32 %v886, %v734
      %v895 = vmul.f32 %v887, %v735
      %v896 = vmul.f32 %v888, %v736
      %v897 = vmul.f32 %v889, %v737
      %v898 = vmul.f32 %v890, %v734
      %v899 = vmul.f32 %v891, %v735
      %v900 = vmul.f32 %v892, %v736
      %v901 = vmul.f32 %v893, %v737
      %v902 = vpack.c.bf16 %v895, %v894
      %v903 = vpack.c.bf16 %v897, %v896
      %v904 = vpack.c.bf16 %v899, %v898
      %v905 = vpack.c.bf16 %v901, %v900
      %906 = vst [vmem:[%s199] sm:$0xff] %v902
      %907 = vst [vmem:[%s199 + $0x8] sm:$0xff] %v903
      %908 = vst [vmem:[%s199 + $0x10] sm:$0xff] %v904
      %909 = vst [vmem:[%s199 + $0x18] sm:$0xff] %v905
      %p910 = scmp.lt.s32.totalorder %s15, 1
      %s911 = scalar_select %p910, %s15, 1
      %s912 = smul.addr %s911, 32
      %s913 = sadd.s32 24, %s912
      %s914 = smul.addr %s913, 4
      %s915 = scalar_lea.vmem %s4, %s914
      // Predicated region
      $region37: #{mask_decoder_forward.6} parent=35 // pred_check
        %p916 = pneg %p122
      $region38: #{mask_decoder_forward.6} parent=35 // pred_check_branch
        %918 = sbr.rel (%p916) target = $region40
      $region39: #{mask_decoder_forward.6} parent=35 // pred_region
        _
      $region40: #{mask_decoder_forward.6} parent=35 // pred_fallthru
        _
    $region36: #{mask_decoder_forward.6} parent=5 // pred_fallthru
      _
    %p919 = scmp.le.s32.totalorder 2, %s10
    // Predicated region
    $region41: #{mask_decoder_forward.6} parent=5 // pred_check
      %p920 = pneg %p919
    $region42: #{mask_decoder_forward.6} parent=5 // pred_check_branch
      %922 = sbr.rel (%p920) target = $region44
    $region43: #{mask_decoder_forward.6} parent=5 // pred_region
      %s923 = ssub.s32 %s10, 2
      // Predicated region
      $region45: #{mask_decoder_forward.6} parent=43 // pred_check
        %p924 = pneg %p128
      $region46: #{mask_decoder_forward.6} parent=43 // pred_check_branch
        %926 = sbr.rel (%p924) target = $region48
      $region47: #{mask_decoder_forward.6} parent=43 // pred_region
        %p927 = scmp.lt.s32.totalorder %s16, 1
        %s928 = scalar_select %p927, %s16, 1
        %s929 = smul.addr %s928, 32
        %s930 = sadd.s32 24, %s929
        %s931 = smul.addr %s930, 4
        %s932 = scalar_lea.vmem %s4, %s931
      $region48: #{mask_decoder_forward.6} parent=43 // pred_fallthru
        _
    $region44: #{mask_decoder_forward.6} parent=5 // pred_fallthru
      _
  $region6: #{mask_decoder_forward.6} parent=0 // loop_footer
    %s14 = sadd.s32 1, %s10
  $region7: #{mask_decoder_forward.6} parent=0 // loop_footer_branch
    %9 = sbr.rel target = $region3
  $region8: #{mask_decoder_forward.6} parent=0 // loop_exit
    _

// kernel: squeeze.3
$region0: #{squeeze.3}
  %s0 = inlined_call_operand.vmem [shape: f32[2,432], index: 0, kind: input, shape index: {}]
  %s1 = inlined_call_operand.vmem [shape: f32[2,24,18], index: 1, kind: output, shape index: {}]
  $region1: #{squeeze.3} parent=0
    #allocation0 [shape = 'u8[16384]{0}', space=vmem, size = 0x4000, scoped, tag = 'scoped mem for input reshape']
    %s3 = ssub.s32 4, 1
    %s4 = scalar_lea.vmem %s0, 6
    %v5 = vld [vmem:[%s4] sm:%s3]
    %s6 = scalar_lea.vmem [#allocation0], 24
    %7 = vst [vmem:[%s6] sm:%s3] %v5
    %s8 = scalar_lea.vmem %s0, 4
    %v9 = vld [vmem:[%s8] sm:%s3]
    %s10 = scalar_lea.vmem [#allocation0], 16
    %11 = vst [vmem:[%s10] sm:%s3] %v9
    %s12 = scalar_lea.vmem %s0, 2
    %v13 = vld [vmem:[%s12] sm:%s3]
    %s14 = scalar_lea.vmem [#allocation0], 8
    %15 = vst [vmem:[%s14] sm:%s3] %v13
    %v16 = vld [vmem:[%s0] sm:%s3]
    %17 = vst [vmem:[#allocation0] sm:%s3] %v16
    %v18 = vld [vmem:[#allocation0] sm:$0x3]
    %vm19 = vcmask 146432
    %20 = vst.msk [vmem:[%s1] ss:$24 sm:$0x3] %vm19, %v18
    %s21 = scalar_lea.vmem [#allocation0], 25
    %s22 = smov 3
    %v23 = vld [vmem:[%s21] ss:$-1 sm:%s22]
    %24 = vrot.lane.b32.xlu0 %v23, 116
    %v25 = vpop.permute.xlu0 %24
    %vm26 = vcmask 146432
    %s27 = scalar_lea.vmem %s1, 46
    %28 = vst.msk [vmem:[%s27] ss:$-24 sm:$0x3] %vm26, %v25
    %s29 = scalar_lea.vmem [#allocation0], 17
    %s30 = smov 3
    %v31 = vld [vmem:[%s29] ss:$-1 sm:%s30]
    %32 = vrot.lane.b32.xlu0 %v31, 114
    %v33 = vpop.permute.xlu0 %32
    %vm34 = vcmask 146432
    %s35 = scalar_lea.vmem %s1, 39
    %36 = vst.msk [vmem:[%s35] ss:$-24 sm:$0x3] %vm34, %v33
    %s37 = scalar_lea.vmem [#allocation0], 9
    %s38 = smov 3
    %v39 = vld [vmem:[%s37] ss:$-1 sm:%s38]
    %40 = vrot.lane.b32.xlu0 %v39, 112
    %v41 = vpop.permute.xlu0 %40
    %vm42 = vcmask 146432
    %s43 = scalar_lea.vmem %s1, 32
    %44 = vst.msk [vmem:[%s43] ss:$-24 sm:$0x3] %vm42, %v41
    %v45 = vld [vmem:[#allocation0] sm:$0x3]
    %46 = vrot.lane.b32.xlu0 %v45, 110
    %v47 = vpop.permute.xlu0 %46
    %vm48 = vcmask 146432
    %s49 = scalar_lea.vmem %s1, 1
    %50 = vst.msk [vmem:[%s49] ss:$24 sm:$0x3] %vm48, %v47
    %s51 = scalar_lea.vmem [#allocation0], 25
    %s52 = smov 3
    %v53 = vld [vmem:[%s51] ss:$-1 sm:%s52]
    %54 = vrot.lane.b32.xlu0 %v53, 98
    %v55 = vpop.permute.xlu0 %54
    %vm56 = vcmask 146432
    %s57 = scalar_lea.vmem %s1, 47
    %58 = vst.msk [vmem:[%s57] ss:$-24 sm:$0x3] %vm56, %v55
    %s59 = scalar_lea.vmem [#allocation0], 17
    %s60 = smov 3
    %v61 = vld [vmem:[%s59] ss:$-1 sm:%s60]
    %62 = vrot.lane.b32.xlu0 %v61, 96
    %v63 = vpop.permute.xlu0 %62
    %vm64 = vcmask 146432
    %s65 = scalar_lea.vmem %s1, 40
    %66 = vst.msk [vmem:[%s65] ss:$-24 sm:$0x3] %vm64, %v63
    %s67 = scalar_lea.vmem [#allocation0], 9
    %s68 = smov 3
    %v69 = vld [vmem:[%s67] ss:$-1 sm:%s68]
    %70 = vrot.lane.b32.xlu0 %v69, 94
    %v71 = vpop.permute.xlu0 %70
    %vm72 = vcmask 146432
    %s73 = scalar_lea.vmem %s1, 33
    %74 = vst.msk [vmem:[%s73] ss:$-24 sm:$0x3] %vm72, %v71
    %v75 = vld [vmem:[#allocation0] sm:$0x3]
    %76 = vrot.lane.b32.xlu0 %v75, 92
    %v77 = vpop.permute.xlu0 %76
    %vm78 = vcmask 146432
    %s79 = scalar_lea.vmem %s1, 2
    %80 = vst.msk [vmem:[%s79] ss:$24 sm:$0x3] %vm78, %v77
    %s81 = scalar_lea.vmem [#allocation0], 17
    %s82 = smov 3
    %v83 = vld [vmem:[%s81] ss:$-1 sm:%s82]
    %84 = vrot.lane.b32.xlu0 %v83, 78
    %v85 = vpop.permute.xlu0 %84
    %vm86 = vcmask 146432
    %s87 = scalar_lea.vmem %s1, 41
    %88 = vst.msk [vmem:[%s87] ss:$-24 sm:$0x3] %vm86, %v85
    %s89 = scalar_lea.vmem [#allocation0], 9
    %s90 = smov 3
    %v91 = vld [vmem:[%s89] ss:$-1 sm:%s90]
    %92 = vrot.lane.b32.xlu0 %v91, 76
    %v93 = vpop.permute.xlu0 %92
    %vm94 = vcmask 146432
    %s95 = scalar_lea.vmem %s1, 34
    %96 = vst.msk [vmem:[%s95] ss:$-24 sm:$0x3] %vm94, %v93
    %v97 = vld [vmem:[#allocation0] sm:$0x3]
    %98 = vrot.lane.b32.xlu0 %v97, 74
    %v99 = vpop.permute.xlu0 %98
    %vm100 = vcmask 146432
    %s101 = scalar_lea.vmem %s1, 3
    %102 = vst.msk [vmem:[%s101] ss:$24 sm:$0x3] %vm100, %v99
    %s103 = scalar_lea.vmem [#allocation0], 17
    %s104 = smov 3
    %v105 = vld [vmem:[%s103] ss:$-1 sm:%s104]
    %106 = vrot.lane.b32.xlu0 %v105, 60
    %v107 = vpop.permute.xlu0 %106
    %vm108 = vcmask 146432
    %s109 = scalar_lea.vmem %s1, 42
    %110 = vst.msk [vmem:[%s109] ss:$-24 sm:$0x3] %vm108, %v107
    %s111 = scalar_lea.vmem [#allocation0], 9
    %s112 = smov 3
    %v113 = vld [vmem:[%s111] ss:$-1 sm:%s112]
    %114 = vrot.lane.b32.xlu0 %v113, 58
    %v115 = vpop.permute.xlu0 %114
    %vm116 = vcmask 146432
    %s117 = scalar_lea.vmem %s1, 35
    %118 = vst.msk [vmem:[%s117] ss:$-24 sm:$0x3] %vm116, %v115
    %v119 = vld [vmem:[#allocation0] sm:$0x3]
    %120 = vrot.lane.b32.xlu0 %v119, 56
    %v121 = vpop.permute.xlu0 %120
    %vm122 = vcmask 146432
    %s123 = scalar_lea.vmem %s1, 4
    %124 = vst.msk [vmem:[%s123] ss:$24 sm:$0x3] %vm122, %v121
    %s125 = scalar_lea.vmem [#allocation0], 17
    %s126 = smov 3
    %v127 = vld [vmem:[%s125] ss:$-1 sm:%s126]
    %128 = vrot.lane.b32.xlu0 %v127, 42
    %v129 = vpop.permute.xlu0 %128
    %vm130 = vcmask 146432
    %s131 = scalar_lea.vmem %s1, 43
    %132 = vst.msk [vmem:[%s131] ss:$-24 sm:$0x3] %vm130, %v129
    %s133 = scalar_lea.vmem [#allocation0], 9
    %s134 = smov 3
    %v135 = vld [vmem:[%s133] ss:$-1 sm:%s134]
    %136 = vrot.lane.b32.xlu0 %v135, 40
    %v137 = vpop.permute.xlu0 %136
    %vm138 = vcmask 146432
    %s139 = scalar_lea.vmem %s1, 36
    %140 = vst.msk [vmem:[%s139] ss:$-24 sm:$0x3] %vm138, %v137
    %v141 = vld [vmem:[#allocation0] sm:$0x3]
    %142 = vrot.lane.b32.xlu0 %v141, 38
    %v143 = vpop.permute.xlu0 %142
    %vm144 = vcmask 146432
    %s145 = scalar_lea.vmem %s1, 5
    %146 = vst.msk [vmem:[%s145] ss:$24 sm:$0x3] %vm144, %v143
    %s147 = scalar_lea.vmem [#allocation0], 17
    %s148 = smov 3
    %v149 = vld [vmem:[%s147] ss:$-1 sm:%s148]
    %150 = vrot.lane.b32.xlu0 %v149, 24
    %v151 = vpop.permute.xlu0 %150
    %vm152 = vcmask 146432
    %s153 = scalar_lea.vmem %s1, 44
    %154 = vst.msk [vmem:[%s153] ss:$-24 sm:$0x3] %vm152, %v151
    %s155 = scalar_lea.vmem [#allocation0], 9
    %s156 = smov 3
    %v157 = vld [vmem:[%s155] ss:$-1 sm:%s156]
    %158 = vrot.lane.b32.xlu0 %v157, 22
    %v159 = vpop.permute.xlu0 %158
    %vm160 = vcmask 146432
    %s161 = scalar_lea.vmem %s1, 37
    %162 = vst.msk [vmem:[%s161] ss:$-24 sm:$0x3] %vm160, %v159
    %v163 = vld [vmem:[#allocation0] sm:$0x3]
    %164 = vrot.lane.b32.xlu0 %v163, 20
    %v165 = vpop.permute.xlu0 %164
    %vm166 = vcmask 146432
    %s167 = scalar_lea.vmem %s1, 6
    %168 = vst.msk [vmem:[%s167] ss:$24 sm:$0x3] %vm166, %v165
    %s169 = scalar_lea.vmem [#allocation0], 17
    %s170 = smov 3
    %v171 = vld [vmem:[%s169] ss:$-1 sm:%s170]
    %s172 = scalar_lea.vmem [#allocation0], 25
    %s173 = smov 3
    %v174 = vld [vmem:[%s172] ss:$-1 sm:%s173]
    %vm175 = vcmask 998400
    %v176 = vsel %vm175, %v174, %v171
    %177 = vrot.lane.b32.xlu0 %v176, 6
    %v178 = vpop.permute.xlu0 %177
    %vm179 = vcmask 48128
    %s180 = scalar_lea.vmem %s1, 45
    %181 = vst.msk [vmem:[%s180] ss:$-24 sm:$0x3] %vm179, %v178
    %vm182 = vcmask 146480
    %s183 = scalar_lea.vmem %s1, 45
    %184 = vst.msk [vmem:[%s183] ss:$-24 sm:$0x3] %vm182, %v178
    %s185 = scalar_lea.vmem [#allocation0], 9
    %s186 = smov 3
    %v187 = vld [vmem:[%s185] ss:$-1 sm:%s186]
    %s188 = scalar_lea.vmem [#allocation0], 17
    %s189 = smov 3
    %v190 = vld [vmem:[%s188] ss:$-1 sm:%s189]
    %vm191 = vcmask 1014784
    %v192 = vsel %vm191, %v190, %v187
    %193 = vrot.lane.b32.xlu0 %v192, 4
    %v194 = vpop.permute.xlu0 %193
    %vm195 = vcmask 31744
    %s196 = scalar_lea.vmem %s1, 38
    %197 = vst.msk [vmem:[%s196] ss:$-24 sm:$0x3] %vm195, %v194
    %vm198 = vcmask 146464
    %s199 = scalar_lea.vmem %s1, 38
    %200 = vst.msk [vmem:[%s199] ss:$-24 sm:$0x3] %vm198, %v194
    %v201 = vld [vmem:[#allocation0] sm:$0x3]
    %s202 = scalar_lea.vmem [#allocation0], 8
    %v203 = vld [vmem:[%s202] sm:$0x3]
    %vm204 = vcmask 1031168
    %v205 = vsel %vm204, %v203, %v201
    %206 = vrot.lane.b32.xlu0 %v205, 2
    %v207 = vpop.permute.xlu0 %206
    %vm208 = vcmask 15360
    %s209 = scalar_lea.vmem %s1, 7
    %210 = vst.msk [vmem:[%s209] ss:$24 sm:$0x3] %vm208, %v207
    %vm211 = vcmask 146448
    %s212 = scalar_lea.vmem %s1, 7
    %213 = vst.msk [vmem:[%s212] ss:$24 sm:$0x3] %vm211, %v207

// kernel: mask_decoder_forward.7
$region0: #{mask_decoder_forward.7}
  #allocation0 [shape = 'u32[]', space=smem, size = 0x4, offset = 0x4, fixed_abs, tag = 'smem constant byte address 0x4 - core index']
  #allocation1 [shape = 'u32[72,128]{1,0:T(1,128)}', space=vmem, size = 0x9000, scoped, tag = 'internal scratch']
  %s0 = inlined_call_operand.vmem [shape: bf16[2,64,512], index: 0, kind: input, shape index: {}]
  %s1 = inlined_call_operand.vmem [shape: bf16[16,384], index: 1, kind: input, shape index: {}]
  %s2 = inlined_call_operand.vmem [shape: f32[16,3], index: 2, kind: input, shape index: {}]
  %s3 = inlined_call_operand.vmem [shape: f32[16,4], index: 3, kind: input, shape index: {}]
  %s4 = inlined_call_operand.vmem [shape: f32[2,512], index: 4, kind: input, shape index: {}]
  %s5 = inlined_call_operand.vmem [shape: f32[1,512], index: 5, kind: input, shape index: {}]
  %s6 = inlined_call_operand.vmem [shape: f32[2,1,512], index: 6, kind: output, shape index: {}]
  %s7 = sld [smem:[#allocation0]]
  $region57: #{mask_decoder_forward.7} parent=0
    _
  %s9 = ssub.s32 1, %s7
  %s10 = scalar_select 0, %s9, %s7
  loop: start=0, step=1, limit=4
  $region2: #{mask_decoder_forward.7} parent=0 // loop_pre_header
    _
  $region3: #{mask_decoder_forward.7} parent=0 // loop_header
    %s12 = sphi 0, %s16
    %p13 = scmp.ge.s32.totalorder %s12, 4
    %s22 = sphi 0, %s24
    %s25 = sphi 0, %s22
    %s26 = sphi 0, %s25
    %s42 = sphi 0, %s26
    %s46 = sphi 0, %s46
    %s48 = sphi 0, %s46
    %s49 = sphi 0, %s48
    %s63 = sphi 0, %s49
    %s67 = sphi 0, %s67
    %s69 = sphi 0, %s67
    %s70 = sphi 0, %s69
    %s84 = sphi 0, %s70
    %s88 = sphi 0, %s88
    %s90 = sphi 0, %s88
    %s91 = sphi 0, %s90
    %s105 = sphi 0, %s91
    %s109 = sphi 0, %s109
    %s111 = sphi 0, %s109
    %s112 = sphi 0, %s111
    %s126 = sphi 0, %s112
    %s130 = sphi 0, %s130
    %s132 = sphi 0, %s130
    %s133 = sphi 0, %s132
    %s147 = sphi 0, %s133
    %s153 = sphi 0, %s155
    %s156 = sphi 0, %s153
    %s157 = sphi 0, %s156
    %s173 = sphi 0, %s157
  $region4: #{mask_decoder_forward.7} parent=0 // loop_header_branch
    %15 = sbr.rel (%p13) target = $region8
  $region5: #{mask_decoder_forward.7} parent=0 // loop_body
    %s17 = ssub.s32 %s12, 1
    %s18 = ssub.s32 %s12, 2
    %s19 = sadd.s32 %s12, 1
    %s20 = ssub.s32 %s12, %s19
    %p21 = scmp.eq.s32.totalorder %s20, 0
    %s23 = sadd.s32 %s22, 1
    %s24 = scalar_select %p21, %s22, %s23
    %p27 = pneg %p21
    %p28 = scmp.eq.s32.totalorder %s12, 1
    %p29 = por %p27, %p28
    %p30 = scmp.ne.s32.totalorder %s22, %s25
    %p31 = scmp.eq.s32.totalorder %s12, 0
    %p32 = por %p30, %p31
    %p33 = scmp.ne.s32.totalorder %s22, %s25
    %p34 = scmp.eq.s32.totalorder %s17, 1
    %p35 = por %p33, %p34
    %p36 = scmp.ne.s32.totalorder %s25, %s26
    %p37 = scmp.eq.s32.totalorder %s17, 0
    %p38 = por %p36, %p37
    %p39 = scmp.ne.s32.totalorder %s25, %s26
    %p40 = scmp.eq.s32.totalorder %s18, 1
    %p41 = por %p39, %p40
    %p43 = scmp.ne.s32.totalorder %s26, %s42
    %p44 = scmp.eq.s32.totalorder %s18, 0
    %p45 = por %p43, %p44
    %s47 = sadd.s32 %s46, 1
    %p50 = scmp.eq.s32.totalorder %s12, 1
    %p51 = scmp.ne.s32.totalorder %s46, %s48
    %p52 = scmp.eq.s32.totalorder %s12, 0
    %p53 = por %p51, %p52
    %p54 = scmp.ne.s32.totalorder %s46, %s48
    %p55 = scmp.eq.s32.totalorder %s17, 1
    %p56 = por %p54, %p55
    %p57 = scmp.ne.s32.totalorder %s48, %s49
    %p58 = scmp.eq.s32.totalorder %s17, 0
    %p59 = por %p57, %p58
    %p60 = scmp.ne.s32.totalorder %s48, %s49
    %p61 = scmp.eq.s32.totalorder %s18, 1
    %p62 = por %p60, %p61
    %p64 = scmp.ne.s32.totalorder %s49, %s63
    %p65 = scmp.eq.s32.totalorder %s18, 0
    %p66 = por %p64, %p65
    %s68 = sadd.s32 %s67, 1
    %p71 = scmp.eq.s32.totalorder %s12, 1
    %p72 = scmp.ne.s32.totalorder %s67, %s69
    %p73 = scmp.eq.s32.totalorder %s12, 0
    %p74 = por %p72, %p73
    %p75 = scmp.ne.s32.totalorder %s67, %s69
    %p76 = scmp.eq.s32.totalorder %s17, 1
    %p77 = por %p75, %p76
    %p78 = scmp.ne.s32.totalorder %s69, %s70
    %p79 = scmp.eq.s32.totalorder %s17, 0
    %p80 = por %p78, %p79
    %p81 = scmp.ne.s32.totalorder %s69, %s70
    %p82 = scmp.eq.s32.totalorder %s18, 1
    %p83 = por %p81, %p82
    %p85 = scmp.ne.s32.totalorder %s70, %s84
    %p86 = scmp.eq.s32.totalorder %s18, 0
    %p87 = por %p85, %p86
    %s89 = sadd.s32 %s88, 1
    %p92 = scmp.eq.s32.totalorder %s12, 1
    %p93 = scmp.ne.s32.totalorder %s88, %s90
    %p94 = scmp.eq.s32.totalorder %s12, 0
    %p95 = por %p93, %p94
    %p96 = scmp.ne.s32.totalorder %s88, %s90
    %p97 = scmp.eq.s32.totalorder %s17, 1
    %p98 = por %p96, %p97
    %p99 = scmp.ne.s32.totalorder %s90, %s91
    %p100 = scmp.eq.s32.totalorder %s17, 0
    %p101 = por %p99, %p100
    %p102 = scmp.ne.s32.totalorder %s90, %s91
    %p103 = scmp.eq.s32.totalorder %s18, 1
    %p104 = por %p102, %p103
    %p106 = scmp.ne.s32.totalorder %s91, %s105
    %p107 = scmp.eq.s32.totalorder %s18, 0
    %p108 = por %p106, %p107
    %s110 = sadd.s32 %s109, 1
    %p113 = scmp.eq.s32.totalorder %s12, 1
    %p114 = scmp.ne.s32.totalorder %s109, %s111
    %p115 = scmp.eq.s32.totalorder %s12, 0
    %p116 = por %p114, %p115
    %p117 = scmp.ne.s32.totalorder %s109, %s111
    %p118 = scmp.eq.s32.totalorder %s17, 1
    %p119 = por %p117, %p118
    %p120 = scmp.ne.s32.totalorder %s111, %s112
    %p121 = scmp.eq.s32.totalorder %s17, 0
    %p122 = por %p120, %p121
    %p123 = scmp.ne.s32.totalorder %s111, %s112
    %p124 = scmp.eq.s32.totalorder %s18, 1
    %p125 = por %p123, %p124
    %p127 = scmp.ne.s32.totalorder %s112, %s126
    %p128 = scmp.eq.s32.totalorder %s18, 0
    %p129 = por %p127, %p128
    %s131 = sadd.s32 %s130, 1
    %p134 = scmp.eq.s32.totalorder %s12, 1
    %p135 = scmp.ne.s32.totalorder %s130, %s132
    %p136 = scmp.eq.s32.totalorder %s12, 0
    %p137 = por %p135, %p136
    %p138 = scmp.ne.s32.totalorder %s130, %s132
    %p139 = scmp.eq.s32.totalorder %s17, 1
    %p140 = por %p138, %p139
    %p141 = scmp.ne.s32.totalorder %s132, %s133
    %p142 = scmp.eq.s32.totalorder %s17, 0
    %p143 = por %p141, %p142
    %p144 = scmp.ne.s32.totalorder %s132, %s133
    %p145 = scmp.eq.s32.totalorder %s18, 1
    %p146 = por %p144, %p145
    %p148 = scmp.ne.s32.totalorder %s133, %s147
    %p149 = scmp.eq.s32.totalorder %s18, 0
    %p150 = por %p148, %p149
    %s151 = ssub.s32 %s12, %s19
    %p152 = scmp.eq.s32.totalorder %s151, 0
    %s154 = sadd.s32 %s153, 1
    %s155 = scalar_select %p152, %s153, %s154
    %p158 = pneg %p152
    %p159 = scmp.eq.s32.totalorder %s12, 1
    %p160 = por %p158, %p159
    %p161 = scmp.ne.s32.totalorder %s153, %s156
    %p162 = scmp.eq.s32.totalorder %s12, 0
    %p163 = por %p161, %p162
    %p164 = scmp.ne.s32.totalorder %s153, %s156
    %p165 = scmp.eq.s32.totalorder %s17, 1
    %p166 = por %p164, %p165
    %p167 = scmp.ne.s32.totalorder %s156, %s157
    %p168 = scmp.eq.s32.totalorder %s17, 0
    %p169 = por %p167, %p168
    %p170 = scmp.ne.s32.totalorder %s156, %s157
    %p171 = scmp.eq.s32.totalorder %s18, 1
    %p172 = por %p170, %p171
    %p174 = scmp.ne.s32.totalorder %s157, %s173
    %p175 = scmp.eq.s32.totalorder %s18, 0
    %p176 = por %p174, %p175
    %p177 = scmp.le.s32.totalorder 1, %s12
    %p178 = scmp.lt.s32.totalorder %s12, 3
    %p179 = pnand %p177, %p178
    %p180 = pneg %p179
    // Predicated region
    $region9: #{mask_decoder_forward.7} parent=5 // pred_check
      _
    $region10: #{mask_decoder_forward.7} parent=5 // pred_check_branch
      %182 = sbr.rel (%p179) target = $region12
    $region11: #{mask_decoder_forward.7} parent=5 // pred_region
      %s183 = ssub.s32 %s12, 1
      // Predicated region
      $region13: #{mask_decoder_forward.7} parent=11 // pred_check
        %p184 = pneg %p59
      $region14: #{mask_decoder_forward.7} parent=11 // pred_check_branch
        %186 = sbr.rel (%p184) target = $region16
      $region15: #{mask_decoder_forward.7} parent=11 // pred_region
        _
      $region16: #{mask_decoder_forward.7} parent=11 // pred_fallthru
        _
      // Predicated region
      $region17: #{mask_decoder_forward.7} parent=11 // pred_check
        %p187 = pneg %p80
      $region18: #{mask_decoder_forward.7} parent=11 // pred_check_branch
        %189 = sbr.rel (%p187) target = $region20
      $region19: #{mask_decoder_forward.7} parent=11 // pred_region
        _
      $region20: #{mask_decoder_forward.7} parent=11 // pred_fallthru
        _
      // Predicated region
      $region21: #{mask_decoder_forward.7} parent=11 // pred_check
        %p190 = pneg %p101
      $region22: #{mask_decoder_forward.7} parent=11 // pred_check_branch
        %192 = sbr.rel (%p190) target = $region24
      $region23: #{mask_decoder_forward.7} parent=11 // pred_region
        _
      $region24: #{mask_decoder_forward.7} parent=11 // pred_fallthru
        _
      // Predicated region
      $region25: #{mask_decoder_forward.7} parent=11 // pred_check
        %p193 = pneg %p122
      $region26: #{mask_decoder_forward.7} parent=11 // pred_check_branch
        %195 = sbr.rel (%p193) target = $region28
      $region27: #{mask_decoder_forward.7} parent=11 // pred_region
        _
      $region28: #{mask_decoder_forward.7} parent=11 // pred_fallthru
        _
      // Predicated region
      $region29: #{mask_decoder_forward.7} parent=11 // pred_check
        %p196 = pneg %p143
      $region30: #{mask_decoder_forward.7} parent=11 // pred_check_branch
        %198 = sbr.rel (%p196) target = $region32
      $region31: #{mask_decoder_forward.7} parent=11 // pred_region
        _
      $region32: #{mask_decoder_forward.7} parent=11 // pred_fallthru
        _
    $region12: #{mask_decoder_forward.7} parent=5 // pred_fallthru
      _
    %p199 = scmp.lt.s32.totalorder %s12, 2
    // Predicated region
    $region33: #{mask_decoder_forward.7} parent=5 // pred_check
      %p200 = pneg %p199
    $region34: #{mask_decoder_forward.7} parent=5 // pred_check_branch
      %202 = sbr.rel (%p200) target = $region36
    $region35: #{mask_decoder_forward.7} parent=5 // pred_region
      // Predicated region
      $region37: #{mask_decoder_forward.7} parent=35 // pred_check
        %p203 = pneg %p32
      $region38: #{mask_decoder_forward.7} parent=35 // pred_check_branch
        %205 = sbr.rel (%p203) target = $region40
      $region39: #{mask_decoder_forward.7} parent=35 // pred_region
        %p206 = scmp.lt.s32.totalorder %s12, 1
        %s207 = scalar_select %p206, %s12, 1
        %s208 = smul.addr %s207, 32
        %s209 = smul.addr %s208, 4
        %s210 = scalar_lea.vmem %s0, %s209
      $region40: #{mask_decoder_forward.7} parent=35 // pred_fallthru
        _
    $region36: #{mask_decoder_forward.7} parent=5 // pred_fallthru
      _
    %p211 = scmp.le.s32.totalorder 1, %s12
    %p212 = scmp.lt.s32.totalorder %s12, 3
    %p213 = pnand %p211, %p212
    %p214 = pneg %p213
    // Predicated region
    $region41: #{mask_decoder_forward.7} parent=5 // pred_check
      _
    $region42: #{mask_decoder_forward.7} parent=5 // pred_check_branch
      %216 = sbr.rel (%p213) target = $region44
    $region43: #{mask_decoder_forward.7} parent=5 // pred_region
      %s217 = ssub.s32 %s12, 1
      %p218 = scmp.lt.s32.totalorder %s17, 1
      %s219 = scalar_select %p218, %s17, 1
      %s220 = smul.addr %s219, 32
      %s221 = smul.addr %s220, 4
      %s222 = scalar_lea.vmem %s0, %s221
      %p223 = pneg %p38
      %p224 = pneg %p35
      %p225 = pneg %p59
      %p226 = pneg %p56
      %p227 = pneg %p80
      %p228 = pneg %p77
      %p229 = pneg %p101
      %p230 = pneg %p98
      %p231 = pneg %p122
      %p232 = pneg %p119
      %p233 = pneg %p143
      %p234 = pneg %p140
      %p235 = pneg %p169
      %p236 = pneg %p166
      %p237 = scmp.lt.s32.totalorder %s17, 1
      %s238 = scalar_select %p237, %s17, 1
      %s239 = smul.addr %s238, 4
      %s240 = scalar_lea.vmem %s6, %s239
      %p241 = scmp.lt.s32.totalorder %s17, 1
      %s242 = scalar_select %p241, %s17, 1
      %s243 = smul.addr %s242, 32
      %s244 = smul.addr %s243, 4
      %s245 = scalar_lea.vmem %s0, %s244
      %p246 = scmp.lt.s32.totalorder %s17, 1
      %s247 = scalar_select %p246, %s17, 1
      %s248 = smul.addr %s247, 4
      %s249 = scalar_lea.vmem %s6, %s248
      %v251 = vld [vmem:[%s245] sm:$0xff]
      %v252 = vld [vmem:[%s245 + $0x8] sm:$0xff]
      %v253 = vld [vmem:[%s245 + $0x10] sm:$0xff]
      %v254 = vld [vmem:[%s245 + $0x18] sm:$0xff]
      %v255 = vld [vmem:[%s245 + $0x20] sm:$0xff]
      %v256 = vld [vmem:[%s245 + $0x28] sm:$0xff]
      %v257 = vld [vmem:[%s245 + $0x30] sm:$0xff]
      %v258 = vld [vmem:[%s245 + $0x38] sm:$0xff]
      %v259 = vld [vmem:[%s245 + $0x40] sm:$0xff]
      %v260 = vld [vmem:[%s245 + $0x48] sm:$0xff]
      %v261 = vld [vmem:[%s245 + $0x50] sm:$0xff]
      %v262 = vld [vmem:[%s245 + $0x58] sm:$0xff]
      %v263 = vld [vmem:[%s245 + $0x60] sm:$0xff]
      %v264 = vld [vmem:[%s245 + $0x68] sm:$0xff]
      %v265 = vld [vmem:[%s245 + $0x70] sm:$0xff]
      %v266 = vld [vmem:[%s245 + $0x78] sm:$0xff]
      %v267 = vld [vmem:[%s5] sm:$0xf]
      %v284 = vunpack.c.l.b16 %v251
      %v285 = vunpack.c.h.b16 %v251
      %v286 = vunpack.c.l.b16 %v252
      %v287 = vunpack.c.l.b16 %v253
      %v288 = vunpack.c.h.b16 %v253
      %v289 = vunpack.c.l.b16 %v254
      %v290 = vunpack.c.l.b16 %v255
      %v291 = vunpack.c.h.b16 %v255
      %v292 = vunpack.c.l.b16 %v256
      %v293 = vunpack.c.l.b16 %v257
      %v294 = vunpack.c.h.b16 %v257
      %v295 = vunpack.c.l.b16 %v258
      %v296 = vunpack.c.l.b16 %v259
      %v297 = vunpack.c.h.b16 %v259
      %v298 = vunpack.c.l.b16 %v260
      %v299 = vunpack.c.l.b16 %v261
      %v300 = vunpack.c.h.b16 %v261
      %v301 = vunpack.c.l.b16 %v262
      %v302 = vunpack.c.l.b16 %v263
      %v303 = vunpack.c.h.b16 %v263
      %v304 = vunpack.c.l.b16 %v264
      %v305 = vunpack.c.l.b16 %v265
      %v306 = vunpack.c.h.b16 %v265
      %v307 = vunpack.c.l.b16 %v266
      %v308 = vpack.c.b16 %v287, %v284
      %v309 = vpack.c.b16 %v288, %v285
      %v310 = vpack.c.b16 %v289, %v286
      %v311 = vpack.c.b16 %v293, %v290
      %v312 = vpack.c.b16 %v294, %v291
      %v313 = vpack.c.b16 %v295, %v292
      %v314 = vpack.c.b16 %v299, %v296
      %v315 = vpack.c.b16 %v300, %v297
      %v316 = vpack.c.b16 %v301, %v298
      %v317 = vpack.c.b16 %v305, %v302
      %v318 = vpack.c.b16 %v306, %v303
      %v319 = vpack.c.b16 %v307, %v304
      %320 = vrot.lane.b32.xlu0 %v308, 17
      %v321 = vpop.permute.xlu0 %320
      %322 = vrot.lane.b32.xlu0 %v309, 17
      %v323 = vpop.permute.xlu0 %322
      %324 = vrot.lane.b32.xlu0 %v310, 17
      %v325 = vpop.permute.xlu0 %324
      %326 = vrot.lane.b32.xlu0 %v311, 17
      %v327 = vpop.permute.xlu0 %326
      %328 = vrot.lane.b32.xlu0 %v312, 17
      %v329 = vpop.permute.xlu0 %328
      %330 = vrot.lane.b32.xlu0 %v313, 17
      %v331 = vpop.permute.xlu0 %330
      %332 = vrot.lane.b32.xlu0 %v314, 17
      %v333 = vpop.permute.xlu0 %332
      %334 = vrot.lane.b32.xlu0 %v315, 17
      %v335 = vpop.permute.xlu0 %334
      %336 = vrot.lane.b32.xlu0 %v316, 17
      %v337 = vpop.permute.xlu0 %336
      %338 = vrot.lane.b32.xlu0 %v317, 17
      %v339 = vpop.permute.xlu0 %338
      %340 = vrot.lane.b32.xlu0 %v318, 17
      %v341 = vpop.permute.xlu0 %340
      %342 = vrot.lane.b32.xlu0 %v319, 17
      %v343 = vpop.permute.xlu0 %342
      %vm344 = vcmask 138240
      %v345 = vsel %vm344, %v321, %v323
      %v346 = vsel %vm344, %v323, %v325
      %v347 = vsel %vm344, %v327, %v329
      %v348 = vsel %vm344, %v329, %v331
      %v349 = vsel %vm344, %v333, %v335
      %v350 = vsel %vm344, %v335, %v337
      %v351 = vsel %vm344, %v339, %v341
      %v352 = vsel %vm344, %v341, %v343
      %vm361 = vcmask 138240
      %v364 = vsel %vm361, 0, %v321
      %v367 = vsel %vm361, 0, %v327
      %v370 = vsel %vm361, 0, %v333
      %v373 = vsel %vm361, 0, %v339
      %375 = vrot.lane.b32.xlu0 %v308, 16
      %v376 = vpop.permute.xlu0 %375
      %377 = vrot.lane.b32.xlu0 %v309, 16
      %v378 = vpop.permute.xlu0 %377
      %379 = vrot.lane.b32.xlu0 %v310, 16
      %v380 = vpop.permute.xlu0 %379
      %381 = vrot.lane.b32.xlu0 %v311, 16
      %v382 = vpop.permute.xlu0 %381
      %383 = vrot.lane.b32.xlu0 %v312, 16
      %v384 = vpop.permute.xlu0 %383
      %385 = vrot.lane.b32.xlu0 %v313, 16
      %v386 = vpop.permute.xlu0 %385
      %387 = vrot.lane.b32.xlu0 %v314, 16
      %v388 = vpop.permute.xlu0 %387
      %389 = vrot.lane.b32.xlu0 %v315, 16
      %v390 = vpop.permute.xlu0 %389
      %391 = vrot.lane.b32.xlu0 %v316, 16
      %v392 = vpop.permute.xlu0 %391
      %393 = vrot.lane.b32.xlu0 %v317, 16
      %v394 = vpop.permute.xlu0 %393
      %395 = vrot.lane.b32.xlu0 %v318, 16
      %v396 = vpop.permute.xlu0 %395
      %397 = vrot.lane.b32.xlu0 %v319, 16
      %v398 = vpop.permute.xlu0 %397
      %vm399 = vcmask 130048
      %v400 = vsel %vm399, %v376, %v378
      %v401 = vsel %vm399, %v378, %v380
      %v402 = vsel %vm399, %v382, %v384
      %v403 = vsel %vm399, %v384, %v386
      %v404 = vsel %vm399, %v388, %v390
      %v405 = vsel %vm399, %v390, %v392
      %v406 = vsel %vm399, %v394, %v396
      %v407 = vsel %vm399, %v396, %v398
      %vm416 = vcmask 130048
      %v418 = vsel %vm416, 0, %v376
      %v421 = vsel %vm416, 0, %v382
      %v424 = vsel %vm416, 0, %v388
      %v427 = vsel %vm416, 0, %v394
      %429 = vrot.lane.b32.xlu0 %v308, 15
      %v430 = vpop.permute.xlu0 %429
      %431 = vrot.lane.b32.xlu0 %v309, 15
      %v432 = vpop.permute.xlu0 %431
      %433 = vrot.lane.b32.xlu0 %v310, 15
      %v434 = vpop.permute.xlu0 %433
      %435 = vrot.lane.b32.xlu0 %v311, 15
      %v436 = vpop.permute.xlu0 %435
      %437 = vrot.lane.b32.xlu0 %v312, 15
      %v438 = vpop.permute.xlu0 %437
      %439 = vrot.lane.b32.xlu0 %v313, 15
      %v440 = vpop.permute.xlu0 %439
      %441 = vrot.lane.b32.xlu0 %v314, 15
      %v442 = vpop.permute.xlu0 %441
      %443 = vrot.lane.b32.xlu0 %v315, 15
      %v444 = vpop.permute.xlu0 %443
      %445 = vrot.lane.b32.xlu0 %v316, 15
      %v446 = vpop.permute.xlu0 %445
      %447 = vrot.lane.b32.xlu0 %v317, 15
      %v448 = vpop.permute.xlu0 %447
      %449 = vrot.lane.b32.xlu0 %v318, 15
      %v450 = vpop.permute.xlu0 %449
      %451 = vrot.lane.b32.xlu0 %v319, 15
      %v452 = vpop.permute.xlu0 %451
      %vm453 = vcmask 121856
      %v454 = vsel %vm453, %v430, %v432
      %v455 = vsel %vm453, %v432, %v434
      %v456 = vsel %vm453, %v436, %v438
      %v457 = vsel %vm453, %v438, %v440
      %v458 = vsel %vm453, %v442, %v444
      %v459 = vsel %vm453, %v444, %v446
      %v460 = vsel %vm453, %v448, %v450
      %v461 = vsel %vm453, %v450, %v452
      %vm470 = vcmask 121856
      %v472 = vsel %vm470, 0, %v430
      %v475 = vsel %vm470, 0, %v436
      %v478 = vsel %vm470, 0, %v442
      %v481 = vsel %vm470, 0, %v448
      %v483 = vunpack.c.h.b16 %v252
      %v484 = vunpack.c.h.b16 %v254
      %v485 = vunpack.c.h.b16 %v256
      %v486 = vunpack.c.h.b16 %v258
      %v487 = vunpack.c.h.b16 %v260
      %v488 = vunpack.c.h.b16 %v262
      %v489 = vunpack.c.h.b16 %v264
      %v490 = vunpack.c.h.b16 %v266
      %v491 = vpack.c.b16 %v484, %v483
      %v492 = vpack.c.b16 %v486, %v485
      %v493 = vpack.c.b16 %v488, %v487
      %v494 = vpack.c.b16 %v490, %v489
      %495 = vrot.lane.b32.xlu0 %v308, 1
      %v496 = vpop.permute.xlu0 %495
      %497 = vrot.lane.b32.xlu0 %v309, 1
      %v498 = vpop.permute.xlu0 %497
      %499 = vrot.lane.b32.xlu0 %v310, 1
      %v500 = vpop.permute.xlu0 %499
      %501 = vrot.lane.b32.xlu0 %v491, 1
      %v502 = vpop.permute.xlu0 %501
      %503 = vrot.lane.b32.xlu0 %v311, 1
      %v504 = vpop.permute.xlu0 %503
      %505 = vrot.lane.b32.xlu0 %v312, 1
      %v506 = vpop.permute.xlu0 %505
      %507 = vrot.lane.b32.xlu0 %v313, 1
      %v508 = vpop.permute.xlu0 %507
      %509 = vrot.lane.b32.xlu0 %v492, 1
      %v510 = vpop.permute.xlu0 %509
      %511 = vrot.lane.b32.xlu0 %v314, 1
      %v512 = vpop.permute.xlu0 %511
      %513 = vrot.lane.b32.xlu0 %v315, 1
      %v514 = vpop.permute.xlu0 %513
      %515 = vrot.lane.b32.xlu0 %v316, 1
      %v516 = vpop.permute.xlu0 %515
      %517 = vrot.lane.b32.xlu0 %v493, 1
      %v518 = vpop.permute.xlu0 %517
      %519 = vrot.lane.b32.xlu0 %v317, 1
      %v520 = vpop.permute.xlu0 %519
      %521 = vrot.lane.b32.xlu0 %v318, 1
      %v522 = vpop.permute.xlu0 %521
      %523 = vrot.lane.b32.xlu0 %v319, 1
      %v524 = vpop.permute.xlu0 %523
      %525 = vrot.lane.b32.xlu0 %v494, 1
      %v526 = vpop.permute.xlu0 %525
      %vm527 = vcmask 7168
      %v528 = vsel %vm527, %v496, %v498
      %v529 = vsel %vm527, %v498, %v500
      %v530 = vsel %vm527, %v500, %v502
      %v531 = vsel %vm527, %v504, %v506
      %v532 = vsel %vm527, %v506, %v508
      %v533 = vsel %vm527, %v508, %v510
      %v534 = vsel %vm527, %v512, %v514
      %v535 = vsel %vm527, %v514, %v516
      %v536 = vsel %vm527, %v516, %v518
      %v537 = vsel %vm527, %v520, %v522
      %v538 = vsel %vm527, %v522, %v524
      %v539 = vsel %vm527, %v524, %v526
      %vm552 = vcmask 7168
      %v554 = vsel %vm552, 0, %v496
      %v557 = vsel %vm552, 0, %v504
      %v560 = vsel %vm552, 0, %v512
      %v563 = vsel %vm552, 0, %v520
      %565 = vrot.lane.b32.xlu0 %v308, 127
      %v566 = vpop.permute.xlu0 %565
      %567 = vrot.lane.b32.xlu0 %v309, 127
      %v568 = vpop.permute.xlu0 %567
      %569 = vrot.lane.b32.xlu0 %v310, 127
      %v570 = vpop.permute.xlu0 %569
      %571 = vrot.lane.b32.xlu0 %v491, 127
      %v572 = vpop.permute.xlu0 %571
      %573 = vrot.lane.b32.xlu0 %v311, 127
      %v574 = vpop.permute.xlu0 %573
      %575 = vrot.lane.b32.xlu0 %v312, 127
      %v576 = vpop.permute.xlu0 %575
      %577 = vrot.lane.b32.xlu0 %v313, 127
      %v578 = vpop.permute.xlu0 %577
      %579 = vrot.lane.b32.xlu0 %v492, 127
      %v580 = vpop.permute.xlu0 %579
      %581 = vrot.lane.b32.xlu0 %v314, 127
      %v582 = vpop.permute.xlu0 %581
      %583 = vrot.lane.b32.xlu0 %v315, 127
      %v584 = vpop.permute.xlu0 %583
      %585 = vrot.lane.b32.xlu0 %v316, 127
      %v586 = vpop.permute.xlu0 %585
      %587 = vrot.lane.b32.xlu0 %v493, 127
      %v588 = vpop.permute.xlu0 %587
      %589 = vrot.lane.b32.xlu0 %v317, 127
      %v590 = vpop.permute.xlu0 %589
      %591 = vrot.lane.b32.xlu0 %v318, 127
      %v592 = vpop.permute.xlu0 %591
      %593 = vrot.lane.b32.xlu0 %v319, 127
      %v594 = vpop.permute.xlu0 %593
      %595 = vrot.lane.b32.xlu0 %v494, 127
      %v596 = vpop.permute.xlu0 %595
      %vm597 = vcmask 1039360
      %v598 = vsel %vm597, %v566, %v568
      %v599 = vsel %vm597, %v568, %v570
      %v600 = vsel %vm597, %v570, %v572
      %v601 = vsel %vm597, %v574, %v576
      %v602 = vsel %vm597, %v576, %v578
      %v603 = vsel %vm597, %v578, %v580
      %v604 = vsel %vm597, %v582, %v584
      %v605 = vsel %vm597, %v584, %v586
      %v606 = vsel %vm597, %v586, %v588
      %v607 = vsel %vm597, %v590, %v592
      %v608 = vsel %vm597, %v592, %v594
      %v609 = vsel %vm597, %v594, %v596
      %vm622 = vcmask 1039360
      %v624 = vsel %vm622, %v572, 0
      %v627 = vsel %vm622, %v580, 0
      %v630 = vsel %vm622, %v588, 0
      %v633 = vsel %vm622, %v596, 0
      %v651 = vld [vmem:[%s1] sm:$0xff]
      %v652 = vld [vmem:[%s1 + $0x8] sm:$0xf]
      %v653 = vld [vmem:[%s1 + $0xc] sm:$0xff]
      %v654 = vld [vmem:[%s1 + $0x14] sm:$0xf]
      %v659 = vunpack.c.l.b16 %v651
      %v660 = vunpack.c.h.b16 %v651
      %v661 = vunpack.c.l.b16 %v652
      %v662 = vunpack.c.l.b16 %v653
      %v663 = vunpack.c.h.b16 %v653
      %v664 = vunpack.c.l.b16 %v654
      %v665 = vpack.c.b16 %v662, %v659
      %v666 = vpack.c.b16 %v663, %v660
      %v667 = vpack.c.b16 %v664, %v661
      %671 = vmatpush.bf16.msra.mxu0 0
      %672 = vmatpush.bf16.msra.mxu0 0
      %673 = vmatpush.bf16.msra.mxu0 0
      %674 = vmatpush.bf16.msra.mxu0 0
      %675 = vmatpush.bf16.msra.mxu0 0
      %676 = vmatpush.bf16.msra.mxu0 0
      %677 = vmatpush.bf16.msra.mxu0 0
      %678 = vmatpush.bf16.msra.mxu0 0
      %679 = vmatmul.bf16.gmra.mxu0 %v665
      %v680 = vpop.f32.mrf.mxu0
      %v681 = vadd.f32 0.0, %v680
      %v682 = vpop.f32.mrf.mxu0
      %v683 = vadd.f32 0.0, %v682
      %684 = vdwg.mxu0
      %685 = vmatpush.bf16.msra.mxu0 %v563
      %686 = vmatpush.bf16.msra.mxu0 %v560
      %687 = vmatpush.bf16.msra.mxu0 %v557
      %688 = vmatpush.bf16.msra.mxu0 %v554
      %689 = vmatpush.bf16.msra.mxu0 0
      %690 = vmatpush.bf16.msra.mxu0 0
      %691 = vmatpush.bf16.msra.mxu0 0
      %692 = vmatpush.bf16.msra.mxu0 0
      %693 = vmatmul.bf16.gmra.mxu0 %v666
      %v694 = vpop.f32.mrf.mxu0
      %v695 = vadd.f32 %v681, %v694
      %v696 = vpop.f32.mrf.mxu0
      %v697 = vadd.f32 %v683, %v696
      %698 = vdwg.mxu0
      %699 = vmatpush.bf16.msra.mxu0 %v607
      %700 = vmatpush.bf16.msra.mxu0 %v604
      %701 = vmatpush.bf16.msra.mxu0 %v601
      %702 = vmatpush.bf16.msra.mxu0 %v598
      %703 = vmatpush.bf16.msra.mxu0 %v317
      %704 = vmatpush.bf16.msra.mxu0 %v314
      %705 = vmatpush.bf16.msra.mxu0 %v311
      %706 = vmatpush.bf16.msra.mxu0 %v308
      %707 = vmatmul.bf16.gmra.mxu0 %v667
      %v708 = vpop.f32.mrf.mxu0
      %v709 = vadd.f32 %v695, %v708
      %v710 = vpop.f32.mrf.mxu0
      %v711 = vadd.f32 %v697, %v710
      %712 = vdwg.mxu0
      %713 = vmatpush.bf16.msra.mxu0 %v427
      %714 = vmatpush.bf16.msra.mxu0 %v424
      %715 = vmatpush.bf16.msra.mxu0 %v421
      %716 = vmatpush.bf16.msra.mxu0 %v418
      %717 = vmatpush.bf16.msra.mxu0 %v373
      %718 = vmatpush.bf16.msra.mxu0 %v370
      %719 = vmatpush.bf16.msra.mxu0 %v367
      %720 = vmatpush.bf16.msra.mxu0 %v364
      %721 = vmatmul.bf16.gmra.mxu0 %v665
      %v722 = vpop.f32.mrf.mxu0
      %v723 = vadd.f32 0.0, %v722
      %v724 = vpop.f32.mrf.mxu0
      %v725 = vadd.f32 0.0, %v724
      %726 = vdwg.mxu0
      %727 = vmatpush.bf16.msra.mxu0 %v537
      %728 = vmatpush.bf16.msra.mxu0 %v534
      %729 = vmatpush.bf16.msra.mxu0 %v531
      %730 = vmatpush.bf16.msra.mxu0 %v528
      %731 = vmatpush.bf16.msra.mxu0 %v481
      %732 = vmatpush.bf16.msra.mxu0 %v478
      %733 = vmatpush.bf16.msra.mxu0 %v475
      %734 = vmatpush.bf16.msra.mxu0 %v472
      %735 = vmatmul.bf16.gmra.mxu0 %v666
      %v736 = vpop.f32.mrf.mxu0
      %v737 = vadd.f32 %v723, %v736
      %v738 = vpop.f32.mrf.mxu0
      %v739 = vadd.f32 %v725, %v738
      %740 = vdwg.mxu0
      %741 = vmatpush.bf16.msra.mxu0 %v608
      %742 = vmatpush.bf16.msra.mxu0 %v605
      %743 = vmatpush.bf16.msra.mxu0 %v602
      %744 = vmatpush.bf16.msra.mxu0 %v599
      %745 = vmatpush.bf16.msra.mxu0 %v318
      %746 = vmatpush.bf16.msra.mxu0 %v315
      %747 = vmatpush.bf16.msra.mxu0 %v312
      %748 = vmatpush.bf16.msra.mxu0 %v309
      %749 = vmatmul.bf16.gmra.mxu0 %v667
      %v750 = vpop.f32.mrf.mxu0
      %v751 = vadd.f32 %v737, %v750
      %v752 = vpop.f32.mrf.mxu0
      %v753 = vadd.f32 %v739, %v752
      %754 = vdwg.mxu0
      %755 = vmatpush.bf16.msra.mxu0 %v406
      %756 = vmatpush.bf16.msra.mxu0 %v404
      %757 = vmatpush.bf16.msra.mxu0 %v402
      %758 = vmatpush.bf16.msra.mxu0 %v400
      %759 = vmatpush.bf16.msra.mxu0 %v351
      %760 = vmatpush.bf16.msra.mxu0 %v349
      %761 = vmatpush.bf16.msra.mxu0 %v347
      %762 = vmatpush.bf16.msra.mxu0 %v345
      %763 = vmatmul.bf16.gmra.mxu0 %v665
      %v764 = vpop.f32.mrf.mxu0
      %v765 = vadd.f32 0.0, %v764
      %v766 = vpop.f32.mrf.mxu0
      %v767 = vadd.f32 0.0, %v766
      %768 = vdwg.mxu0
      %769 = vmatpush.bf16.msra.mxu0 %v538
      %770 = vmatpush.bf16.msra.mxu0 %v535
      %771 = vmatpush.bf16.msra.mxu0 %v532
      %772 = vmatpush.bf16.msra.mxu0 %v529
      %773 = vmatpush.bf16.msra.mxu0 %v460
      %774 = vmatpush.bf16.msra.mxu0 %v458
      %775 = vmatpush.bf16.msra.mxu0 %v456
      %776 = vmatpush.bf16.msra.mxu0 %v454
      %777 = vmatmul.bf16.gmra.mxu0 %v666
      %v778 = vpop.f32.mrf.mxu0
      %v779 = vadd.f32 %v765, %v778
      %v780 = vpop.f32.mrf.mxu0
      %v781 = vadd.f32 %v767, %v780
      %782 = vdwg.mxu0
      %783 = vmatpush.bf16.msra.mxu0 %v609
      %784 = vmatpush.bf16.msra.mxu0 %v606
      %785 = vmatpush.bf16.msra.mxu0 %v603
      %786 = vmatpush.bf16.msra.mxu0 %v600
      %787 = vmatpush.bf16.msra.mxu0 %v319
      %788 = vmatpush.bf16.msra.mxu0 %v316
      %789 = vmatpush.bf16.msra.mxu0 %v313
      %790 = vmatpush.bf16.msra.mxu0 %v310
      %791 = vmatmul.bf16.gmra.mxu0 %v667
      %v792 = vpop.f32.mrf.mxu0
      %v793 = vadd.f32 %v779, %v792
      %v794 = vpop.f32.mrf.mxu0
      %v795 = vadd.f32 %v781, %v794
      %796 = vdwg.mxu0
      %797 = vmatpush.bf16.msra.mxu0 %v407
      %798 = vmatpush.bf16.msra.mxu0 %v405
      %799 = vmatpush.bf16.msra.mxu0 %v403
      %800 = vmatpush.bf16.msra.mxu0 %v401
      %801 = vmatpush.bf16.msra.mxu0 %v352
      %802 = vmatpush.bf16.msra.mxu0 %v350
      %803 = vmatpush.bf16.msra.mxu0 %v348
      %804 = vmatpush.bf16.msra.mxu0 %v346
      %805 = vmatmul.bf16.gmra.mxu0 %v665
      %v806 = vpop.f32.mrf.mxu0
      %v807 = vadd.f32 0.0, %v806
      %v808 = vpop.f32.mrf.mxu0
      %v809 = vadd.f32 0.0, %v808
      %810 = vdwg.mxu0
      %811 = vmatpush.bf16.msra.mxu0 %v539
      %812 = vmatpush.bf16.msra.mxu0 %v536
      %813 = vmatpush.bf16.msra.mxu0 %v533
      %814 = vmatpush.bf16.msra.mxu0 %v530
      %815 = vmatpush.bf16.msra.mxu0 %v461
      %816 = vmatpush.bf16.msra.mxu0 %v459
      %817 = vmatpush.bf16.msra.mxu0 %v457
      %818 = vmatpush.bf16.msra.mxu0 %v455
      %819 = vmatmul.bf16.gmra.mxu0 %v666
      %v820 = vpop.f32.mrf.mxu0
      %v821 = vadd.f32 %v807, %v820
      %v822 = vpop.f32.mrf.mxu0
      %v823 = vadd.f32 %v809, %v822
      %824 = vdwg.mxu0
      %825 = vmatpush.bf16.msra.mxu0 %v633
      %826 = vmatpush.bf16.msra.mxu0 %v630
      %827 = vmatpush.bf16.msra.mxu0 %v627
      %828 = vmatpush.bf16.msra.mxu0 %v624
      %829 = vmatpush.bf16.msra.mxu0 %v494
      %830 = vmatpush.bf16.msra.mxu0 %v493
      %831 = vmatpush.bf16.msra.mxu0 %v492
      %832 = vmatpush.bf16.msra.mxu0 %v491
      %833 = vmatmul.bf16.gmra.mxu0 %v667
      %v834 = vpop.f32.mrf.mxu0
      %v835 = vadd.f32 %v821, %v834
      %v836 = vpop.f32.mrf.mxu0
      %v837 = vadd.f32 %v823, %v836
      %838 = vdwg.mxu0
      %v839 = vld [vmem:[%s2] sm:$0xff]
      %v840 = vld [vmem:[%s2 + $0x8] sm:$0xff]
      %v842 = vperm.slane %v267, 0
      %v843 = vperm.slane %v267, 1
      %v844 = vperm.slane %v267, 2
      %v845 = vperm.slane %v267, 3
      %v850 = vmul.f32 %v709, %v842
      %v851 = vmul.f32 %v751, %v843
      %v852 = vmul.f32 %v793, %v844
      %v853 = vmul.f32 %v835, %v845
      %v854 = vmul.f32 %v711, %v842
      %v855 = vmul.f32 %v753, %v843
      %v856 = vmul.f32 %v795, %v844
      %v857 = vmul.f32 %v837, %v845
      %v858 = vadd.f32 %v850, %v851
      %v859 = vadd.f32 %v858, %v852
      %v860 = vadd.f32 %v859, %v853
      %861 = vadd.xlane.f32.xlu0 %v860
      %v862 = vpop.xlane.xlu0 %861
      %v863 = vadd.f32 %v854, %v855
      %v864 = vadd.f32 %v863, %v856
      %v865 = vadd.f32 %v864, %v857
      %866 = vadd.xlane.f32.xlu0 %v865
      %v867 = vpop.xlane.xlu0 %866
      %v868 = vmul.f32 %v862, 0.00390625
      %v869 = vmul.f32 %v867, 0.00390625
      %v870 = vmul.f32 %v850, %v850
      %v871 = vmul.f32 %v851, %v851
      %v872 = vmul.f32 %v852, %v852
      %v873 = vmul.f32 %v853, %v853
      %v874 = vmul.f32 %v854, %v854
      %v875 = vmul.f32 %v855, %v855
      %v876 = vmul.f32 %v856, %v856
      %v877 = vmul.f32 %v857, %v857
      %v878 = vadd.f32 %v870, %v871
      %v879 = vadd.f32 %v878, %v872
      %v880 = vadd.f32 %v879, %v873
      %881 = vadd.xlane.f32.xlu0 %v880
      %v882 = vpop.xlane.xlu0 %881
      %v883 = vadd.f32 %v874, %v875
      %v884 = vadd.f32 %v883, %v876
      %v885 = vadd.f32 %v884, %v877
      %886 = vadd.xlane.f32.xlu0 %v885
      %v887 = vpop.xlane.xlu0 %886
      %v888 = vmul.f32 %v882, 0.00390625
      %v889 = vmul.f32 %v887, 0.00390625
      %v890 = vmul.f32 %v868, %v868
      %v891 = vmul.f32 %v869, %v869
      %v892 = vsub.f32 %v888, %v890
      %v893 = vsub.f32 %v889, %v891
      %v894 = vmax.f32 %v892, 0.0
      %v895 = vmax.f32 %v893, 0.0
      %v896 = vadd.f32 %v894, 1e-05
      %v897 = vadd.f32 %v895, 1e-05
      %v898 = vrsqrt.pop %v896
      %v899 = vmul.f32 %v898, %v896
      %v900 = vmul.f32 %v899, %v898
      %v901 = vmul.f32 0.5, %v900
      %v902 = vsub.f32 1.5, %v901
      %v903 = vmul.f32 %v898, %v902
      %vm904 = vweird.f32 %v896
      %vm905 = vweird.f32 %v898
      %vm906 = vmor %vm904, %vm905
      %v907 = vsel %vm906, %v898, %v903
      %v908 = vrsqrt.pop %v897
      %v909 = vmul.f32 %v908, %v897
      %v910 = vmul.f32 %v909, %v908
      %v911 = vmul.f32 0.5, %v910
      %v912 = vsub.f32 1.5, %v911
      %v913 = vmul.f32 %v908, %v912
      %vm914 = vweird.f32 %v897
      %vm915 = vweird.f32 %v908
      %vm916 = vmor %vm914, %vm915
      %v917 = vsel %vm916, %v908, %v913
      %v918 = vmul.f32 %v839, %v907
      %v919 = vmul.f32 %v840, %v917
      %v920 = vmul.f32 %v868, %v918
      %v921 = vmul.f32 %v869, %v919
      %924 = vrot.lane.b32.xlu0 %v920, 1
      %v925 = vpop.permute.xlu0 %924
      %926 = vrot.lane.b32.xlu0 %v921, 1
      %v927 = vpop.permute.xlu0 %926
      %v930 = vsub.f32 %v839, %v925
      %v931 = vsub.f32 %v840, %v927
      %933 = vset.pattern.permute.xlu0 0
      %934 = vperm.xlu0 %933, %v918
      %v935 = vpop.permute.xlu0 %934
      %938 = vset.pattern.permute.xlu0 0
      %939 = vperm.xlu0 %938, %v919
      %v940 = vpop.permute.xlu0 %939
      %v942 = vmul.f32 %v709, %v935
      %v943 = vmul.f32 %v751, %v935
      %v944 = vmul.f32 %v793, %v935
      %v945 = vmul.f32 %v835, %v935
      %v946 = vmul.f32 %v711, %v940
      %v947 = vmul.f32 %v753, %v940
      %v948 = vmul.f32 %v795, %v940
      %v949 = vmul.f32 %v837, %v940
      %951 = vset.pattern.permute.xlu0 1
      %952 = vperm.xlu0 %951, %v930
      %v953 = vpop.permute.xlu0 %952
      %956 = vset.pattern.permute.xlu0 1
      %957 = vperm.xlu0 %956, %v931
      %v958 = vpop.permute.xlu0 %957
      %v960 = vadd.f32 %v942, %v953
      %v961 = vadd.f32 %v943, %v953
      %v962 = vadd.f32 %v944, %v953
      %v963 = vadd.f32 %v945, %v953
      %v964 = vadd.f32 %v946, %v958
      %v965 = vadd.f32 %v947, %v958
      %v966 = vadd.f32 %v948, %v958
      %v967 = vadd.f32 %v949, %v958
      %vm968 = vcmp.ge.f32.partialorder %v960, 0.0
      %vm969 = vcmp.ge.f32.partialorder %v961, 0.0
      %vm970 = vcmp.ge.f32.partialorder %v962, 0.0
      %vm971 = vcmp.ge.f32.partialorder %v963, 0.0
      %vm972 = vcmp.ge.f32.partialorder %v964, 0.0
      %vm973 = vcmp.ge.f32.partialorder %v965, 0.0
      %vm974 = vcmp.ge.f32.partialorder %v966, 0.0
      %vm975 = vcmp.ge.f32.partialorder %v967, 0.0
      %977 = vset.pattern.permute.xlu0 2
      %978 = vperm.xlu0 %977, %v839
      %v979 = vpop.permute.xlu0 %978
      %982 = vset.pattern.permute.xlu0 2
      %983 = vperm.xlu0 %982, %v840
      %v984 = vpop.permute.xlu0 %983
      %v986 = vmul.f32 %v979, %v960
      %v987 = vmul.f32 %v979, %v961
      %v988 = vmul.f32 %v979, %v962
      %v989 = vmul.f32 %v979, %v963
      %v990 = vmul.f32 %v984, %v964
      %v991 = vmul.f32 %v984, %v965
      %v992 = vmul.f32 %v984, %v966
      %v993 = vmul.f32 %v984, %v967
      %v994 = vsel %vm968, %v960, %v986
      %v995 = vsel %vm969, %v961, %v987
      %v996 = vsel %vm970, %v962, %v988
      %v997 = vsel %vm971, %v963, %v989
      %v998 = vsel %vm972, %v964, %v990
      %v999 = vsel %vm973, %v965, %v991
      %v1000 = vsel %vm974, %v966, %v992
      %v1001 = vsel %vm975, %v967, %v993
      %v1002 = vld [vmem:[%s3] sm:$0xff]
      %v1003 = vld [vmem:[%s3 + $0x8] sm:$0xff]
      %v1004 = vmul.f32 %v994, %v842
      %v1005 = vmul.f32 %v995, %v843
      %v1006 = vmul.f32 %v996, %v844
      %v1007 = vmul.f32 %v997, %v845
      %v1008 = vmul.f32 %v998, %v842
      %v1009 = vmul.f32 %v999, %v843
      %v1010 = vmul.f32 %v1000, %v844
      %v1011 = vmul.f32 %v1001, %v845
      %v1012 = vadd.f32 %v1004, %v1005
      %v1013 = vadd.f32 %v1012, %v1006
      %v1014 = vadd.f32 %v1013, %v1007
      %1015 = vadd.xlane.f32.xlu0 %v1014
      %v1016 = vpop.xlane.xlu0 %1015
      %v1017 = vadd.f32 %v1008, %v1009
      %v1018 = vadd.f32 %v1017, %v1010
      %v1019 = vadd.f32 %v1018, %v1011
      %1020 = vadd.xlane.f32.xlu0 %v1019
      %v1021 = vpop.xlane.xlu0 %1020
      %v1022 = vmul.f32 %v1016, 0.00390625
      %v1023 = vmul.f32 %v1021, 0.00390625
      %v1024 = vmul.f32 %v1004, %v1004
      %v1025 = vmul.f32 %v1005, %v1005
      %v1026 = vmul.f32 %v1006, %v1006
      %v1027 = vmul.f32 %v1007, %v1007
      %v1028 = vmul.f32 %v1008, %v1008
      %v1029 = vmul.f32 %v1009, %v1009
      %v1030 = vmul.f32 %v1010, %v1010
      %v1031 = vmul.f32 %v1011, %v1011
      %v1032 = vadd.f32 %v1024, %v1025
      %v1033 = vadd.f32 %v1032, %v1026
      %v1034 = vadd.f32 %v1033, %v1027
      %1035 = vadd.xlane.f32.xlu0 %v1034
      %v1036 = vpop.xlane.xlu0 %1035
      %v1037 = vadd.f32 %v1028, %v1029
      %v1038 = vadd.f32 %v1037, %v1030
      %v1039 = vadd.f32 %v1038, %v1031
      %1040 = vadd.xlane.f32.xlu0 %v1039
      %v1041 = vpop.xlane.xlu0 %1040
      %v1042 = vmul.f32 %v1036, 0.00390625
      %v1043 = vmul.f32 %v1041, 0.00390625
      %v1044 = vmul.f32 %v1022, %v1022
      %v1045 = vmul.f32 %v1023, %v1023
      %v1046 = vsub.f32 %v1042, %v1044
      %v1047 = vsub.f32 %v1043, %v1045
      %v1048 = vmax.f32 %v1046, 0.0
      %v1049 = vmax.f32 %v1047, 0.0
      %v1050 = vadd.f32 %v1048, 1e-05
      %v1051 = vadd.f32 %v1049, 1e-05
      %v1052 = vrsqrt.pop %v1050
      %v1053 = vmul.f32 %v1052, %v1050
      %v1054 = vmul.f32 %v1053, %v1052
      %v1055 = vmul.f32 0.5, %v1054
      %v1056 = vsub.f32 1.5, %v1055
      %v1057 = vmul.f32 %v1052, %v1056
      %vm1058 = vweird.f32 %v1050
      %vm1059 = vweird.f32 %v1052
      %vm1060 = vmor %vm1058, %vm1059
      %v1061 = vsel %vm1060, %v1052, %v1057
      %v1062 = vrsqrt.pop %v1051
      %v1063 = vmul.f32 %v1062, %v1051
      %v1064 = vmul.f32 %v1063, %v1062
      %v1065 = vmul.f32 0.5, %v1064
      %v1066 = vsub.f32 1.5, %v1065
      %v1067 = vmul.f32 %v1062, %v1066
      %vm1068 = vweird.f32 %v1051
      %vm1069 = vweird.f32 %v1062
      %vm1070 = vmor %vm1068, %vm1069
      %v1071 = vsel %vm1070, %v1062, %v1067
      %v1072 = vmul.f32 %v1002, %v1061
      %v1073 = vmul.f32 %v1003, %v1071
      %v1074 = vmul.f32 %v1022, %v1072
      %v1075 = vmul.f32 %v1023, %v1073
      %1078 = vrot.lane.b32.xlu0 %v1074, 1
      %v1079 = vpop.permute.xlu0 %1078
      %1080 = vrot.lane.b32.xlu0 %v1075, 1
      %v1081 = vpop.permute.xlu0 %1080
      %v1084 = vsub.f32 %v1002, %v1079
      %v1085 = vsub.f32 %v1003, %v1081
      %1087 = vset.pattern.permute.xlu0 0
      %1088 = vperm.xlu0 %1087, %v1072
      %v1089 = vpop.permute.xlu0 %1088
      %1092 = vset.pattern.permute.xlu0 0
      %1093 = vperm.xlu0 %1092, %v1073
      %v1094 = vpop.permute.xlu0 %1093
      %v1096 = vmul.f32 %v994, %v1089
      %v1097 = vmul.f32 %v995, %v1089
      %v1098 = vmul.f32 %v996, %v1089
      %v1099 = vmul.f32 %v997, %v1089
      %v1100 = vmul.f32 %v998, %v1094
      %v1101 = vmul.f32 %v999, %v1094
      %v1102 = vmul.f32 %v1000, %v1094
      %v1103 = vmul.f32 %v1001, %v1094
      %1105 = vset.pattern.permute.xlu0 1
      %1106 = vperm.xlu0 %1105, %v1084
      %v1107 = vpop.permute.xlu0 %1106
      %1110 = vset.pattern.permute.xlu0 1
      %1111 = vperm.xlu0 %1110, %v1085
      %v1112 = vpop.permute.xlu0 %1111
      %v1114 = vadd.f32 %v1096, %v1107
      %v1115 = vadd.f32 %v1097, %v1107
      %v1116 = vadd.f32 %v1098, %v1107
      %v1117 = vadd.f32 %v1099, %v1107
      %v1118 = vadd.f32 %v1100, %v1112
      %v1119 = vadd.f32 %v1101, %v1112
      %v1120 = vadd.f32 %v1102, %v1112
      %v1121 = vadd.f32 %v1103, %v1112
      %vm1122 = vcmp.ge.f32.partialorder %v1114, 0.0
      %vm1123 = vcmp.ge.f32.partialorder %v1115, 0.0
      %vm1124 = vcmp.ge.f32.partialorder %v1116, 0.0
      %vm1125 = vcmp.ge.f32.partialorder %v1117, 0.0
      %vm1126 = vcmp.ge.f32.partialorder %v1118, 0.0
      %vm1127 = vcmp.ge.f32.partialorder %v1119, 0.0
      %vm1128 = vcmp.ge.f32.partialorder %v1120, 0.0
      %vm1129 = vcmp.ge.f32.partialorder %v1121, 0.0
      %1131 = vset.pattern.permute.xlu0 2
      %1132 = vperm.xlu0 %1131, %v1002
      %v1133 = vpop.permute.xlu0 %1132
      %1136 = vset.pattern.permute.xlu0 2
      %1137 = vperm.xlu0 %1136, %v1003
      %v1138 = vpop.permute.xlu0 %1137
      %v1140 = vmul.f32 %v1133, %v1114
      %v1141 = vmul.f32 %v1133, %v1115
      %v1142 = vmul.f32 %v1133, %v1116
      %v1143 = vmul.f32 %v1133, %v1117
      %v1144 = vmul.f32 %v1138, %v1118
      %v1145 = vmul.f32 %v1138, %v1119
      %v1146 = vmul.f32 %v1138, %v1120
      %v1147 = vmul.f32 %v1138, %v1121
      %v1148 = vsel %vm1122, %v1114, %v1140
      %v1149 = vsel %vm1123, %v1115, %v1141
      %v1150 = vsel %vm1124, %v1116, %v1142
      %v1151 = vsel %vm1125, %v1117, %v1143
      %v1152 = vsel %vm1126, %v1118, %v1144
      %v1153 = vsel %vm1127, %v1119, %v1145
      %v1154 = vsel %vm1128, %v1120, %v1146
      %v1155 = vsel %vm1129, %v1121, %v1147
      %1156 = vset.pattern.permute.xlu0 3
      %1157 = vperm.xlu0 %1156, %v1002
      %v1158 = vpop.permute.xlu0 %1157
      %1160 = vset.pattern.permute.xlu0 3
      %1161 = vperm.xlu0 %1160, %v1003
      %v1162 = vpop.permute.xlu0 %1161
      %v1164 = vmul.f32 %v1148, %v1158
      %v1165 = vmul.f32 %v1149, %v1158
      %v1166 = vmul.f32 %v1150, %v1158
      %v1167 = vmul.f32 %v1151, %v1158
      %v1168 = vmul.f32 %v1152, %v1162
      %v1169 = vmul.f32 %v1153, %v1162
      %v1170 = vmul.f32 %v1154, %v1162
      %v1171 = vmul.f32 %v1155, %v1162
      %v1172 = vadd.f32 %v1164, %v1168
      %v1173 = vrot.slane %v1172, 4
      %v1174 = vadd.f32 %v1172, %v1173
      %v1175 = vrot.slane %v1174, 2
      %v1176 = vadd.f32 %v1174, %v1175
      %v1177 = vrot.slane %v1176, 1
      %v1178 = vadd.f32 %v1176, %v1177
      %v1179 = vadd.f32 %v1165, %v1169
      %v1180 = vrot.slane %v1179, 4
      %v1181 = vadd.f32 %v1179, %v1180
      %v1182 = vrot.slane %v1181, 2
      %v1183 = vadd.f32 %v1181, %v1182
      %v1184 = vrot.slane %v1183, 1
      %v1185 = vadd.f32 %v1183, %v1184
      %v1186 = vadd.f32 %v1166, %v1170
      %v1187 = vrot.slane %v1186, 4
      %v1188 = vadd.f32 %v1186, %v1187
      %v1189 = vrot.slane %v1188, 2
      %v1190 = vadd.f32 %v1188, %v1189
      %v1191 = vrot.slane %v1190, 1
      %v1192 = vadd.f32 %v1190, %v1191
      %v1193 = vadd.f32 %v1167, %v1171
      %v1194 = vrot.slane %v1193, 4
      %v1195 = vadd.f32 %v1193, %v1194
      %v1196 = vrot.slane %v1195, 2
      %v1197 = vadd.f32 %v1195, %v1196
      %v1198 = vrot.slane %v1197, 1
      %v1199 = vadd.f32 %v1197, %v1198
      %v1200 = vld [vmem:[%s4] ss:$2 sm:$0xf]
      %v1205 = vrot.slane %v1185, 7
      %v1206 = vrot.slane %v1192, 6
      %v1207 = vrot.slane %v1199, 5
      %vm1208 = vcmask 1040384
      %v1209 = vsel %vm1208, %v1178, %v1205
      %vm1210 = vcmask 1042434
      %v1211 = vsel %vm1210, %v1206, %v1207
      %vm1212 = vcmask 1041408
      %v1213 = vsel %vm1212, %v1209, %v1211
      %v1215 = vmul.f32 %v1200, %v1213
      %s1216 = scalar_lea.vmem %s4, 1
      %v1217 = vld [vmem:[%s1216] ss:$2 sm:$0xf]
      %v1218 = vadd.f32 %v1215, %v1217
      %v1219 = vxor.u32 %v1218, 2147483648
      %v1220 = vmul.f32 %v1219, 1.442695
      %v1221 = vpow.pop %v1220
      %v1222 = vadd.f32 %v1221, 1.0
      %v1223 = vrcp.pop %v1222
      %v1224 = vmul.f32 %v1222, %v1223
      %v1225 = vsub.f32 1.0, %v1224
      %v1226 = vmul.f32 %v1223, %v1225
      %v1227 = vadd.f32 %v1223, %v1226
      %vm1228 = vweird.f32 %v1222
      %vm1229 = vweird.f32 %v1223
      %vm1230 = vmor %vm1228, %vm1229
      %v1231 = vsel %vm1230, %v1223, %v1227
      %v1232 = vand.u32 2147483647, %v1222
      %vm1233 = vcmp.eq.f32.partialorder %v1232, 8.507059e+37
      %v1234 = vand.u32 %v1222, 2147483648
      %v1235 = vor.u32 1.1754944e-38, %v1234
      %v1236 = vsel %vm1233, %v1235, %v1231
      %v1237 = vmul.f32 1.0, %v1236
      %v1238 = vmul.f32 %v1237, 2.0
      %v1239 = vlaneseq
      %vm1240 = vcmp.ge.s32.totalorder %v1239, 0
      %vm1241 = vcmp.lt.s32.totalorder %v1239, 512
      %vm1242 = vmand %vm1240, %vm1241
      %1243 = vst.msk [vmem:[%s249] sm:$0xf] %vm1242, %v1238
      %p1244 = scmp.lt.s32.totalorder %s17, 1
      %s1245 = scalar_select %p1244, %s17, 1
      %s1246 = smul.addr %s1245, 4
      %s1247 = scalar_lea.vmem %s6, %s1246
      // Predicated region
      $region45: #{mask_decoder_forward.7} parent=43 // pred_check
        %p1248 = pneg %p166
      $region46: #{mask_decoder_forward.7} parent=43 // pred_check_branch
        %1250 = sbr.rel (%p1248) target = $region48
      $region47: #{mask_decoder_forward.7} parent=43 // pred_region
        _
      $region48: #{mask_decoder_forward.7} parent=43 // pred_fallthru
        _
    $region44: #{mask_decoder_forward.7} parent=5 // pred_fallthru
      _
    %p1251 = scmp.le.s32.totalorder 2, %s12
    // Predicated region
    $region49: #{mask_decoder_forward.7} parent=5 // pred_check
      %p1252 = pneg %p1251
    $region50: #{mask_decoder_forward.7} parent=5 // pred_check_branch
      %1254 = sbr.rel (%p1252) target = $region52
    $region51: #{mask_decoder_forward.7} parent=5 // pred_region
      %s1255 = ssub.s32 %s12, 2
      // Predicated region
      $region53: #{mask_decoder_forward.7} parent=51 // pred_check
        %p1256 = pneg %p172
      $region54: #{mask_decoder_forward.7} parent=51 // pred_check_branch
        %1258 = sbr.rel (%p1256) target = $region56
      $region55: #{mask_decoder_forward.7} parent=51 // pred_region
        %p1259 = scmp.lt.s32.totalorder %s18, 1
        %s1260 = scalar_select %p1259, %s18, 1
        %s1261 = smul.addr %s1260, 4
        %s1262 = scalar_lea.vmem %s6, %s1261
      $region56: #{mask_decoder_forward.7} parent=51 // pred_fallthru
        _
    $region52: #{mask_decoder_forward.7} parent=5 // pred_fallthru
      _
  $region6: #{mask_decoder_forward.7} parent=0 // loop_footer
    %s16 = sadd.s32 1, %s12
  $region7: #{mask_decoder_forward.7} parent=0 // loop_footer_branch
    %11 = sbr.rel target = $region3
  $region8: #{mask_decoder_forward.7} parent=0 // loop_exit
    _

</llo_original>
